<compile_context>
chip_gen: v7x
topology: tpu7x:2x2x1
jax: 0.10.0
libtpu: 0.0.40
codegen_flags: <defaults>
</compile_context>

<pallas_src>
import math
import numpy as np
import jax
import jax.numpy as jnp
from jax import lax
from jax.experimental import pallas as pl
from jax.experimental.pallas import tpu as pltpu

# ---------------------------- model configuration ----------------------------
NTOKEN = 50
D_MODEL = 32
NHEAD = 4
D_HEAD = D_MODEL // NHEAD
D_HID = 64
NLAYERS_PRE = 2
NLAYERS_POST = 2
NLAYERS = NLAYERS_PRE + NLAYERS_POST
MAX_LEN = 64
COMPRESSION_FACTOR = 2          # > 1  => average() pooling branch
INCLUDE_LINEAR = True
LN_EPS = 1e-5
LANE = 128                      # lane-dense width for packed params / output
NEG_INF = -1e9

BATCH = 2
SEQ = 8

# TODO(synk): the use_vq=True codebook (vq/vq_st) branch and the
# compression_factor<1 expand()+expand_linear branch are disabled by this
# configuration and are not implemented here.


# ----------------------- single fused forward-pass kernel --------------------
def _build_kernel(batch, seq):
    rows_pre = batch * seq
    seq_out = seq // COMPRESSION_FACTOR
    rows_post = batch * seq_out

    def kernel(x_ref, wqkv_ref, wo_ref, w1_ref, w2_ref, linw_ref, small_ref,
               out_ref):
        """Whole PoolExpandTransformerModel forward on 2-D activation slabs.

        x_ref    : [B*S, D] f32         (embedding*sqrt(d) + pos, pre-folded)
        wqkv_ref : [L, D, 3D] bf16      (Q columns pre-scaled by 1/sqrt(d_head))
        wo_ref   : [L, D, D]  bf16
        w1_ref   : [L, D, Dh] bf16,  w2_ref : [L, Dh, D] bf16
        linw_ref : [D, 128]   bf16      (final linear, lane-padded)
        small_ref: [8L+8, 128] f32      packed per-layer small params + lin_b
        out_ref  : [B*So, 128] f32
        """
        f32 = jnp.float32
        bf16 = jnp.bfloat16

        def srow(r, n):                       # static slice of the packed slab
            return small_ref[r:r + 1, 0:n]    # -> [1, n]

        def layer_norm(h, g, b):
            mu = jnp.mean(h, axis=-1, keepdims=True)
            c = h - mu
            var = jnp.mean(c * c, axis=-1, keepdims=True)
            return c * lax.rsqrt(var + LN_EPS) * g + b

        def phase_consts(rows, seg):
            """Constant masks for one phase (built from iota, no HBM inputs)."""
            # head-selection mask [NHEAD*rows, D]: row block h keeps cols of head h
            col = lax.broadcasted_iota(jnp.int32, (rows, D_MODEL), 1)
            head_mask = jnp.concatenate(
                [(col >= h * D_HEAD) & (col < (h + 1) * D_HEAD)
                 for h in range(NHEAD)], axis=0)
            # additive batch-block attention mask [NHEAD*rows, rows]
            r = lax.broadcasted_iota(jnp.int32, (rows, rows), 0)
            c = lax.broadcasted_iota(jnp.int32, (rows, rows), 1)
            same = None
            for b in range(batch):
                blk = ((r >= b * seg) & (r < (b + 1) * seg)
                       & (c >= b * seg) & (c < (b + 1) * seg))
                same = blk if same is None else (same | blk)
            m = jnp.where(same, 0.0, NEG_INF)
            batch_mask = jnp.concatenate([m] * NHEAD, axis=0)
            return head_mask, batch_mask

        def encoder_layer(x2, li, rows, head_mask, batch_mask):
            base = 8 * li
            bqkv = srow(base + 0, 3 * D_MODEL)
            bo = srow(base + 1, D_MODEL)
            ln1g = srow(base + 2, D_MODEL)
            ln1b = srow(base + 3, D_MODEL)
            b1 = srow(base + 4, D_HID)
            b2 = srow(base + 5, D_MODEL)
            ln2g = srow(base + 6, D_MODEL)
            ln2b = srow(base + 7, D_MODEL)

            # fused QKV projection (bf16 in, f32 accumulate); attention scale
            # is already folded into the Q weights/bias host-side.
            qkv = jnp.dot(x2.astype(bf16), wqkv_ref[li],
                          preferred_element_type=f32) + bqkv        # [R, 96]
            q = qkv[:, 0:D_MODEL]
            k = qkv[:, D_MODEL:2 * D_MODEL].astype(bf16)
            v = qkv[:, 2 * D_MODEL:3 * D_MODEL].astype(bf16)

            # all-head scores in ONE matmul: head-blocked Q stack x K^T
            q_stack = jnp.where(head_mask,
                                jnp.concatenate([q] * NHEAD, axis=0),
                                0.0).astype(bf16)                    # [4R, D]
            s = lax.dot_general(q_stack, k, (((1,), (1,)), ((), ())),
                                preferred_element_type=f32)          # [4R, R]
            s = s + batch_mask
            # one batched softmax for all heads (single max/exp/sum/recip)
            s = s - jnp.max(s, axis=-1, keepdims=True)
            p = jnp.exp(s)
            p = p * pl.reciprocal(jnp.sum(p, axis=-1, keepdims=True),
                                  approx=True)

            # all-head PV in ONE matmul, head-masked, then out-projection;
            # the per-head concat becomes a sum of the 4 sublane blocks.
            pv = jnp.dot(p.astype(bf16), v, preferred_element_type=f32)  # [4R, D]
            pv = jnp.where(head_mask, pv, 0.0)
            ow = jnp.dot(pv.astype(bf16), wo_ref[li],
                         preferred_element_type=f32)                     # [4R, D]
            attn = (ow[0:rows] + ow[rows:2 * rows]
                    + ow[2 * rows:3 * rows] + ow[3 * rows:4 * rows]) + bo

            # residual + LN1 (dropout == identity in eval mode)
            y = layer_norm(x2 + attn, ln1g, ln1b)
            # feed-forward
            ff = jnp.dot(y.astype(bf16), w1_ref[li],
                         preferred_element_type=f32) + b1
            ff = jnp.maximum(ff, 0.0)
            ff = jnp.dot(ff.astype(bf16), w2_ref[li],
                         preferred_element_type=f32) + b2
            # residual + LN2
            return layer_norm(y + ff, ln2g, ln2b)

        # ---- pre encoder (rows = B*S) ----
        x2 = x_ref[...]
        head_pre, mask_pre = phase_consts(rows_pre, seq)
        for li in range(NLAYERS_PRE):
            x2 = encoder_layer(x2, li, rows_pre, head_pre, mask_pre)

        # ---- average() pooling of adjacent sequence pairs (iota-built matrix) ----
        pr = lax.broadcasted_iota(jnp.int32, (rows_post, rows_pre), 0)
        pc = lax.broadcasted_iota(jnp.int32, (rows_post, rows_pre), 1)
        sel = ((pc >= pr * COMPRESSION_FACTOR)
               & (pc < pr * COMPRESSION_FACTOR + COMPRESSION_FACTOR))
        pool_m = jnp.where(sel, 1.0 / COMPRESSION_FACTOR, 0.0).astype(bf16)
        x2 = jnp.dot(pool_m, x2.astype(bf16), preferred_element_type=f32)

        # ---- post encoder (rows = B*So) ----
        head_post, mask_post = phase_consts(rows_post, seq_out)
        for li in range(NLAYERS_POST):
            x2 = encoder_layer(x2, NLAYERS_PRE + li, rows_post,
                               head_post, mask_post)

        # ---- final linear, lane-dense 128-wide output ----
        lin_b = srow(8 * NLAYERS, LANE)
        out_ref[...] = jnp.dot(x2.astype(bf16), linw_ref[...],
                               preferred_element_type=f32) + lin_b

    return kernel


# --------------------------------- forward ------------------------------------
@jax.jit
def pool_expand_transformer_forward(src, params):
    """src: int32 [B, S] token ids -> f32 [B, S // compression_factor, ntoken]."""
    B, S = src.shape
    assert S % COMPRESSION_FACTOR == 0, "seq_len must be divisible by compression_factor"
    So = S // COMPRESSION_FACTOR

    # ---- glue: scale folding, embedding gather, pos add, packing (all fused) ----
    emb = params["embedding"] * math.sqrt(D_MODEL)            # fold sqrt(d_model)
    x = jnp.take(emb, src.reshape(-1), axis=0)                 # [B*S, D]
    x = x + jnp.tile(params["pos"][:S], (B, 1))

    # fold 1/sqrt(d_head) into the Q columns of the QKV projection
    q_scale = jnp.concatenate(
        [jnp.full((D_MODEL,), 1.0 / math.sqrt(D_HEAD), jnp.float32),
         jnp.ones((2 * D_MODEL,), jnp.float32)])
    wqkv = (params["wqkv"] * q_scale).astype(jnp.bfloat16)
    bqkv = params["bqkv"] * q_scale                            # stays f32

    wo = params["wo"].astype(jnp.bfloat16)
    w1 = params["w1"].astype(jnp.bfloat16)
    w2 = params["w2"].astype(jnp.bfloat16)
    lin_w = jnp.pad(params["lin_w"],
                    ((0, 0), (0, LANE - NTOKEN))).astype(jnp.bfloat16)

    # pack all small per-layer params into one lane-dense f32 slab
    def _row(p):                                               # [L,1,n] -> [L,1,128]
        return jnp.pad(p, ((0, 0), (0, 0), (0, LANE - p.shape[-1])))
    small = jnp.concatenate(
        [_row(bqkv), _row(params["bo"]),
         _row(params["ln1_g"]), _row(params["ln1_b"]),
         _row(params["b1"]), _row(params["b2"]),
         _row(params["ln2_g"]), _row(params["ln2_b"])], axis=1)   # [L, 8, 128]
    small = small.reshape(NLAYERS * 8, LANE)
    lin_b = jnp.pad(params["lin_b"], ((0, 0), (0, LANE - NTOKEN)))
    small = jnp.concatenate(
        [small, lin_b, jnp.zeros((7, LANE), jnp.float32)], axis=0)  # [8L+8, 128]

    kernel = _build_kernel(B, S)
    vmem = pl.BlockSpec(memory_space=pltpu.MemorySpace.VMEM)
    out2d = pl.pallas_call(
        kernel,
        out_shape=jax.ShapeDtypeStruct((B * So, LANE), jnp.float32),
        in_specs=[vmem] * 7,
        out_specs=vmem,
        cost_estimate=pl.CostEstimate(flops=2_500_000, transcendentals=4_096,
                                      bytes_accessed=131_072),
    )(x, wqkv, wo, w1, w2, lin_w, small)

    out = out2d.reshape(B, So, LANE)[:, :, :NTOKEN]
    return out if INCLUDE_LINEAR else out  # use_vq=False -> plain output


# ------------------------------ parameter setup ------------------------------
def init_params(key):
    """Synthetic deterministic init, kernel-friendly layout:
      wqkv [L, D, 3D]  == in_proj_weight^T (columns ordered [Q|K|V], head-major)
      wo   [L, D, D]   == out_proj.weight^T
      w1   [L, D, D_hid], w2 [L, D_hid, D] == linear{1,2}.weight^T
      lin_w [D, ntoken] == linear.weight^T
    """
    keys = jax.random.split(key, 8)

    def u(k, shape):
        return jax.random.uniform(k, shape, jnp.float32, -0.1, 0.1)

    L = NLAYERS
    return dict(
        embedding=u(keys[0], (NTOKEN, D_MODEL)),                 # nn.Embedding, U(-0.1, 0.1)
        pos=u(keys[1], (MAX_LEN, D_MODEL)),                      # LearnedPositionEncoding
        lin_w=u(keys[2], (D_MODEL, NTOKEN)),                     # final linear (weight^T)
        lin_b=jnp.zeros((1, NTOKEN), jnp.float32),               # final linear bias zeroed
        wqkv=u(keys[3], (L, D_MODEL, 3 * D_MODEL)),
        bqkv=u(keys[4], (L, 1, 3 * D_MODEL)),
        wo=u(keys[5], (L, D_MODEL, D_MODEL)),
        bo=jnp.zeros((L, 1, D_MODEL), jnp.float32),
        ln1_g=jnp.ones((L, 1, D_MODEL), jnp.float32),
        ln1_b=jnp.zeros((L, 1, D_MODEL), jnp.float32),
        w1=u(keys[6], (L, D_MODEL, D_HID)),
        b1=jnp.zeros((L, 1, D_HID), jnp.float32),
        w2=u(keys[7], (L, D_HID, D_MODEL)),
        b2=jnp.zeros((L, 1, D_MODEL), jnp.float32),
        ln2_g=jnp.ones((L, 1, D_MODEL), jnp.float32),
        ln2_b=jnp.zeros((L, 1, D_MODEL), jnp.float32),
    )


# ----------------------- pure-JAX reference (correctness) --------------------
def reference_forward(src, params):
    B, S = src.shape
    x = jnp.take(params["embedding"], src, axis=0) * math.sqrt(D_MODEL)
    x = x + params["pos"][:S][None]

    def ln(h, g, b):
        mu = jnp.mean(h, -1, keepdims=True)
        var = jnp.mean((h - mu) ** 2, -1, keepdims=True)
        return (h - mu) / jnp.sqrt(var + LN_EPS) * g + b

    def layer(x, li):
        Bc, Sc, D = x.shape
        qkv = jnp.einsum('bsd,df->bsf', x, params["wqkv"][li]) + params["bqkv"][li]
        q, k, v = jnp.split(qkv, 3, axis=-1)
        q = q.reshape(Bc, Sc, NHEAD, D_HEAD)
        k = k.reshape(Bc, Sc, NHEAD, D_HEAD)
        v = v.reshape(Bc, Sc, NHEAD, D_HEAD)
        s = jnp.einsum('bqhd,bkhd->bhqk', q, k) / math.sqrt(D_HEAD)
        p = jax.nn.softmax(s, axis=-1)
        ctx = jnp.einsum('bhqk,bkhd->bqhd', p, v).reshape(Bc, Sc, D)
        attn = jnp.einsum('bsd,de->bse', ctx, params["wo"][li]) + params["bo"][li]
        y = ln(x + attn, params["ln1_g"][li], params["ln1_b"][li])
        ff = jax.nn.relu(jnp.einsum('bsd,dh->bsh', y, params["w1"][li]) + params["b1"][li])
        ff = jnp.einsum('bsh,hd->bsd', ff, params["w2"][li]) + params["b2"][li]
        return ln(y + ff, params["ln2_g"][li], params["ln2_b"][li])

    for li in range(NLAYERS_PRE):
        x = layer(x, li)
    x = x.reshape(B, S // COMPRESSION_FACTOR, COMPRESSION_FACTOR, D_MODEL).mean(axis=2)
    for li in range(NLAYERS_POST):
        x = layer(x, NLAYERS_PRE + li)
    return jnp.einsum('bsd,dn->bsn', x, params["lin_w"]) + params["lin_b"]


# ----------------------------------- main -------------------------------------
if __name__ == "__main__":
    key = jax.random.PRNGKey(0)
    k_param, k_src = jax.random.split(key)

    params = init_params(k_param)
    src = jax.random.randint(k_src, (BATCH, SEQ), 0, NTOKEN, dtype=jnp.int32)

    out = pool_expand_transformer_forward(src, params)
    out = jax.block_until_ready(out)

    expected_shape = (BATCH, SEQ // COMPRESSION_FACTOR, NTOKEN)
    assert out.shape == expected_shape, (out.shape, expected_shape)
    assert bool(jnp.all(jnp.isfinite(out)))

    ref = reference_forward(src, params)
    np.testing.assert_allclose(np.asarray(out), np.asarray(ref), rtol=5e-2, atol=5e-2)

    print("KERNEL_OK")
</pallas_src>

<mosaic_0001>
module attributes {stable_mosaic.version = 11 : i64} {
  func.func @kernel(%arg0: memref<16x32xf32, #tpu.memory_space<vmem>>, %arg1: memref<4x32x96xbf16, #tpu.memory_space<vmem>>, %arg2: memref<4x32x32xbf16, #tpu.memory_space<vmem>>, %arg3: memref<4x32x64xbf16, #tpu.memory_space<vmem>>, %arg4: memref<4x64x32xbf16, #tpu.memory_space<vmem>>, %arg5: memref<32x128xbf16, #tpu.memory_space<vmem>>, %arg6: memref<40x128xf32, #tpu.memory_space<vmem>>, %arg7: memref<8x128xf32, #tpu.memory_space<vmem>>) attributes {dimension_semantics = [], scalar_prefetch = 0 : i64, scratch_operands = 0 : i64, tpu.core_type = #tpu.core_type<tc>} {
    %c0 = arith.constant 0 : index
    %c0_0 = arith.constant 0 : index
    %0 = vector.load %arg0[%c0, %c0_0] : memref<16x32xf32, #tpu.memory_space<vmem>>, vector<16x32xf32>
    %1 = tpu.iota {dimensions = array<i32: 1>} : vector<16x32xi32>
    %c0_i32 = arith.constant 0 : i32
    %2 = vector.broadcast %c0_i32 : i32 to vector<16x32xi32>
    %3 = arith.cmpi sge, %1, %2 : vector<16x32xi32>
    %c8_i32 = arith.constant 8 : i32
    %4 = vector.broadcast %c8_i32 : i32 to vector<16x32xi32>
    %5 = arith.cmpi slt, %1, %4 : vector<16x32xi32>
    %6 = arith.andi %3, %5 : vector<16x32xi1>
    %c8_i32_1 = arith.constant 8 : i32
    %7 = vector.broadcast %c8_i32_1 : i32 to vector<16x32xi32>
    %8 = arith.cmpi sge, %1, %7 : vector<16x32xi32>
    %c16_i32 = arith.constant 16 : i32
    %9 = vector.broadcast %c16_i32 : i32 to vector<16x32xi32>
    %10 = arith.cmpi slt, %1, %9 : vector<16x32xi32>
    %11 = arith.andi %8, %10 : vector<16x32xi1>
    %c16_i32_2 = arith.constant 16 : i32
    %12 = vector.broadcast %c16_i32_2 : i32 to vector<16x32xi32>
    %13 = arith.cmpi sge, %1, %12 : vector<16x32xi32>
    %c24_i32 = arith.constant 24 : i32
    %14 = vector.broadcast %c24_i32 : i32 to vector<16x32xi32>
    %15 = arith.cmpi slt, %1, %14 : vector<16x32xi32>
    %16 = arith.andi %13, %15 : vector<16x32xi1>
    %c24_i32_3 = arith.constant 24 : i32
    %17 = vector.broadcast %c24_i32_3 : i32 to vector<16x32xi32>
    %18 = arith.cmpi sge, %1, %17 : vector<16x32xi32>
    %c32_i32 = arith.constant 32 : i32
    %19 = vector.broadcast %c32_i32 : i32 to vector<16x32xi32>
    %20 = arith.cmpi slt, %1, %19 : vector<16x32xi32>
    %21 = arith.andi %18, %20 : vector<16x32xi1>
    %22 = tpu.concatenate %6, %11, %16, %21 in 0 : vector<16x32xi1>, vector<16x32xi1>, vector<16x32xi1>, vector<16x32xi1> -> vector<64x32xi1>
    %23 = tpu.iota {dimensions = array<i32: 0>} : vector<16x16xi32>
    %24 = tpu.iota {dimensions = array<i32: 1>} : vector<16x16xi32>
    %c0_i32_4 = arith.constant 0 : i32
    %25 = vector.broadcast %c0_i32_4 : i32 to vector<16x16xi32>
    %26 = arith.cmpi sge, %23, %25 : vector<16x16xi32>
    %c8_i32_5 = arith.constant 8 : i32
    %27 = vector.broadcast %c8_i32_5 : i32 to vector<16x16xi32>
    %28 = arith.cmpi slt, %23, %27 : vector<16x16xi32>
    %29 = arith.andi %26, %28 : vector<16x16xi1>
    %c0_i32_6 = arith.constant 0 : i32
    %30 = vector.broadcast %c0_i32_6 : i32 to vector<16x16xi32>
    %31 = arith.cmpi sge, %24, %30 : vector<16x16xi32>
    %32 = arith.andi %29, %31 : vector<16x16xi1>
    %c8_i32_7 = arith.constant 8 : i32
    %33 = vector.broadcast %c8_i32_7 : i32 to vector<16x16xi32>
    %34 = arith.cmpi slt, %24, %33 : vector<16x16xi32>
    %35 = arith.andi %32, %34 : vector<16x16xi1>
    %c8_i32_8 = arith.constant 8 : i32
    %36 = vector.broadcast %c8_i32_8 : i32 to vector<16x16xi32>
    %37 = arith.cmpi sge, %23, %36 : vector<16x16xi32>
    %c16_i32_9 = arith.constant 16 : i32
    %38 = vector.broadcast %c16_i32_9 : i32 to vector<16x16xi32>
    %39 = arith.cmpi slt, %23, %38 : vector<16x16xi32>
    %40 = arith.andi %37, %39 : vector<16x16xi1>
    %c8_i32_10 = arith.constant 8 : i32
    %41 = vector.broadcast %c8_i32_10 : i32 to vector<16x16xi32>
    %42 = arith.cmpi sge, %24, %41 : vector<16x16xi32>
    %43 = arith.andi %40, %42 : vector<16x16xi1>
    %c16_i32_11 = arith.constant 16 : i32
    %44 = vector.broadcast %c16_i32_11 : i32 to vector<16x16xi32>
    %45 = arith.cmpi slt, %24, %44 : vector<16x16xi32>
    %46 = arith.andi %43, %45 : vector<16x16xi1>
    %47 = arith.ori %35, %46 : vector<16x16xi1>
    %cst = arith.constant 0.000000e+00 : f32
    %cst_12 = arith.constant -1.000000e+09 : f32
    %48 = vector.broadcast %cst : f32 to vector<16x16xf32>
    %49 = vector.broadcast %cst_12 : f32 to vector<16x16xf32>
    %50 = arith.select %47, %48, %49 : vector<16x16xi1>, vector<16x16xf32>
    %51 = tpu.concatenate %50, %50, %50, %50 in 0 : vector<16x16xf32>, vector<16x16xf32>, vector<16x16xf32>, vector<16x16xf32> -> vector<64x16xf32>
    %c0_13 = arith.constant 0 : index
    %c0_14 = arith.constant 0 : index
    %52 = vector.load %arg6[%c0_13, %c0_14] : memref<40x128xf32, #tpu.memory_space<vmem>>, vector<1x96xf32>
    %c1 = arith.constant 1 : index
    %c0_15 = arith.constant 0 : index
    %53 = vector.load %arg6[%c1, %c0_15] : memref<40x128xf32, #tpu.memory_space<vmem>>, vector<1x32xf32>
    %c2 = arith.constant 2 : index
    %c0_16 = arith.constant 0 : index
    %54 = vector.load %arg6[%c2, %c0_16] : memref<40x128xf32, #tpu.memory_space<vmem>>, vector<1x32xf32>
    %c3 = arith.constant 3 : index
    %c0_17 = arith.constant 0 : index
    %55 = vector.load %arg6[%c3, %c0_17] : memref<40x128xf32, #tpu.memory_space<vmem>>, vector<1x32xf32>
    %c4 = arith.constant 4 : index
    %c0_18 = arith.constant 0 : index
    %56 = vector.load %arg6[%c4, %c0_18] : memref<40x128xf32, #tpu.memory_space<vmem>>, vector<1x64xf32>
    %c5 = arith.constant 5 : index
    %c0_19 = arith.constant 0 : index
    %57 = vector.load %arg6[%c5, %c0_19] : memref<40x128xf32, #tpu.memory_space<vmem>>, vector<1x32xf32>
    %c6 = arith.constant 6 : index
    %c0_20 = arith.constant 0 : index
    %58 = vector.load %arg6[%c6, %c0_20] : memref<40x128xf32, #tpu.memory_space<vmem>>, vector<1x32xf32>
    %c7 = arith.constant 7 : index
    %c0_21 = arith.constant 0 : index
    %59 = vector.load %arg6[%c7, %c0_21] : memref<40x128xf32, #tpu.memory_space<vmem>>, vector<1x32xf32>
    %60 = arith.truncf %0 : vector<16x32xf32> to vector<16x32xbf16>
    %c0_22 = arith.constant 0 : index
    %c0_23 = arith.constant 0 : index
    %c0_24 = arith.constant 0 : index
    %61 = vector.load %arg1[%c0_22, %c0_23, %c0_24] : memref<4x32x96xbf16, #tpu.memory_space<vmem>>, vector<1x32x96xbf16>
    %62 = vector.shape_cast %61 : vector<1x32x96xbf16> to vector<32x96xbf16>
    %cst_25 = arith.constant dense<0.000000e+00> : vector<16x96xf32>
    %63 = tpu.matmul %60, %62, %cst_25 {dimension_numbers = #tpu.dot_dimension_numbers<[1], [0], [0], [1], [0, 0, 1, 1], [], []>} : vector<16x32xbf16>, vector<32x96xbf16>, vector<16x96xf32> -> vector<16x96xf32>
    %64 = vector.broadcast %52 : vector<1x96xf32> to vector<16x96xf32>
    %65 = arith.addf %63, %64 : vector<16x96xf32>
    %66 = vector.extract_strided_slice %65 {offsets = [0, 0], sizes = [16, 32], strides = [1, 1]} : vector<16x96xf32> to vector<16x32xf32>
    %67 = vector.extract_strided_slice %65 {offsets = [0, 32], sizes = [16, 32], strides = [1, 1]} : vector<16x96xf32> to vector<16x32xf32>
    %68 = arith.truncf %67 : vector<16x32xf32> to vector<16x32xbf16>
    %69 = vector.extract_strided_slice %65 {offsets = [0, 64], sizes = [16, 32], strides = [1, 1]} : vector<16x96xf32> to vector<16x32xf32>
    %70 = arith.truncf %69 : vector<16x32xf32> to vector<16x32xbf16>
    %71 = tpu.concatenate %66, %66, %66, %66 in 0 : vector<16x32xf32>, vector<16x32xf32>, vector<16x32xf32>, vector<16x32xf32> -> vector<64x32xf32>
    %cst_26 = arith.constant 0.000000e+00 : f32
    %72 = vector.broadcast %cst_26 : f32 to vector<64x32xf32>
    %73 = arith.select %22, %71, %72 : vector<64x32xi1>, vector<64x32xf32>
    %74 = arith.truncf %73 : vector<64x32xf32> to vector<64x32xbf16>
    %cst_27 = arith.constant dense<0.000000e+00> : vector<64x16xf32>
    %75 = tpu.matmul %74, %68, %cst_27 {dimension_numbers = #tpu.dot_dimension_numbers<[1], [1], [0], [0], [0, 0, 1, 0], [], []>} : vector<64x32xbf16>, vector<16x32xbf16>, vector<64x16xf32> -> vector<64x16xf32>
    %76 = arith.addf %75, %51 : vector<64x16xf32>
    %cst_28 = arith.constant dense<0xFF800000> : vector<64xf32>
    %77 = vector.multi_reduction <maximumf>, %76, %cst_28 [1] : vector<64x16xf32> to vector<64xf32>
    %78 = vector.shape_cast %77 : vector<64xf32> to vector<64x1xf32>
    %79 = vector.broadcast %78 : vector<64x1xf32> to vector<64x16xf32>
    %80 = arith.subf %76, %79 : vector<64x16xf32>
    %81 = math.exp %80 : vector<64x16xf32>
    %cst_29 = arith.constant dense<0.000000e+00> : vector<64xf32>
    %82 = vector.multi_reduction <add>, %81, %cst_29 [1] : vector<64x16xf32> to vector<64xf32>
    %83 = vector.shape_cast %82 : vector<64xf32> to vector<64x1xf32>
    %84 = tpu.reciprocal %83 {approx = true} : vector<64x1xf32> -> vector<64x1xf32>
    %85 = vector.broadcast %84 : vector<64x1xf32> to vector<64x16xf32>
    %86 = arith.mulf %81, %85 : vector<64x16xf32>
    %87 = arith.truncf %86 : vector<64x16xf32> to vector<64x16xbf16>
    %cst_30 = arith.constant dense<0.000000e+00> : vector<64x32xf32>
    %88 = tpu.matmul %87, %70, %cst_30 {dimension_numbers = #tpu.dot_dimension_numbers<[1], [0], [0], [1], [0, 0, 1, 1], [], []>} : vector<64x16xbf16>, vector<16x32xbf16>, vector<64x32xf32> -> vector<64x32xf32>
    %cst_31 = arith.constant 0.000000e+00 : f32
    %89 = vector.broadcast %cst_31 : f32 to vector<64x32xf32>
    %90 = arith.select %22, %88, %89 : vector<64x32xi1>, vector<64x32xf32>
    %91 = arith.truncf %90 : vector<64x32xf32> to vector<64x32xbf16>
    %c0_32 = arith.constant 0 : index
    %c0_33 = arith.constant 0 : index
    %c0_34 = arith.constant 0 : index
    %92 = vector.load %arg2[%c0_32, %c0_33, %c0_34] : memref<4x32x32xbf16, #tpu.memory_space<vmem>>, vector<1x32x32xbf16>
    %93 = vector.shape_cast %92 : vector<1x32x32xbf16> to vector<32x32xbf16>
    %cst_35 = arith.constant dense<0.000000e+00> : vector<64x32xf32>
    %94 = tpu.matmul %91, %93, %cst_35 {dimension_numbers = #tpu.dot_dimension_numbers<[1], [0], [0], [1], [0, 0, 1, 1], [], []>} : vector<64x32xbf16>, vector<32x32xbf16>, vector<64x32xf32> -> vector<64x32xf32>
    %95 = vector.extract_strided_slice %94 {offsets = [0, 0], sizes = [16, 32], strides = [1, 1]} : vector<64x32xf32> to vector<16x32xf32>
    %96 = vector.extract_strided_slice %94 {offsets = [16, 0], sizes = [16, 32], strides = [1, 1]} : vector<64x32xf32> to vector<16x32xf32>
    %97 = arith.addf %95, %96 : vector<16x32xf32>
    %98 = vector.extract_strided_slice %94 {offsets = [32, 0], sizes = [16, 32], strides = [1, 1]} : vector<64x32xf32> to vector<16x32xf32>
    %99 = arith.addf %97, %98 : vector<16x32xf32>
    %100 = vector.extract_strided_slice %94 {offsets = [48, 0], sizes = [16, 32], strides = [1, 1]} : vector<64x32xf32> to vector<16x32xf32>
    %101 = arith.addf %99, %100 : vector<16x32xf32>
    %102 = vector.broadcast %53 : vector<1x32xf32> to vector<16x32xf32>
    %103 = arith.addf %101, %102 : vector<16x32xf32>
    %104 = arith.addf %0, %103 : vector<16x32xf32>
    %cst_36 = arith.constant dense<0.000000e+00> : vector<16xf32>
    %105 = vector.multi_reduction <add>, %104, %cst_36 [1] : vector<16x32xf32> to vector<16xf32>
    %106 = vector.shape_cast %105 : vector<16xf32> to vector<16x1xf32>
    %cst_37 = arith.constant 3.200000e+01 : f32
    %107 = vector.broadcast %cst_37 : f32 to vector<16x1xf32>
    %108 = arith.divf %106, %107 : vector<16x1xf32>
    %109 = vector.broadcast %108 : vector<16x1xf32> to vector<16x32xf32>
    %110 = arith.subf %104, %109 : vector<16x32xf32>
    %111 = arith.mulf %110, %110 : vector<16x32xf32>
    %cst_38 = arith.constant dense<0.000000e+00> : vector<16xf32>
    %112 = vector.multi_reduction <add>, %111, %cst_38 [1] : vector<16x32xf32> to vector<16xf32>
    %113 = vector.shape_cast %112 : vector<16xf32> to vector<16x1xf32>
    %cst_39 = arith.constant 3.200000e+01 : f32
    %114 = vector.broadcast %cst_39 : f32 to vector<16x1xf32>
    %115 = arith.divf %113, %114 : vector<16x1xf32>
    %cst_40 = arith.constant 9.99999974E-6 : f32
    %116 = vector.broadcast %cst_40 : f32 to vector<16x1xf32>
    %117 = arith.addf %115, %116 : vector<16x1xf32>
    %118 = math.rsqrt %117 : vector<16x1xf32>
    %119 = vector.broadcast %118 : vector<16x1xf32> to vector<16x32xf32>
    %120 = arith.mulf %110, %119 : vector<16x32xf32>
    %121 = vector.broadcast %54 : vector<1x32xf32> to vector<16x32xf32>
    %122 = arith.mulf %120, %121 : vector<16x32xf32>
    %123 = vector.broadcast %55 : vector<1x32xf32> to vector<16x32xf32>
    %124 = arith.addf %122, %123 : vector<16x32xf32>
    %125 = arith.truncf %124 : vector<16x32xf32> to vector<16x32xbf16>
    %c0_41 = arith.constant 0 : index
    %c0_42 = arith.constant 0 : index
    %c0_43 = arith.constant 0 : index
    %126 = vector.load %arg3[%c0_41, %c0_42, %c0_43] : memref<4x32x64xbf16, #tpu.memory_space<vmem>>, vector<1x32x64xbf16>
    %127 = vector.shape_cast %126 : vector<1x32x64xbf16> to vector<32x64xbf16>
    %cst_44 = arith.constant dense<0.000000e+00> : vector<16x64xf32>
    %128 = tpu.matmul %125, %127, %cst_44 {dimension_numbers = #tpu.dot_dimension_numbers<[1], [0], [0], [1], [0, 0, 1, 1], [], []>} : vector<16x32xbf16>, vector<32x64xbf16>, vector<16x64xf32> -> vector<16x64xf32>
    %129 = vector.broadcast %56 : vector<1x64xf32> to vector<16x64xf32>
    %130 = arith.addf %128, %129 : vector<16x64xf32>
    %cst_45 = arith.constant 0.000000e+00 : f32
    %131 = vector.broadcast %cst_45 : f32 to vector<16x64xf32>
    %132 = arith.maximumf %130, %131 : vector<16x64xf32>
    %133 = arith.truncf %132 : vector<16x64xf32> to vector<16x64xbf16>
    %c0_46 = arith.constant 0 : index
    %c0_47 = arith.constant 0 : index
    %c0_48 = arith.constant 0 : index
    %134 = vector.load %arg4[%c0_46, %c0_47, %c0_48] : memref<4x64x32xbf16, #tpu.memory_space<vmem>>, vector<1x64x32xbf16>
    %135 = vector.shape_cast %134 : vector<1x64x32xbf16> to vector<64x32xbf16>
    %cst_49 = arith.constant dense<0.000000e+00> : vector<16x32xf32>
    %136 = tpu.matmul %133, %135, %cst_49 {dimension_numbers = #tpu.dot_dimension_numbers<[1], [0], [0], [1], [0, 0, 1, 1], [], []>} : vector<16x64xbf16>, vector<64x32xbf16>, vector<16x32xf32> -> vector<16x32xf32>
    %137 = vector.broadcast %57 : vector<1x32xf32> to vector<16x32xf32>
    %138 = arith.addf %136, %137 : vector<16x32xf32>
    %139 = arith.addf %124, %138 : vector<16x32xf32>
    %cst_50 = arith.constant dense<0.000000e+00> : vector<16xf32>
    %140 = vector.multi_reduction <add>, %139, %cst_50 [1] : vector<16x32xf32> to vector<16xf32>
    %141 = vector.shape_cast %140 : vector<16xf32> to vector<16x1xf32>
    %cst_51 = arith.constant 3.200000e+01 : f32
    %142 = vector.broadcast %cst_51 : f32 to vector<16x1xf32>
    %143 = arith.divf %141, %142 : vector<16x1xf32>
    %144 = vector.broadcast %143 : vector<16x1xf32> to vector<16x32xf32>
    %145 = arith.subf %139, %144 : vector<16x32xf32>
    %146 = arith.mulf %145, %145 : vector<16x32xf32>
    %cst_52 = arith.constant dense<0.000000e+00> : vector<16xf32>
    %147 = vector.multi_reduction <add>, %146, %cst_52 [1] : vector<16x32xf32> to vector<16xf32>
    %148 = vector.shape_cast %147 : vector<16xf32> to vector<16x1xf32>
    %cst_53 = arith.constant 3.200000e+01 : f32
    %149 = vector.broadcast %cst_53 : f32 to vector<16x1xf32>
    %150 = arith.divf %148, %149 : vector<16x1xf32>
    %cst_54 = arith.constant 9.99999974E-6 : f32
    %151 = vector.broadcast %cst_54 : f32 to vector<16x1xf32>
    %152 = arith.addf %150, %151 : vector<16x1xf32>
    %153 = math.rsqrt %152 : vector<16x1xf32>
    %154 = vector.broadcast %153 : vector<16x1xf32> to vector<16x32xf32>
    %155 = arith.mulf %145, %154 : vector<16x32xf32>
    %156 = vector.broadcast %58 : vector<1x32xf32> to vector<16x32xf32>
    %157 = arith.mulf %155, %156 : vector<16x32xf32>
    %158 = vector.broadcast %59 : vector<1x32xf32> to vector<16x32xf32>
    %159 = arith.addf %157, %158 : vector<16x32xf32>
    %c8 = arith.constant 8 : index
    %c0_55 = arith.constant 0 : index
    %160 = vector.load %arg6[%c8, %c0_55] : memref<40x128xf32, #tpu.memory_space<vmem>>, vector<1x96xf32>
    %c9 = arith.constant 9 : index
    %c0_56 = arith.constant 0 : index
    %161 = vector.load %arg6[%c9, %c0_56] : memref<40x128xf32, #tpu.memory_space<vmem>>, vector<1x32xf32>
    %c10 = arith.constant 10 : index
    %c0_57 = arith.constant 0 : index
    %162 = vector.load %arg6[%c10, %c0_57] : memref<40x128xf32, #tpu.memory_space<vmem>>, vector<1x32xf32>
    %c11 = arith.constant 11 : index
    %c0_58 = arith.constant 0 : index
    %163 = vector.load %arg6[%c11, %c0_58] : memref<40x128xf32, #tpu.memory_space<vmem>>, vector<1x32xf32>
    %c12 = arith.constant 12 : index
    %c0_59 = arith.constant 0 : index
    %164 = vector.load %arg6[%c12, %c0_59] : memref<40x128xf32, #tpu.memory_space<vmem>>, vector<1x64xf32>
    %c13 = arith.constant 13 : index
    %c0_60 = arith.constant 0 : index
    %165 = vector.load %arg6[%c13, %c0_60] : memref<40x128xf32, #tpu.memory_space<vmem>>, vector<1x32xf32>
    %c14 = arith.constant 14 : index
    %c0_61 = arith.constant 0 : index
    %166 = vector.load %arg6[%c14, %c0_61] : memref<40x128xf32, #tpu.memory_space<vmem>>, vector<1x32xf32>
    %c15 = arith.constant 15 : index
    %c0_62 = arith.constant 0 : index
    %167 = vector.load %arg6[%c15, %c0_62] : memref<40x128xf32, #tpu.memory_space<vmem>>, vector<1x32xf32>
    %168 = arith.truncf %159 : vector<16x32xf32> to vector<16x32xbf16>
    %c1_63 = arith.constant 1 : index
    %c0_64 = arith.constant 0 : index
    %c0_65 = arith.constant 0 : index
    %169 = vector.load %arg1[%c1_63, %c0_64, %c0_65] : memref<4x32x96xbf16, #tpu.memory_space<vmem>>, vector<1x32x96xbf16>
    %170 = vector.shape_cast %169 : vector<1x32x96xbf16> to vector<32x96xbf16>
    %cst_66 = arith.constant dense<0.000000e+00> : vector<16x96xf32>
    %171 = tpu.matmul %168, %170, %cst_66 {dimension_numbers = #tpu.dot_dimension_numbers<[1], [0], [0], [1], [0, 0, 1, 1], [], []>} : vector<16x32xbf16>, vector<32x96xbf16>, vector<16x96xf32> -> vector<16x96xf32>
    %172 = vector.broadcast %160 : vector<1x96xf32> to vector<16x96xf32>
    %173 = arith.addf %171, %172 : vector<16x96xf32>
    %174 = vector.extract_strided_slice %173 {offsets = [0, 0], sizes = [16, 32], strides = [1, 1]} : vector<16x96xf32> to vector<16x32xf32>
    %175 = vector.extract_strided_slice %173 {offsets = [0, 32], sizes = [16, 32], strides = [1, 1]} : vector<16x96xf32> to vector<16x32xf32>
    %176 = arith.truncf %175 : vector<16x32xf32> to vector<16x32xbf16>
    %177 = vector.extract_strided_slice %173 {offsets = [0, 64], sizes = [16, 32], strides = [1, 1]} : vector<16x96xf32> to vector<16x32xf32>
    %178 = arith.truncf %177 : vector<16x32xf32> to vector<16x32xbf16>
    %179 = tpu.concatenate %174, %174, %174, %174 in 0 : vector<16x32xf32>, vector<16x32xf32>, vector<16x32xf32>, vector<16x32xf32> -> vector<64x32xf32>
    %cst_67 = arith.constant 0.000000e+00 : f32
    %180 = vector.broadcast %cst_67 : f32 to vector<64x32xf32>
    %181 = arith.select %22, %179, %180 : vector<64x32xi1>, vector<64x32xf32>
    %182 = arith.truncf %181 : vector<64x32xf32> to vector<64x32xbf16>
    %cst_68 = arith.constant dense<0.000000e+00> : vector<64x16xf32>
    %183 = tpu.matmul %182, %176, %cst_68 {dimension_numbers = #tpu.dot_dimension_numbers<[1], [1], [0], [0], [0, 0, 1, 0], [], []>} : vector<64x32xbf16>, vector<16x32xbf16>, vector<64x16xf32> -> vector<64x16xf32>
    %184 = arith.addf %183, %51 : vector<64x16xf32>
    %cst_69 = arith.constant dense<0xFF800000> : vector<64xf32>
    %185 = vector.multi_reduction <maximumf>, %184, %cst_69 [1] : vector<64x16xf32> to vector<64xf32>
    %186 = vector.shape_cast %185 : vector<64xf32> to vector<64x1xf32>
    %187 = vector.broadcast %186 : vector<64x1xf32> to vector<64x16xf32>
    %188 = arith.subf %184, %187 : vector<64x16xf32>
    %189 = math.exp %188 : vector<64x16xf32>
    %cst_70 = arith.constant dense<0.000000e+00> : vector<64xf32>
    %190 = vector.multi_reduction <add>, %189, %cst_70 [1] : vector<64x16xf32> to vector<64xf32>
    %191 = vector.shape_cast %190 : vector<64xf32> to vector<64x1xf32>
    %192 = tpu.reciprocal %191 {approx = true} : vector<64x1xf32> -> vector<64x1xf32>
    %193 = vector.broadcast %192 : vector<64x1xf32> to vector<64x16xf32>
    %194 = arith.mulf %189, %193 : vector<64x16xf32>
    %195 = arith.truncf %194 : vector<64x16xf32> to vector<64x16xbf16>
    %cst_71 = arith.constant dense<0.000000e+00> : vector<64x32xf32>
    %196 = tpu.matmul %195, %178, %cst_71 {dimension_numbers = #tpu.dot_dimension_numbers<[1], [0], [0], [1], [0, 0, 1, 1], [], []>} : vector<64x16xbf16>, vector<16x32xbf16>, vector<64x32xf32> -> vector<64x32xf32>
    %cst_72 = arith.constant 0.000000e+00 : f32
    %197 = vector.broadcast %cst_72 : f32 to vector<64x32xf32>
    %198 = arith.select %22, %196, %197 : vector<64x32xi1>, vector<64x32xf32>
    %199 = arith.truncf %198 : vector<64x32xf32> to vector<64x32xbf16>
    %c1_73 = arith.constant 1 : index
    %c0_74 = arith.constant 0 : index
    %c0_75 = arith.constant 0 : index
    %200 = vector.load %arg2[%c1_73, %c0_74, %c0_75] : memref<4x32x32xbf16, #tpu.memory_space<vmem>>, vector<1x32x32xbf16>
    %201 = vector.shape_cast %200 : vector<1x32x32xbf16> to vector<32x32xbf16>
    %cst_76 = arith.constant dense<0.000000e+00> : vector<64x32xf32>
    %202 = tpu.matmul %199, %201, %cst_76 {dimension_numbers = #tpu.dot_dimension_numbers<[1], [0], [0], [1], [0, 0, 1, 1], [], []>} : vector<64x32xbf16>, vector<32x32xbf16>, vector<64x32xf32> -> vector<64x32xf32>
    %203 = vector.extract_strided_slice %202 {offsets = [0, 0], sizes = [16, 32], strides = [1, 1]} : vector<64x32xf32> to vector<16x32xf32>
    %204 = vector.extract_strided_slice %202 {offsets = [16, 0], sizes = [16, 32], strides = [1, 1]} : vector<64x32xf32> to vector<16x32xf32>
    %205 = arith.addf %203, %204 : vector<16x32xf32>
    %206 = vector.extract_strided_slice %202 {offsets = [32, 0], sizes = [16, 32], strides = [1, 1]} : vector<64x32xf32> to vector<16x32xf32>
    %207 = arith.addf %205, %206 : vector<16x32xf32>
    %208 = vector.extract_strided_slice %202 {offsets = [48, 0], sizes = [16, 32], strides = [1, 1]} : vector<64x32xf32> to vector<16x32xf32>
    %209 = arith.addf %207, %208 : vector<16x32xf32>
    %210 = vector.broadcast %161 : vector<1x32xf32> to vector<16x32xf32>
    %211 = arith.addf %209, %210 : vector<16x32xf32>
    %212 = arith.addf %159, %211 : vector<16x32xf32>
    %cst_77 = arith.constant dense<0.000000e+00> : vector<16xf32>
    %213 = vector.multi_reduction <add>, %212, %cst_77 [1] : vector<16x32xf32> to vector<16xf32>
    %214 = vector.shape_cast %213 : vector<16xf32> to vector<16x1xf32>
    %cst_78 = arith.constant 3.200000e+01 : f32
    %215 = vector.broadcast %cst_78 : f32 to vector<16x1xf32>
    %216 = arith.divf %214, %215 : vector<16x1xf32>
    %217 = vector.broadcast %216 : vector<16x1xf32> to vector<16x32xf32>
    %218 = arith.subf %212, %217 : vector<16x32xf32>
    %219 = arith.mulf %218, %218 : vector<16x32xf32>
    %cst_79 = arith.constant dense<0.000000e+00> : vector<16xf32>
    %220 = vector.multi_reduction <add>, %219, %cst_79 [1] : vector<16x32xf32> to vector<16xf32>
    %221 = vector.shape_cast %220 : vector<16xf32> to vector<16x1xf32>
    %cst_80 = arith.constant 3.200000e+01 : f32
    %222 = vector.broadcast %cst_80 : f32 to vector<16x1xf32>
    %223 = arith.divf %221, %222 : vector<16x1xf32>
    %cst_81 = arith.constant 9.99999974E-6 : f32
    %224 = vector.broadcast %cst_81 : f32 to vector<16x1xf32>
    %225 = arith.addf %223, %224 : vector<16x1xf32>
    %226 = math.rsqrt %225 : vector<16x1xf32>
    %227 = vector.broadcast %226 : vector<16x1xf32> to vector<16x32xf32>
    %228 = arith.mulf %218, %227 : vector<16x32xf32>
    %229 = vector.broadcast %162 : vector<1x32xf32> to vector<16x32xf32>
    %230 = arith.mulf %228, %229 : vector<16x32xf32>
    %231 = vector.broadcast %163 : vector<1x32xf32> to vector<16x32xf32>
    %232 = arith.addf %230, %231 : vector<16x32xf32>
    %233 = arith.truncf %232 : vector<16x32xf32> to vector<16x32xbf16>
    %c1_82 = arith.constant 1 : index
    %c0_83 = arith.constant 0 : index
    %c0_84 = arith.constant 0 : index
    %234 = vector.load %arg3[%c1_82, %c0_83, %c0_84] : memref<4x32x64xbf16, #tpu.memory_space<vmem>>, vector<1x32x64xbf16>
    %235 = vector.shape_cast %234 : vector<1x32x64xbf16> to vector<32x64xbf16>
    %cst_85 = arith.constant dense<0.000000e+00> : vector<16x64xf32>
    %236 = tpu.matmul %233, %235, %cst_85 {dimension_numbers = #tpu.dot_dimension_numbers<[1], [0], [0], [1], [0, 0, 1, 1], [], []>} : vector<16x32xbf16>, vector<32x64xbf16>, vector<16x64xf32> -> vector<16x64xf32>
    %237 = vector.broadcast %164 : vector<1x64xf32> to vector<16x64xf32>
    %238 = arith.addf %236, %237 : vector<16x64xf32>
    %cst_86 = arith.constant 0.000000e+00 : f32
    %239 = vector.broadcast %cst_86 : f32 to vector<16x64xf32>
    %240 = arith.maximumf %238, %239 : vector<16x64xf32>
    %241 = arith.truncf %240 : vector<16x64xf32> to vector<16x64xbf16>
    %c1_87 = arith.constant 1 : index
    %c0_88 = arith.constant 0 : index
    %c0_89 = arith.constant 0 : index
    %242 = vector.load %arg4[%c1_87, %c0_88, %c0_89] : memref<4x64x32xbf16, #tpu.memory_space<vmem>>, vector<1x64x32xbf16>
    %243 = vector.shape_cast %242 : vector<1x64x32xbf16> to vector<64x32xbf16>
    %cst_90 = arith.constant dense<0.000000e+00> : vector<16x32xf32>
    %244 = tpu.matmul %241, %243, %cst_90 {dimension_numbers = #tpu.dot_dimension_numbers<[1], [0], [0], [1], [0, 0, 1, 1], [], []>} : vector<16x64xbf16>, vector<64x32xbf16>, vector<16x32xf32> -> vector<16x32xf32>
    %245 = vector.broadcast %165 : vector<1x32xf32> to vector<16x32xf32>
    %246 = arith.addf %244, %245 : vector<16x32xf32>
    %247 = arith.addf %232, %246 : vector<16x32xf32>
    %cst_91 = arith.constant dense<0.000000e+00> : vector<16xf32>
    %248 = vector.multi_reduction <add>, %247, %cst_91 [1] : vector<16x32xf32> to vector<16xf32>
    %249 = vector.shape_cast %248 : vector<16xf32> to vector<16x1xf32>
    %cst_92 = arith.constant 3.200000e+01 : f32
    %250 = vector.broadcast %cst_92 : f32 to vector<16x1xf32>
    %251 = arith.divf %249, %250 : vector<16x1xf32>
    %252 = vector.broadcast %251 : vector<16x1xf32> to vector<16x32xf32>
    %253 = arith.subf %247, %252 : vector<16x32xf32>
    %254 = arith.mulf %253, %253 : vector<16x32xf32>
    %cst_93 = arith.constant dense<0.000000e+00> : vector<16xf32>
    %255 = vector.multi_reduction <add>, %254, %cst_93 [1] : vector<16x32xf32> to vector<16xf32>
    %256 = vector.shape_cast %255 : vector<16xf32> to vector<16x1xf32>
    %cst_94 = arith.constant 3.200000e+01 : f32
    %257 = vector.broadcast %cst_94 : f32 to vector<16x1xf32>
    %258 = arith.divf %256, %257 : vector<16x1xf32>
    %cst_95 = arith.constant 9.99999974E-6 : f32
    %259 = vector.broadcast %cst_95 : f32 to vector<16x1xf32>
    %260 = arith.addf %258, %259 : vector<16x1xf32>
    %261 = math.rsqrt %260 : vector<16x1xf32>
    %262 = vector.broadcast %261 : vector<16x1xf32> to vector<16x32xf32>
    %263 = arith.mulf %253, %262 : vector<16x32xf32>
    %264 = vector.broadcast %166 : vector<1x32xf32> to vector<16x32xf32>
    %265 = arith.mulf %263, %264 : vector<16x32xf32>
    %266 = vector.broadcast %167 : vector<1x32xf32> to vector<16x32xf32>
    %267 = arith.addf %265, %266 : vector<16x32xf32>
    %268 = tpu.iota {dimensions = array<i32: 0>} : vector<8x16xi32>
    %269 = tpu.iota {dimensions = array<i32: 1>} : vector<8x16xi32>
    %c2_i32 = arith.constant 2 : i32
    %270 = vector.broadcast %c2_i32 : i32 to vector<8x16xi32>
    %271 = arith.muli %268, %270 : vector<8x16xi32>
    %272 = arith.cmpi sge, %269, %271 : vector<8x16xi32>
    %c2_i32_96 = arith.constant 2 : i32
    %273 = vector.broadcast %c2_i32_96 : i32 to vector<8x16xi32>
    %274 = arith.muli %268, %273 : vector<8x16xi32>
    %c2_i32_97 = arith.constant 2 : i32
    %275 = vector.broadcast %c2_i32_97 : i32 to vector<8x16xi32>
    %276 = arith.addi %274, %275 : vector<8x16xi32>
    %277 = arith.cmpi slt, %269, %276 : vector<8x16xi32>
    %278 = arith.andi %272, %277 : vector<8x16xi1>
    %cst_98 = arith.constant 5.000000e-01 : f32
    %cst_99 = arith.constant 0.000000e+00 : f32
    %279 = vector.broadcast %cst_98 : f32 to vector<8x16xf32>
    %280 = vector.broadcast %cst_99 : f32 to vector<8x16xf32>
    %281 = arith.select %278, %279, %280 : vector<8x16xi1>, vector<8x16xf32>
    %282 = arith.truncf %281 : vector<8x16xf32> to vector<8x16xbf16>
    %283 = arith.truncf %267 : vector<16x32xf32> to vector<16x32xbf16>
    %cst_100 = arith.constant dense<0.000000e+00> : vector<8x32xf32>
    %284 = tpu.matmul %282, %283, %cst_100 {dimension_numbers = #tpu.dot_dimension_numbers<[1], [0], [0], [1], [0, 0, 1, 1], [], []>} : vector<8x16xbf16>, vector<16x32xbf16>, vector<8x32xf32> -> vector<8x32xf32>
    %285 = tpu.iota {dimensions = array<i32: 1>} : vector<8x32xi32>
    %c0_i32_101 = arith.constant 0 : i32
    %286 = vector.broadcast %c0_i32_101 : i32 to vector<8x32xi32>
    %287 = arith.cmpi sge, %285, %286 : vector<8x32xi32>
    %c8_i32_102 = arith.constant 8 : i32
    %288 = vector.broadcast %c8_i32_102 : i32 to vector<8x32xi32>
    %289 = arith.cmpi slt, %285, %288 : vector<8x32xi32>
    %290 = arith.andi %287, %289 : vector<8x32xi1>
    %c8_i32_103 = arith.constant 8 : i32
    %291 = vector.broadcast %c8_i32_103 : i32 to vector<8x32xi32>
    %292 = arith.cmpi sge, %285, %291 : vector<8x32xi32>
    %c16_i32_104 = arith.constant 16 : i32
    %293 = vector.broadcast %c16_i32_104 : i32 to vector<8x32xi32>
    %294 = arith.cmpi slt, %285, %293 : vector<8x32xi32>
    %295 = arith.andi %292, %294 : vector<8x32xi1>
    %c16_i32_105 = arith.constant 16 : i32
    %296 = vector.broadcast %c16_i32_105 : i32 to vector<8x32xi32>
    %297 = arith.cmpi sge, %285, %296 : vector<8x32xi32>
    %c24_i32_106 = arith.constant 24 : i32
    %298 = vector.broadcast %c24_i32_106 : i32 to vector<8x32xi32>
    %299 = arith.cmpi slt, %285, %298 : vector<8x32xi32>
    %300 = arith.andi %297, %299 : vector<8x32xi1>
    %c24_i32_107 = arith.constant 24 : i32
    %301 = vector.broadcast %c24_i32_107 : i32 to vector<8x32xi32>
    %302 = arith.cmpi sge, %285, %301 : vector<8x32xi32>
    %c32_i32_108 = arith.constant 32 : i32
    %303 = vector.broadcast %c32_i32_108 : i32 to vector<8x32xi32>
    %304 = arith.cmpi slt, %285, %303 : vector<8x32xi32>
    %305 = arith.andi %302, %304 : vector<8x32xi1>
    %306 = tpu.concatenate %290, %295, %300, %305 in 0 : vector<8x32xi1>, vector<8x32xi1>, vector<8x32xi1>, vector<8x32xi1> -> vector<32x32xi1>
    %307 = tpu.iota {dimensions = array<i32: 0>} : vector<8x8xi32>
    %308 = tpu.iota {dimensions = array<i32: 1>} : vector<8x8xi32>
    %c0_i32_109 = arith.constant 0 : i32
    %309 = vector.broadcast %c0_i32_109 : i32 to vector<8x8xi32>
    %310 = arith.cmpi sge, %307, %309 : vector<8x8xi32>
    %c4_i32 = arith.constant 4 : i32
    %311 = vector.broadcast %c4_i32 : i32 to vector<8x8xi32>
    %312 = arith.cmpi slt, %307, %311 : vector<8x8xi32>
    %313 = arith.andi %310, %312 : vector<8x8xi1>
    %c0_i32_110 = arith.constant 0 : i32
    %314 = vector.broadcast %c0_i32_110 : i32 to vector<8x8xi32>
    %315 = arith.cmpi sge, %308, %314 : vector<8x8xi32>
    %316 = arith.andi %313, %315 : vector<8x8xi1>
    %c4_i32_111 = arith.constant 4 : i32
    %317 = vector.broadcast %c4_i32_111 : i32 to vector<8x8xi32>
    %318 = arith.cmpi slt, %308, %317 : vector<8x8xi32>
    %319 = arith.andi %316, %318 : vector<8x8xi1>
    %c4_i32_112 = arith.constant 4 : i32
    %320 = vector.broadcast %c4_i32_112 : i32 to vector<8x8xi32>
    %321 = arith.cmpi sge, %307, %320 : vector<8x8xi32>
    %c8_i32_113 = arith.constant 8 : i32
    %322 = vector.broadcast %c8_i32_113 : i32 to vector<8x8xi32>
    %323 = arith.cmpi slt, %307, %322 : vector<8x8xi32>
    %324 = arith.andi %321, %323 : vector<8x8xi1>
    %c4_i32_114 = arith.constant 4 : i32
    %325 = vector.broadcast %c4_i32_114 : i32 to vector<8x8xi32>
    %326 = arith.cmpi sge, %308, %325 : vector<8x8xi32>
    %327 = arith.andi %324, %326 : vector<8x8xi1>
    %c8_i32_115 = arith.constant 8 : i32
    %328 = vector.broadcast %c8_i32_115 : i32 to vector<8x8xi32>
    %329 = arith.cmpi slt, %308, %328 : vector<8x8xi32>
    %330 = arith.andi %327, %329 : vector<8x8xi1>
    %331 = arith.ori %319, %330 : vector<8x8xi1>
    %cst_116 = arith.constant 0.000000e+00 : f32
    %cst_117 = arith.constant -1.000000e+09 : f32
    %332 = vector.broadcast %cst_116 : f32 to vector<8x8xf32>
    %333 = vector.broadcast %cst_117 : f32 to vector<8x8xf32>
    %334 = arith.select %331, %332, %333 : vector<8x8xi1>, vector<8x8xf32>
    %335 = tpu.concatenate %334, %334, %334, %334 in 0 : vector<8x8xf32>, vector<8x8xf32>, vector<8x8xf32>, vector<8x8xf32> -> vector<32x8xf32>
    %c16 = arith.constant 16 : index
    %c0_118 = arith.constant 0 : index
    %336 = vector.load %arg6[%c16, %c0_118] : memref<40x128xf32, #tpu.memory_space<vmem>>, vector<1x96xf32>
    %c17 = arith.constant 17 : index
    %c0_119 = arith.constant 0 : index
    %337 = vector.load %arg6[%c17, %c0_119] : memref<40x128xf32, #tpu.memory_space<vmem>>, vector<1x32xf32>
    %c18 = arith.constant 18 : index
    %c0_120 = arith.constant 0 : index
    %338 = vector.load %arg6[%c18, %c0_120] : memref<40x128xf32, #tpu.memory_space<vmem>>, vector<1x32xf32>
    %c19 = arith.constant 19 : index
    %c0_121 = arith.constant 0 : index
    %339 = vector.load %arg6[%c19, %c0_121] : memref<40x128xf32, #tpu.memory_space<vmem>>, vector<1x32xf32>
    %c20 = arith.constant 20 : index
    %c0_122 = arith.constant 0 : index
    %340 = vector.load %arg6[%c20, %c0_122] : memref<40x128xf32, #tpu.memory_space<vmem>>, vector<1x64xf32>
    %c21 = arith.constant 21 : index
    %c0_123 = arith.constant 0 : index
    %341 = vector.load %arg6[%c21, %c0_123] : memref<40x128xf32, #tpu.memory_space<vmem>>, vector<1x32xf32>
    %c22 = arith.constant 22 : index
    %c0_124 = arith.constant 0 : index
    %342 = vector.load %arg6[%c22, %c0_124] : memref<40x128xf32, #tpu.memory_space<vmem>>, vector<1x32xf32>
    %c23 = arith.constant 23 : index
    %c0_125 = arith.constant 0 : index
    %343 = vector.load %arg6[%c23, %c0_125] : memref<40x128xf32, #tpu.memory_space<vmem>>, vector<1x32xf32>
    %344 = arith.truncf %284 : vector<8x32xf32> to vector<8x32xbf16>
    %c2_126 = arith.constant 2 : index
    %c0_127 = arith.constant 0 : index
    %c0_128 = arith.constant 0 : index
    %345 = vector.load %arg1[%c2_126, %c0_127, %c0_128] : memref<4x32x96xbf16, #tpu.memory_space<vmem>>, vector<1x32x96xbf16>
    %346 = vector.shape_cast %345 : vector<1x32x96xbf16> to vector<32x96xbf16>
    %cst_129 = arith.constant dense<0.000000e+00> : vector<8x96xf32>
    %347 = tpu.matmul %344, %346, %cst_129 {dimension_numbers = #tpu.dot_dimension_numbers<[1], [0], [0], [1], [0, 0, 1, 1], [], []>} : vector<8x32xbf16>, vector<32x96xbf16>, vector<8x96xf32> -> vector<8x96xf32>
    %348 = vector.broadcast %336 : vector<1x96xf32> to vector<8x96xf32>
    %349 = arith.addf %347, %348 : vector<8x96xf32>
    %350 = vector.extract_strided_slice %349 {offsets = [0, 0], sizes = [8, 32], strides = [1, 1]} : vector<8x96xf32> to vector<8x32xf32>
    %351 = vector.extract_strided_slice %349 {offsets = [0, 32], sizes = [8, 32], strides = [1, 1]} : vector<8x96xf32> to vector<8x32xf32>
    %352 = arith.truncf %351 : vector<8x32xf32> to vector<8x32xbf16>
    %353 = vector.extract_strided_slice %349 {offsets = [0, 64], sizes = [8, 32], strides = [1, 1]} : vector<8x96xf32> to vector<8x32xf32>
    %354 = arith.truncf %353 : vector<8x32xf32> to vector<8x32xbf16>
    %355 = tpu.concatenate %350, %350, %350, %350 in 0 : vector<8x32xf32>, vector<8x32xf32>, vector<8x32xf32>, vector<8x32xf32> -> vector<32x32xf32>
    %cst_130 = arith.constant 0.000000e+00 : f32
    %356 = vector.broadcast %cst_130 : f32 to vector<32x32xf32>
    %357 = arith.select %306, %355, %356 : vector<32x32xi1>, vector<32x32xf32>
    %358 = arith.truncf %357 : vector<32x32xf32> to vector<32x32xbf16>
    %cst_131 = arith.constant dense<0.000000e+00> : vector<32x8xf32>
    %359 = tpu.matmul %358, %352, %cst_131 {dimension_numbers = #tpu.dot_dimension_numbers<[1], [1], [0], [0], [0, 0, 1, 0], [], []>} : vector<32x32xbf16>, vector<8x32xbf16>, vector<32x8xf32> -> vector<32x8xf32>
    %360 = arith.addf %359, %335 : vector<32x8xf32>
    %cst_132 = arith.constant dense<0xFF800000> : vector<32xf32>
    %361 = vector.multi_reduction <maximumf>, %360, %cst_132 [1] : vector<32x8xf32> to vector<32xf32>
    %362 = vector.shape_cast %361 : vector<32xf32> to vector<32x1xf32>
    %363 = vector.broadcast %362 : vector<32x1xf32> to vector<32x8xf32>
    %364 = arith.subf %360, %363 : vector<32x8xf32>
    %365 = math.exp %364 : vector<32x8xf32>
    %cst_133 = arith.constant dense<0.000000e+00> : vector<32xf32>
    %366 = vector.multi_reduction <add>, %365, %cst_133 [1] : vector<32x8xf32> to vector<32xf32>
    %367 = vector.shape_cast %366 : vector<32xf32> to vector<32x1xf32>
    %368 = tpu.reciprocal %367 {approx = true} : vector<32x1xf32> -> vector<32x1xf32>
    %369 = vector.broadcast %368 : vector<32x1xf32> to vector<32x8xf32>
    %370 = arith.mulf %365, %369 : vector<32x8xf32>
    %371 = arith.truncf %370 : vector<32x8xf32> to vector<32x8xbf16>
    %cst_134 = arith.constant dense<0.000000e+00> : vector<32x32xf32>
    %372 = tpu.matmul %371, %354, %cst_134 {dimension_numbers = #tpu.dot_dimension_numbers<[1], [0], [0], [1], [0, 0, 1, 1], [], []>} : vector<32x8xbf16>, vector<8x32xbf16>, vector<32x32xf32> -> vector<32x32xf32>
    %cst_135 = arith.constant 0.000000e+00 : f32
    %373 = vector.broadcast %cst_135 : f32 to vector<32x32xf32>
    %374 = arith.select %306, %372, %373 : vector<32x32xi1>, vector<32x32xf32>
    %375 = arith.truncf %374 : vector<32x32xf32> to vector<32x32xbf16>
    %c2_136 = arith.constant 2 : index
    %c0_137 = arith.constant 0 : index
    %c0_138 = arith.constant 0 : index
    %376 = vector.load %arg2[%c2_136, %c0_137, %c0_138] : memref<4x32x32xbf16, #tpu.memory_space<vmem>>, vector<1x32x32xbf16>
    %377 = vector.shape_cast %376 : vector<1x32x32xbf16> to vector<32x32xbf16>
    %cst_139 = arith.constant dense<0.000000e+00> : vector<32x32xf32>
    %378 = tpu.matmul %375, %377, %cst_139 {dimension_numbers = #tpu.dot_dimension_numbers<[1], [0], [0], [1], [0, 0, 1, 1], [], []>} : vector<32x32xbf16>, vector<32x32xbf16>, vector<32x32xf32> -> vector<32x32xf32>
    %379 = vector.extract_strided_slice %378 {offsets = [0, 0], sizes = [8, 32], strides = [1, 1]} : vector<32x32xf32> to vector<8x32xf32>
    %380 = vector.extract_strided_slice %378 {offsets = [8, 0], sizes = [8, 32], strides = [1, 1]} : vector<32x32xf32> to vector<8x32xf32>
    %381 = arith.addf %379, %380 : vector<8x32xf32>
    %382 = vector.extract_strided_slice %378 {offsets = [16, 0], sizes = [8, 32], strides = [1, 1]} : vector<32x32xf32> to vector<8x32xf32>
    %383 = arith.addf %381, %382 : vector<8x32xf32>
    %384 = vector.extract_strided_slice %378 {offsets = [24, 0], sizes = [8, 32], strides = [1, 1]} : vector<32x32xf32> to vector<8x32xf32>
    %385 = arith.addf %383, %384 : vector<8x32xf32>
    %386 = vector.broadcast %337 : vector<1x32xf32> to vector<8x32xf32>
    %387 = arith.addf %385, %386 : vector<8x32xf32>
    %388 = arith.addf %284, %387 : vector<8x32xf32>
    %cst_140 = arith.constant dense<0.000000e+00> : vector<8xf32>
    %389 = vector.multi_reduction <add>, %388, %cst_140 [1] : vector<8x32xf32> to vector<8xf32>
    %390 = vector.shape_cast %389 : vector<8xf32> to vector<8x1xf32>
    %cst_141 = arith.constant 3.200000e+01 : f32
    %391 = vector.broadcast %cst_141 : f32 to vector<8x1xf32>
    %392 = arith.divf %390, %391 : vector<8x1xf32>
    %393 = vector.broadcast %392 : vector<8x1xf32> to vector<8x32xf32>
    %394 = arith.subf %388, %393 : vector<8x32xf32>
    %395 = arith.mulf %394, %394 : vector<8x32xf32>
    %cst_142 = arith.constant dense<0.000000e+00> : vector<8xf32>
    %396 = vector.multi_reduction <add>, %395, %cst_142 [1] : vector<8x32xf32> to vector<8xf32>
    %397 = vector.shape_cast %396 : vector<8xf32> to vector<8x1xf32>
    %cst_143 = arith.constant 3.200000e+01 : f32
    %398 = vector.broadcast %cst_143 : f32 to vector<8x1xf32>
    %399 = arith.divf %397, %398 : vector<8x1xf32>
    %cst_144 = arith.constant 9.99999974E-6 : f32
    %400 = vector.broadcast %cst_144 : f32 to vector<8x1xf32>
    %401 = arith.addf %399, %400 : vector<8x1xf32>
    %402 = math.rsqrt %401 : vector<8x1xf32>
    %403 = vector.broadcast %402 : vector<8x1xf32> to vector<8x32xf32>
    %404 = arith.mulf %394, %403 : vector<8x32xf32>
    %405 = vector.broadcast %338 : vector<1x32xf32> to vector<8x32xf32>
    %406 = arith.mulf %404, %405 : vector<8x32xf32>
    %407 = vector.broadcast %339 : vector<1x32xf32> to vector<8x32xf32>
    %408 = arith.addf %406, %407 : vector<8x32xf32>
    %409 = arith.truncf %408 : vector<8x32xf32> to vector<8x32xbf16>
    %c2_145 = arith.constant 2 : index
    %c0_146 = arith.constant 0 : index
    %c0_147 = arith.constant 0 : index
    %410 = vector.load %arg3[%c2_145, %c0_146, %c0_147] : memref<4x32x64xbf16, #tpu.memory_space<vmem>>, vector<1x32x64xbf16>
    %411 = vector.shape_cast %410 : vector<1x32x64xbf16> to vector<32x64xbf16>
    %cst_148 = arith.constant dense<0.000000e+00> : vector<8x64xf32>
    %412 = tpu.matmul %409, %411, %cst_148 {dimension_numbers = #tpu.dot_dimension_numbers<[1], [0], [0], [1], [0, 0, 1, 1], [], []>} : vector<8x32xbf16>, vector<32x64xbf16>, vector<8x64xf32> -> vector<8x64xf32>
    %413 = vector.broadcast %340 : vector<1x64xf32> to vector<8x64xf32>
    %414 = arith.addf %412, %413 : vector<8x64xf32>
    %cst_149 = arith.constant 0.000000e+00 : f32
    %415 = vector.broadcast %cst_149 : f32 to vector<8x64xf32>
    %416 = arith.maximumf %414, %415 : vector<8x64xf32>
    %417 = arith.truncf %416 : vector<8x64xf32> to vector<8x64xbf16>
    %c2_150 = arith.constant 2 : index
    %c0_151 = arith.constant 0 : index
    %c0_152 = arith.constant 0 : index
    %418 = vector.load %arg4[%c2_150, %c0_151, %c0_152] : memref<4x64x32xbf16, #tpu.memory_space<vmem>>, vector<1x64x32xbf16>
    %419 = vector.shape_cast %418 : vector<1x64x32xbf16> to vector<64x32xbf16>
    %cst_153 = arith.constant dense<0.000000e+00> : vector<8x32xf32>
    %420 = tpu.matmul %417, %419, %cst_153 {dimension_numbers = #tpu.dot_dimension_numbers<[1], [0], [0], [1], [0, 0, 1, 1], [], []>} : vector<8x64xbf16>, vector<64x32xbf16>, vector<8x32xf32> -> vector<8x32xf32>
    %421 = vector.broadcast %341 : vector<1x32xf32> to vector<8x32xf32>
    %422 = arith.addf %420, %421 : vector<8x32xf32>
    %423 = arith.addf %408, %422 : vector<8x32xf32>
    %cst_154 = arith.constant dense<0.000000e+00> : vector<8xf32>
    %424 = vector.multi_reduction <add>, %423, %cst_154 [1] : vector<8x32xf32> to vector<8xf32>
    %425 = vector.shape_cast %424 : vector<8xf32> to vector<8x1xf32>
    %cst_155 = arith.constant 3.200000e+01 : f32
    %426 = vector.broadcast %cst_155 : f32 to vector<8x1xf32>
    %427 = arith.divf %425, %426 : vector<8x1xf32>
    %428 = vector.broadcast %427 : vector<8x1xf32> to vector<8x32xf32>
    %429 = arith.subf %423, %428 : vector<8x32xf32>
    %430 = arith.mulf %429, %429 : vector<8x32xf32>
    %cst_156 = arith.constant dense<0.000000e+00> : vector<8xf32>
    %431 = vector.multi_reduction <add>, %430, %cst_156 [1] : vector<8x32xf32> to vector<8xf32>
    %432 = vector.shape_cast %431 : vector<8xf32> to vector<8x1xf32>
    %cst_157 = arith.constant 3.200000e+01 : f32
    %433 = vector.broadcast %cst_157 : f32 to vector<8x1xf32>
    %434 = arith.divf %432, %433 : vector<8x1xf32>
    %cst_158 = arith.constant 9.99999974E-6 : f32
    %435 = vector.broadcast %cst_158 : f32 to vector<8x1xf32>
    %436 = arith.addf %434, %435 : vector<8x1xf32>
    %437 = math.rsqrt %436 : vector<8x1xf32>
    %438 = vector.broadcast %437 : vector<8x1xf32> to vector<8x32xf32>
    %439 = arith.mulf %429, %438 : vector<8x32xf32>
    %440 = vector.broadcast %342 : vector<1x32xf32> to vector<8x32xf32>
    %441 = arith.mulf %439, %440 : vector<8x32xf32>
    %442 = vector.broadcast %343 : vector<1x32xf32> to vector<8x32xf32>
    %443 = arith.addf %441, %442 : vector<8x32xf32>
    %c24 = arith.constant 24 : index
    %c0_159 = arith.constant 0 : index
    %444 = vector.load %arg6[%c24, %c0_159] : memref<40x128xf32, #tpu.memory_space<vmem>>, vector<1x96xf32>
    %c25 = arith.constant 25 : index
    %c0_160 = arith.constant 0 : index
    %445 = vector.load %arg6[%c25, %c0_160] : memref<40x128xf32, #tpu.memory_space<vmem>>, vector<1x32xf32>
    %c26 = arith.constant 26 : index
    %c0_161 = arith.constant 0 : index
    %446 = vector.load %arg6[%c26, %c0_161] : memref<40x128xf32, #tpu.memory_space<vmem>>, vector<1x32xf32>
    %c27 = arith.constant 27 : index
    %c0_162 = arith.constant 0 : index
    %447 = vector.load %arg6[%c27, %c0_162] : memref<40x128xf32, #tpu.memory_space<vmem>>, vector<1x32xf32>
    %c28 = arith.constant 28 : index
    %c0_163 = arith.constant 0 : index
    %448 = vector.load %arg6[%c28, %c0_163] : memref<40x128xf32, #tpu.memory_space<vmem>>, vector<1x64xf32>
    %c29 = arith.constant 29 : index
    %c0_164 = arith.constant 0 : index
    %449 = vector.load %arg6[%c29, %c0_164] : memref<40x128xf32, #tpu.memory_space<vmem>>, vector<1x32xf32>
    %c30 = arith.constant 30 : index
    %c0_165 = arith.constant 0 : index
    %450 = vector.load %arg6[%c30, %c0_165] : memref<40x128xf32, #tpu.memory_space<vmem>>, vector<1x32xf32>
    %c31 = arith.constant 31 : index
    %c0_166 = arith.constant 0 : index
    %451 = vector.load %arg6[%c31, %c0_166] : memref<40x128xf32, #tpu.memory_space<vmem>>, vector<1x32xf32>
    %452 = arith.truncf %443 : vector<8x32xf32> to vector<8x32xbf16>
    %c3_167 = arith.constant 3 : index
    %c0_168 = arith.constant 0 : index
    %c0_169 = arith.constant 0 : index
    %453 = vector.load %arg1[%c3_167, %c0_168, %c0_169] : memref<4x32x96xbf16, #tpu.memory_space<vmem>>, vector<1x32x96xbf16>
    %454 = vector.shape_cast %453 : vector<1x32x96xbf16> to vector<32x96xbf16>
    %cst_170 = arith.constant dense<0.000000e+00> : vector<8x96xf32>
    %455 = tpu.matmul %452, %454, %cst_170 {dimension_numbers = #tpu.dot_dimension_numbers<[1], [0], [0], [1], [0, 0, 1, 1], [], []>} : vector<8x32xbf16>, vector<32x96xbf16>, vector<8x96xf32> -> vector<8x96xf32>
    %456 = vector.broadcast %444 : vector<1x96xf32> to vector<8x96xf32>
    %457 = arith.addf %455, %456 : vector<8x96xf32>
    %458 = vector.extract_strided_slice %457 {offsets = [0, 0], sizes = [8, 32], strides = [1, 1]} : vector<8x96xf32> to vector<8x32xf32>
    %459 = vector.extract_strided_slice %457 {offsets = [0, 32], sizes = [8, 32], strides = [1, 1]} : vector<8x96xf32> to vector<8x32xf32>
    %460 = arith.truncf %459 : vector<8x32xf32> to vector<8x32xbf16>
    %461 = vector.extract_strided_slice %457 {offsets = [0, 64], sizes = [8, 32], strides = [1, 1]} : vector<8x96xf32> to vector<8x32xf32>
    %462 = arith.truncf %461 : vector<8x32xf32> to vector<8x32xbf16>
    %463 = tpu.concatenate %458, %458, %458, %458 in 0 : vector<8x32xf32>, vector<8x32xf32>, vector<8x32xf32>, vector<8x32xf32> -> vector<32x32xf32>
    %cst_171 = arith.constant 0.000000e+00 : f32
    %464 = vector.broadcast %cst_171 : f32 to vector<32x32xf32>
    %465 = arith.select %306, %463, %464 : vector<32x32xi1>, vector<32x32xf32>
    %466 = arith.truncf %465 : vector<32x32xf32> to vector<32x32xbf16>
    %cst_172 = arith.constant dense<0.000000e+00> : vector<32x8xf32>
    %467 = tpu.matmul %466, %460, %cst_172 {dimension_numbers = #tpu.dot_dimension_numbers<[1], [1], [0], [0], [0, 0, 1, 0], [], []>} : vector<32x32xbf16>, vector<8x32xbf16>, vector<32x8xf32> -> vector<32x8xf32>
    %468 = arith.addf %467, %335 : vector<32x8xf32>
    %cst_173 = arith.constant dense<0xFF800000> : vector<32xf32>
    %469 = vector.multi_reduction <maximumf>, %468, %cst_173 [1] : vector<32x8xf32> to vector<32xf32>
    %470 = vector.shape_cast %469 : vector<32xf32> to vector<32x1xf32>
    %471 = vector.broadcast %470 : vector<32x1xf32> to vector<32x8xf32>
    %472 = arith.subf %468, %471 : vector<32x8xf32>
    %473 = math.exp %472 : vector<32x8xf32>
    %cst_174 = arith.constant dense<0.000000e+00> : vector<32xf32>
    %474 = vector.multi_reduction <add>, %473, %cst_174 [1] : vector<32x8xf32> to vector<32xf32>
    %475 = vector.shape_cast %474 : vector<32xf32> to vector<32x1xf32>
    %476 = tpu.reciprocal %475 {approx = true} : vector<32x1xf32> -> vector<32x1xf32>
    %477 = vector.broadcast %476 : vector<32x1xf32> to vector<32x8xf32>
    %478 = arith.mulf %473, %477 : vector<32x8xf32>
    %479 = arith.truncf %478 : vector<32x8xf32> to vector<32x8xbf16>
    %cst_175 = arith.constant dense<0.000000e+00> : vector<32x32xf32>
    %480 = tpu.matmul %479, %462, %cst_175 {dimension_numbers = #tpu.dot_dimension_numbers<[1], [0], [0], [1], [0, 0, 1, 1], [], []>} : vector<32x8xbf16>, vector<8x32xbf16>, vector<32x32xf32> -> vector<32x32xf32>
    %cst_176 = arith.constant 0.000000e+00 : f32
    %481 = vector.broadcast %cst_176 : f32 to vector<32x32xf32>
    %482 = arith.select %306, %480, %481 : vector<32x32xi1>, vector<32x32xf32>
    %483 = arith.truncf %482 : vector<32x32xf32> to vector<32x32xbf16>
    %c3_177 = arith.constant 3 : index
    %c0_178 = arith.constant 0 : index
    %c0_179 = arith.constant 0 : index
    %484 = vector.load %arg2[%c3_177, %c0_178, %c0_179] : memref<4x32x32xbf16, #tpu.memory_space<vmem>>, vector<1x32x32xbf16>
    %485 = vector.shape_cast %484 : vector<1x32x32xbf16> to vector<32x32xbf16>
    %cst_180 = arith.constant dense<0.000000e+00> : vector<32x32xf32>
    %486 = tpu.matmul %483, %485, %cst_180 {dimension_numbers = #tpu.dot_dimension_numbers<[1], [0], [0], [1], [0, 0, 1, 1], [], []>} : vector<32x32xbf16>, vector<32x32xbf16>, vector<32x32xf32> -> vector<32x32xf32>
    %487 = vector.extract_strided_slice %486 {offsets = [0, 0], sizes = [8, 32], strides = [1, 1]} : vector<32x32xf32> to vector<8x32xf32>
    %488 = vector.extract_strided_slice %486 {offsets = [8, 0], sizes = [8, 32], strides = [1, 1]} : vector<32x32xf32> to vector<8x32xf32>
    %489 = arith.addf %487, %488 : vector<8x32xf32>
    %490 = vector.extract_strided_slice %486 {offsets = [16, 0], sizes = [8, 32], strides = [1, 1]} : vector<32x32xf32> to vector<8x32xf32>
    %491 = arith.addf %489, %490 : vector<8x32xf32>
    %492 = vector.extract_strided_slice %486 {offsets = [24, 0], sizes = [8, 32], strides = [1, 1]} : vector<32x32xf32> to vector<8x32xf32>
    %493 = arith.addf %491, %492 : vector<8x32xf32>
    %494 = vector.broadcast %445 : vector<1x32xf32> to vector<8x32xf32>
    %495 = arith.addf %493, %494 : vector<8x32xf32>
    %496 = arith.addf %443, %495 : vector<8x32xf32>
    %cst_181 = arith.constant dense<0.000000e+00> : vector<8xf32>
    %497 = vector.multi_reduction <add>, %496, %cst_181 [1] : vector<8x32xf32> to vector<8xf32>
    %498 = vector.shape_cast %497 : vector<8xf32> to vector<8x1xf32>
    %cst_182 = arith.constant 3.200000e+01 : f32
    %499 = vector.broadcast %cst_182 : f32 to vector<8x1xf32>
    %500 = arith.divf %498, %499 : vector<8x1xf32>
    %501 = vector.broadcast %500 : vector<8x1xf32> to vector<8x32xf32>
    %502 = arith.subf %496, %501 : vector<8x32xf32>
    %503 = arith.mulf %502, %502 : vector<8x32xf32>
    %cst_183 = arith.constant dense<0.000000e+00> : vector<8xf32>
    %504 = vector.multi_reduction <add>, %503, %cst_183 [1] : vector<8x32xf32> to vector<8xf32>
    %505 = vector.shape_cast %504 : vector<8xf32> to vector<8x1xf32>
    %cst_184 = arith.constant 3.200000e+01 : f32
    %506 = vector.broadcast %cst_184 : f32 to vector<8x1xf32>
    %507 = arith.divf %505, %506 : vector<8x1xf32>
    %cst_185 = arith.constant 9.99999974E-6 : f32
    %508 = vector.broadcast %cst_185 : f32 to vector<8x1xf32>
    %509 = arith.addf %507, %508 : vector<8x1xf32>
    %510 = math.rsqrt %509 : vector<8x1xf32>
    %511 = vector.broadcast %510 : vector<8x1xf32> to vector<8x32xf32>
    %512 = arith.mulf %502, %511 : vector<8x32xf32>
    %513 = vector.broadcast %446 : vector<1x32xf32> to vector<8x32xf32>
    %514 = arith.mulf %512, %513 : vector<8x32xf32>
    %515 = vector.broadcast %447 : vector<1x32xf32> to vector<8x32xf32>
    %516 = arith.addf %514, %515 : vector<8x32xf32>
    %517 = arith.truncf %516 : vector<8x32xf32> to vector<8x32xbf16>
    %c3_186 = arith.constant 3 : index
    %c0_187 = arith.constant 0 : index
    %c0_188 = arith.constant 0 : index
    %518 = vector.load %arg3[%c3_186, %c0_187, %c0_188] : memref<4x32x64xbf16, #tpu.memory_space<vmem>>, vector<1x32x64xbf16>
    %519 = vector.shape_cast %518 : vector<1x32x64xbf16> to vector<32x64xbf16>
    %cst_189 = arith.constant dense<0.000000e+00> : vector<8x64xf32>
    %520 = tpu.matmul %517, %519, %cst_189 {dimension_numbers = #tpu.dot_dimension_numbers<[1], [0], [0], [1], [0, 0, 1, 1], [], []>} : vector<8x32xbf16>, vector<32x64xbf16>, vector<8x64xf32> -> vector<8x64xf32>
    %521 = vector.broadcast %448 : vector<1x64xf32> to vector<8x64xf32>
    %522 = arith.addf %520, %521 : vector<8x64xf32>
    %cst_190 = arith.constant 0.000000e+00 : f32
    %523 = vector.broadcast %cst_190 : f32 to vector<8x64xf32>
    %524 = arith.maximumf %522, %523 : vector<8x64xf32>
    %525 = arith.truncf %524 : vector<8x64xf32> to vector<8x64xbf16>
    %c3_191 = arith.constant 3 : index
    %c0_192 = arith.constant 0 : index
    %c0_193 = arith.constant 0 : index
    %526 = vector.load %arg4[%c3_191, %c0_192, %c0_193] : memref<4x64x32xbf16, #tpu.memory_space<vmem>>, vector<1x64x32xbf16>
    %527 = vector.shape_cast %526 : vector<1x64x32xbf16> to vector<64x32xbf16>
    %cst_194 = arith.constant dense<0.000000e+00> : vector<8x32xf32>
    %528 = tpu.matmul %525, %527, %cst_194 {dimension_numbers = #tpu.dot_dimension_numbers<[1], [0], [0], [1], [0, 0, 1, 1], [], []>} : vector<8x64xbf16>, vector<64x32xbf16>, vector<8x32xf32> -> vector<8x32xf32>
    %529 = vector.broadcast %449 : vector<1x32xf32> to vector<8x32xf32>
    %530 = arith.addf %528, %529 : vector<8x32xf32>
    %531 = arith.addf %516, %530 : vector<8x32xf32>
    %cst_195 = arith.constant dense<0.000000e+00> : vector<8xf32>
    %532 = vector.multi_reduction <add>, %531, %cst_195 [1] : vector<8x32xf32> to vector<8xf32>
    %533 = vector.shape_cast %532 : vector<8xf32> to vector<8x1xf32>
    %cst_196 = arith.constant 3.200000e+01 : f32
    %534 = vector.broadcast %cst_196 : f32 to vector<8x1xf32>
    %535 = arith.divf %533, %534 : vector<8x1xf32>
    %536 = vector.broadcast %535 : vector<8x1xf32> to vector<8x32xf32>
    %537 = arith.subf %531, %536 : vector<8x32xf32>
    %538 = arith.mulf %537, %537 : vector<8x32xf32>
    %cst_197 = arith.constant dense<0.000000e+00> : vector<8xf32>
    %539 = vector.multi_reduction <add>, %538, %cst_197 [1] : vector<8x32xf32> to vector<8xf32>
    %540 = vector.shape_cast %539 : vector<8xf32> to vector<8x1xf32>
    %cst_198 = arith.constant 3.200000e+01 : f32
    %541 = vector.broadcast %cst_198 : f32 to vector<8x1xf32>
    %542 = arith.divf %540, %541 : vector<8x1xf32>
    %cst_199 = arith.constant 9.99999974E-6 : f32
    %543 = vector.broadcast %cst_199 : f32 to vector<8x1xf32>
    %544 = arith.addf %542, %543 : vector<8x1xf32>
    %545 = math.rsqrt %544 : vector<8x1xf32>
    %546 = vector.broadcast %545 : vector<8x1xf32> to vector<8x32xf32>
    %547 = arith.mulf %537, %546 : vector<8x32xf32>
    %548 = vector.broadcast %450 : vector<1x32xf32> to vector<8x32xf32>
    %549 = arith.mulf %547, %548 : vector<8x32xf32>
    %550 = vector.broadcast %451 : vector<1x32xf32> to vector<8x32xf32>
    %551 = arith.addf %549, %550 : vector<8x32xf32>
    %c32 = arith.constant 32 : index
    %c0_200 = arith.constant 0 : index
    %552 = vector.load %arg6[%c32, %c0_200] : memref<40x128xf32, #tpu.memory_space<vmem>>, vector<1x128xf32>
    %553 = arith.truncf %551 : vector<8x32xf32> to vector<8x32xbf16>
    %c0_201 = arith.constant 0 : index
    %c0_202 = arith.constant 0 : index
    %554 = vector.load %arg5[%c0_201, %c0_202] : memref<32x128xbf16, #tpu.memory_space<vmem>>, vector<32x128xbf16>
    %cst_203 = arith.constant dense<0.000000e+00> : vector<8x128xf32>
    %555 = tpu.matmul %553, %554, %cst_203 {dimension_numbers = #tpu.dot_dimension_numbers<[1], [0], [0], [1], [0, 0, 1, 1], [], []>} : vector<8x32xbf16>, vector<32x128xbf16>, vector<8x128xf32> -> vector<8x128xf32>
    %556 = vector.broadcast %552 : vector<1x128xf32> to vector<8x128xf32>
    %557 = arith.addf %555, %556 : vector<8x128xf32>
    %c0_204 = arith.constant 0 : index
    %c0_205 = arith.constant 0 : index
    %558 = vector.load %arg7[%c0_204, %c0_205] : memref<8x128xf32, #tpu.memory_space<vmem>>, vector<8x128xf32>
    tpu.vector_store %arg7[%c0_204, %c0_205], %557 {strides = array<i32>} : memref<8x128xf32, #tpu.memory_space<vmem>>, vector<8x128xf32>,
    return
  }
}

</mosaic_0001>

<llo_original>
// kernel: pool_expand_transformer_forward.1
$region0: #{pool_expand_transformer_forward.1}
  #allocation0 [shape = 'u32[]', space=smem, size = 0x4, offset = 0x4, fixed_abs, tag = 'smem constant byte address 0x4 - core index']
  #allocation1 [shape = 'u32[144,128]{1,0:T(1,128)}', space=vmem, size = 0x12000, scoped, tag = 'internal scratch']
  %s0 = inlined_call_operand.vmem [shape: f32[16,32], index: 0, kind: input, shape index: {}]
  %s1 = inlined_call_operand.vmem [shape: bf16[4,32,96], index: 1, kind: input, shape index: {}]
  %s2 = inlined_call_operand.vmem [shape: bf16[4,32,32], index: 2, kind: input, shape index: {}]
  %s3 = inlined_call_operand.vmem [shape: bf16[4,32,64], index: 3, kind: input, shape index: {}]
  %s4 = inlined_call_operand.vmem [shape: bf16[4,64,32], index: 4, kind: input, shape index: {}]
  %s5 = inlined_call_operand.vmem [shape: bf16[32,128], index: 5, kind: input, shape index: {}]
  %s6 = inlined_call_operand.vmem [shape: f32[40,128], index: 6, kind: input, shape index: {}]
  %s7 = inlined_call_operand.hbm [shape: f32[8,128], index: 7, kind: output, shape index: {}]
  %s8 = sld [smem:[#allocation0]]
  $region38: #{pool_expand_transformer_forward.1} parent=0
    _
  %s10 = ssub.s32 1, %s8
  %s11 = scalar_select 0, %s10, %s8
  $region1: #{pool_expand_transformer_forward.1} parent=0
    #allocation2 [shape = 'u8[4096]{0}', space=vmem, size = 0x1000, scoped, tag = 'output window, operand 0, single buffered']
    #allocation3 [shape = 's32[1]{0}', space=sflag, size = 0x4, scoped, tag = 'scoped memory for pool_expand_transformer_forward.1']
    %12 = vsyncpa [#allocation3], 0
    // Predicated region
    $region2: #{pool_expand_transformer_forward.1} parent=1 // pred_check
      _
    $region3: #{pool_expand_transformer_forward.1} parent=1 // pred_check_branch
      %14 = sbr.rel (0) target = $region5
    $region4: #{pool_expand_transformer_forward.1} parent=1 // pred_region
      _
    $region5: #{pool_expand_transformer_forward.1} parent=1 // pred_fallthru
      _
    // Predicated region
    $region6: #{pool_expand_transformer_forward.1} parent=1 // pred_check
      _
    $region7: #{pool_expand_transformer_forward.1} parent=1 // pred_check_branch
      %16 = sbr.rel (0) target = $region9
    $region8: #{pool_expand_transformer_forward.1} parent=1 // pred_region
      _
    $region9: #{pool_expand_transformer_forward.1} parent=1 // pred_fallthru
      _
    // Predicated region
    $region10: #{pool_expand_transformer_forward.1} parent=1 // pred_check
      _
    $region11: #{pool_expand_transformer_forward.1} parent=1 // pred_check_branch
      %18 = sbr.rel (0) target = $region13
    $region12: #{pool_expand_transformer_forward.1} parent=1 // pred_region
      _
    $region13: #{pool_expand_transformer_forward.1} parent=1 // pred_fallthru
      _
    // Predicated region
    $region14: #{pool_expand_transformer_forward.1} parent=1 // pred_check
      _
    $region15: #{pool_expand_transformer_forward.1} parent=1 // pred_check_branch
      %20 = sbr.rel (0) target = $region17
    $region16: #{pool_expand_transformer_forward.1} parent=1 // pred_region
      _
    $region17: #{pool_expand_transformer_forward.1} parent=1 // pred_fallthru
      _
    // Predicated region
    $region18: #{pool_expand_transformer_forward.1} parent=1 // pred_check
      _
    $region19: #{pool_expand_transformer_forward.1} parent=1 // pred_check_branch
      %22 = sbr.rel (0) target = $region21
    $region20: #{pool_expand_transformer_forward.1} parent=1 // pred_region
      _
    $region21: #{pool_expand_transformer_forward.1} parent=1 // pred_fallthru
      _
    // Predicated region
    $region22: #{pool_expand_transformer_forward.1} parent=1 // pred_check
      _
    $region23: #{pool_expand_transformer_forward.1} parent=1 // pred_check_branch
      %24 = sbr.rel (0) target = $region25
    $region24: #{pool_expand_transformer_forward.1} parent=1 // pred_region
      _
    $region25: #{pool_expand_transformer_forward.1} parent=1 // pred_fallthru
      _
    // Predicated region
    $region26: #{pool_expand_transformer_forward.1} parent=1 // pred_check
      _
    $region27: #{pool_expand_transformer_forward.1} parent=1 // pred_check_branch
      %26 = sbr.rel (0) target = $region29
    $region28: #{pool_expand_transformer_forward.1} parent=1 // pred_region
      _
    $region29: #{pool_expand_transformer_forward.1} parent=1 // pred_fallthru
      _
    %v28 = vld [vmem:[%s0] sm:$0xff]
    %v29 = vld [vmem:[%s0 + $0x8] sm:$0xff]
    %v30 = vlaneseq
    %v31 = vand.u32 %v30, 127
    %vm32 = vcmp.ge.s32.totalorder %v31, 0
    %vm33 = vcmp.lt.s32.totalorder %v31, 8
    %vm34 = vmand %vm32, %vm33
    %vm35 = vcmp.ge.s32.totalorder %v31, 8
    %vm36 = vcmp.lt.s32.totalorder %v31, 16
    %vm37 = vmand %vm35, %vm36
    %vm38 = vcmp.ge.s32.totalorder %v31, 16
    %vm39 = vcmp.lt.s32.totalorder %v31, 24
    %vm40 = vmand %vm38, %vm39
    %vm41 = vcmp.ge.s32.totalorder %v31, 24
    %vm42 = vcmp.lt.s32.totalorder %v31, 32
    %vm43 = vmand %vm41, %vm42
    %v44 = vlaneseq
    %v45 = vshrl.u32 %v44, 7
    %v46 = vadd.s32 %v45, 8
    %vm47 = vcmp.ge.s32.totalorder %v45, 0
    %vm48 = vcmp.ge.s32.totalorder %v46, 0
    %vm49 = vcmp.lt.s32.totalorder %v45, 8
    %vm50 = vcmp.lt.s32.totalorder %v46, 8
    %vm51 = vmand %vm47, %vm49
    %vm52 = vmand %vm48, %vm50
    %vm53 = vmand %vm51, %vm32
    %vm54 = vmand %vm52, %vm32
    %vm55 = vmand %vm53, %vm33
    %vm56 = vmand %vm54, %vm33
    %vm57 = vcmp.ge.s32.totalorder %v45, 8
    %vm58 = vcmp.ge.s32.totalorder %v46, 8
    %vm59 = vcmp.lt.s32.totalorder %v45, 16
    %vm60 = vcmp.lt.s32.totalorder %v46, 16
    %vm61 = vmand %vm57, %vm59
    %vm62 = vmand %vm58, %vm60
    %vm63 = vmand %vm61, %vm35
    %vm64 = vmand %vm62, %vm35
    %vm65 = vmand %vm63, %vm36
    %vm66 = vmand %vm64, %vm36
    %vm67 = vmor %vm55, %vm65
    %vm68 = vmor %vm56, %vm66
    %v69 = vsel %vm67, 0.0, -1e+09
    %v70 = vsel %vm68, 0.0, -1e+09
    %v71 = vld [vmem:[%s6] sm:$0x1]
    %v72 = vld [vmem:[%s6 + $0x1] sm:$0x1]
    %v73 = vld [vmem:[%s6 + $0x2] sm:$0x1]
    %v74 = vld [vmem:[%s6 + $0x3] sm:$0x1]
    %v75 = vld [vmem:[%s6 + $0x4] sm:$0x1]
    %v76 = vld [vmem:[%s6 + $0x5] sm:$0x1]
    %v77 = vld [vmem:[%s6 + $0x6] sm:$0x1]
    %v78 = vld [vmem:[%s6 + $0x7] sm:$0x1]
    %v79 = vpack.c.bf16 %v29, %v28
    %v80 = vld [vmem:[%s1] sm:$0xf]
    %v81 = vld [vmem:[%s1 + $0x4] sm:$0xf]
    %v82 = vld [vmem:[%s1 + $0x8] sm:$0xf]
    %v83 = vld [vmem:[%s1 + $0xc] sm:$0xf]
    %v84 = vlaneseq
    %v85 = vshrl.u32 %v84, 7
    %v86 = vsub.s32 0, %v85
    %v87 = vrot.slane %v71, %v86
    %v92 = vunpack.c.l.b16 %v80
    %v93 = vunpack.c.l.b16 %v81
    %v94 = vunpack.c.l.b16 %v82
    %v95 = vunpack.c.l.b16 %v83
    %v96 = vpack.c.b16 %v93, %v92
    %v97 = vpack.c.b16 %v95, %v94
    %vm100 = vcmask 261120
    %v102 = vsel %vm100, %v79, 0
    %104 = vmatprep.subr.bf16.mxu0 0
    %105 = vmatpush1.bf16.msra.mxu0 %v96
    %106 = vmatprep.subr.bf16.mxu0 0
    %107 = vmatpush1.bf16.msra.mxu0 %v97
    %108 = vmatprep.subr.bf16.mxu0 0
    %109 = vmatpush1.bf16.msra.mxu0 0
    %110 = vmatprep.subr.bf16.mxu0 0
    %111 = vmatpush1.bf16.msra.mxu0 0
    %112 = vmatprep.subr.bf16.mxu0 0
    %113 = vmatpush1.bf16.msra.mxu0 0
    %114 = vmatprep.subr.bf16.mxu0 0
    %115 = vmatpush1.bf16.msra.mxu0 0
    %116 = vmatprep.subr.bf16.mxu0 0
    %117 = vmatpush1.bf16.msra.mxu0 0
    %118 = vmatprep.subr.bf16.mxu0 0
    %119 = vmatpush1.bf16.msra.mxu0 0
    %120 = vmatprep.subr.bf16.mxu0 0
    %121 = vmatpush1.bf16.msra.mxu0 0
    %122 = vmatprep.subr.bf16.mxu0 0
    %123 = vmatpush1.bf16.msra.mxu0 0
    %124 = vmatprep.subr.bf16.mxu0 0
    %125 = vmatpush1.bf16.msra.mxu0 0
    %126 = vmatprep.subr.bf16.mxu0 0
    %127 = vmatpush1.bf16.msra.mxu0 0
    %128 = vmatprep.subr.bf16.mxu0 0
    %129 = vmatpush1.bf16.msra.mxu0 0
    %130 = vmatprep.subr.bf16.mxu0 0
    %131 = vmatpush1.bf16.msra.mxu0 0
    %132 = vmatprep.subr.bf16.mxu0 0
    %133 = vmatpush1.bf16.msra.mxu0 0
    %134 = vmatprep.subr.bf16.mxu0 0
    %135 = vmatpush1.bf16.msra.mxu0 0
    %136 = vmatprep.mubr.bf16.mxu0 0
    %137 = vmatmul.mubr.bf16.gmra.mrb[0].mxu0 %v102
    %v138 = vpop.f32.mrb[0].mxu0
    %v139 = vadd.f32 %v87, %v138
    %v140 = vpop.f32.mrb[0].mxu0
    %v141 = vpop.f32.mrb[0].mxu0
    %v142 = vadd.f32 %v87, %v141
    %v143 = vpop.f32.mrb[0].mxu0
    %144 = vdwg.mxu0
    %v145 = vpack.c.bf16 %v142, %v139
    %v146 = vsel %vm34, %v139, 0.0
    %v147 = vsel %vm34, %v142, 0.0
    %v148 = vsel %vm37, %v139, 0.0
    %v149 = vsel %vm37, %v142, 0.0
    %v150 = vsel %vm40, %v139, 0.0
    %v151 = vsel %vm40, %v142, 0.0
    %v152 = vsel %vm43, %v139, 0.0
    %v153 = vsel %vm43, %v142, 0.0
    %v154 = vpack.c.bf16 %v147, %v146
    %v155 = vpack.c.bf16 %v149, %v148
    %v156 = vpack.c.bf16 %v151, %v150
    %v157 = vpack.c.bf16 %v153, %v152
    %159 = vrot.lane.b32.xlu0 %v145, 96
    %v160 = vpop.permute.xlu0 %159
    %v162 = vsel %vm100, %v154, 0
    %v165 = vsel %vm100, %v155, 0
    %v168 = vsel %vm100, %v156, 0
    %v171 = vsel %vm100, %v157, 0
    %v174 = vsel %vm100, %v160, 0
    %176 = vmatprep.subr.bf16.mxu0 0
    %177 = vmatpush1.bf16.xpose.msra.mxu0 %v174
    %178 = vmatprep.subr.bf16.mxu0 0
    %179 = vmatpush1.bf16.xpose.msra.mxu0 0
    %180 = vmatprep.subr.bf16.mxu0 0
    %181 = vmatpush1.bf16.xpose.msra.mxu0 0
    %182 = vmatprep.subr.bf16.mxu0 0
    %183 = vmatpush1.bf16.xpose.msra.mxu0 0
    %184 = vmatprep.subr.bf16.mxu0 0
    %185 = vmatpush1.bf16.xpose.msra.mxu0 0
    %186 = vmatprep.subr.bf16.mxu0 0
    %187 = vmatpush1.bf16.xpose.msra.mxu0 0
    %188 = vmatprep.subr.bf16.mxu0 0
    %189 = vmatpush1.bf16.xpose.msra.mxu0 0
    %190 = vmatprep.subr.bf16.mxu0 0
    %191 = vmatpush1.bf16.xpose.msra.mxu0 0
    %192 = vmatprep.subr.bf16.mxu0 0
    %193 = vmatpush1.bf16.xpose.msra.mxu0 0
    %194 = vmatprep.subr.bf16.mxu0 0
    %195 = vmatpush1.bf16.xpose.msra.mxu0 0
    %196 = vmatprep.subr.bf16.mxu0 0
    %197 = vmatpush1.bf16.xpose.msra.mxu0 0
    %198 = vmatprep.subr.bf16.mxu0 0
    %199 = vmatpush1.bf16.xpose.msra.mxu0 0
    %200 = vmatprep.subr.bf16.mxu0 0
    %201 = vmatpush1.bf16.xpose.msra.mxu0 0
    %202 = vmatprep.subr.bf16.mxu0 0
    %203 = vmatpush1.bf16.xpose.msra.mxu0 0
    %204 = vmatprep.subr.bf16.mxu0 0
    %205 = vmatpush1.bf16.xpose.msra.mxu0 0
    %206 = vmatprep.subr.bf16.mxu0 0
    %207 = vmatpush1.bf16.xpose.msra.mxu0 0
    %208 = vmatprep.mubr.bf16.mxu0 0
    %209 = vmatmul.mubr.bf16.gmra.mrb[0].mxu0 %v162
    %v210 = vpop.f32.mrb[0].mxu0
    %v211 = vadd.f32 %v69, %v210
    %v212 = vpop.f32.mrb[0].mxu0
    %v213 = vpop.f32.mrb[0].mxu0
    %v214 = vadd.f32 %v70, %v213
    %v215 = vpop.f32.mrb[0].mxu0
    %216 = vmatprep.mubr.bf16.mxu0 0
    %217 = vmatmul.mubr.bf16.gmra.mrb[0].mxu0 %v165
    %v218 = vpop.f32.mrb[0].mxu0
    %v219 = vadd.f32 %v69, %v218
    %v220 = vpop.f32.mrb[0].mxu0
    %v221 = vpop.f32.mrb[0].mxu0
    %v222 = vadd.f32 %v70, %v221
    %v223 = vpop.f32.mrb[0].mxu0
    %224 = vmatprep.mubr.bf16.mxu0 0
    %225 = vmatmul.mubr.bf16.gmra.mrb[0].mxu0 %v168
    %v226 = vpop.f32.mrb[0].mxu0
    %v227 = vadd.f32 %v69, %v226
    %v228 = vpop.f32.mrb[0].mxu0
    %v229 = vpop.f32.mrb[0].mxu0
    %v230 = vadd.f32 %v70, %v229
    %v231 = vpop.f32.mrb[0].mxu0
    %232 = vmatprep.mubr.bf16.mxu0 0
    %233 = vmatmul.mubr.bf16.gmra.mrb[0].mxu0 %v171
    %v234 = vpop.f32.mrb[0].mxu0
    %v235 = vadd.f32 %v69, %v234
    %v236 = vpop.f32.mrb[0].mxu0
    %v237 = vpop.f32.mrb[0].mxu0
    %v238 = vadd.f32 %v70, %v237
    %v239 = vpop.f32.mrb[0].mxu0
    %240 = vdwg.mxu0
    %vm241 = vcmask 130048
    %v242 = vsel %vm241, %v211, -inf
    %243 = vmax.xlane.f32.xlu0 %v242
    %v244 = vpop.xlane.xlu0 %243
    %v245 = vsel %vm241, %v214, -inf
    %246 = vmax.xlane.f32.xlu0 %v245
    %v247 = vpop.xlane.xlu0 %246
    %v248 = vsel %vm241, %v219, -inf
    %249 = vmax.xlane.f32.xlu0 %v248
    %v250 = vpop.xlane.xlu0 %249
    %v251 = vsel %vm241, %v222, -inf
    %252 = vmax.xlane.f32.xlu0 %v251
    %v253 = vpop.xlane.xlu0 %252
    %v254 = vsel %vm241, %v227, -inf
    %255 = vmax.xlane.f32.xlu0 %v254
    %v256 = vpop.xlane.xlu0 %255
    %v257 = vsel %vm241, %v230, -inf
    %258 = vmax.xlane.f32.xlu0 %v257
    %v259 = vpop.xlane.xlu0 %258
    %v260 = vsel %vm241, %v235, -inf
    %261 = vmax.xlane.f32.xlu0 %v260
    %v262 = vpop.xlane.xlu0 %261
    %v263 = vsel %vm241, %v238, -inf
    %264 = vmax.xlane.f32.xlu0 %v263
    %v265 = vpop.xlane.xlu0 %264
    %v266 = vsub.f32 %v211, %v244
    %v267 = vsub.f32 %v214, %v247
    %v268 = vsub.f32 %v219, %v250
    %v269 = vsub.f32 %v222, %v253
    %v270 = vsub.f32 %v227, %v256
    %v271 = vsub.f32 %v230, %v259
    %v272 = vsub.f32 %v235, %v262
    %v273 = vsub.f32 %v238, %v265
    %v274 = vmul.f32 %v266, 1.442695
    %v275 = vpow.pop %v274
    %v276 = vmul.f32 %v267, 1.442695
    %v277 = vpow.pop %v276
    %v278 = vmul.f32 %v268, 1.442695
    %v279 = vpow.pop %v278
    %v280 = vmul.f32 %v269, 1.442695
    %v281 = vpow.pop %v280
    %v282 = vmul.f32 %v270, 1.442695
    %v283 = vpow.pop %v282
    %v284 = vmul.f32 %v271, 1.442695
    %v285 = vpow.pop %v284
    %v286 = vmul.f32 %v272, 1.442695
    %v287 = vpow.pop %v286
    %v288 = vmul.f32 %v273, 1.442695
    %v289 = vpow.pop %v288
    %v290 = vsel %vm241, %v275, 0.0
    %291 = vadd.xlane.f32.xlu0 %v290
    %v292 = vpop.xlane.xlu0 %291
    %v293 = vsel %vm241, %v277, 0.0
    %294 = vadd.xlane.f32.xlu0 %v293
    %v295 = vpop.xlane.xlu0 %294
    %v296 = vsel %vm241, %v279, 0.0
    %297 = vadd.xlane.f32.xlu0 %v296
    %v298 = vpop.xlane.xlu0 %297
    %v299 = vsel %vm241, %v281, 0.0
    %300 = vadd.xlane.f32.xlu0 %v299
    %v301 = vpop.xlane.xlu0 %300
    %v302 = vsel %vm241, %v283, 0.0
    %303 = vadd.xlane.f32.xlu0 %v302
    %v304 = vpop.xlane.xlu0 %303
    %v305 = vsel %vm241, %v285, 0.0
    %306 = vadd.xlane.f32.xlu0 %v305
    %v307 = vpop.xlane.xlu0 %306
    %v308 = vsel %vm241, %v287, 0.0
    %309 = vadd.xlane.f32.xlu0 %v308
    %v310 = vpop.xlane.xlu0 %309
    %v311 = vsel %vm241, %v289, 0.0
    %312 = vadd.xlane.f32.xlu0 %v311
    %v313 = vpop.xlane.xlu0 %312
    %v314 = vrcp.pop %v292
    %v315 = vrcp.pop %v295
    %v316 = vrcp.pop %v298
    %v317 = vrcp.pop %v301
    %v318 = vrcp.pop %v304
    %v319 = vrcp.pop %v307
    %v320 = vrcp.pop %v310
    %v321 = vrcp.pop %v313
    %v322 = vmul.f32 %v275, %v314
    %v323 = vmul.f32 %v277, %v315
    %v324 = vmul.f32 %v279, %v316
    %v325 = vmul.f32 %v281, %v317
    %v326 = vmul.f32 %v283, %v318
    %v327 = vmul.f32 %v285, %v319
    %v328 = vmul.f32 %v287, %v320
    %v329 = vmul.f32 %v289, %v321
    %v330 = vpack.c.bf16 %v323, %v322
    %v331 = vpack.c.bf16 %v325, %v324
    %v332 = vpack.c.bf16 %v327, %v326
    %v333 = vpack.c.bf16 %v329, %v328
    %334 = vrot.lane.b32.xlu0 %v145, 64
    %v335 = vpop.permute.xlu0 %334
    %v338 = vsel %vm241, %v330, 0
    %v341 = vsel %vm241, %v331, 0
    %v344 = vsel %vm241, %v332, 0
    %v347 = vsel %vm241, %v333, 0
    %349 = vmatprep.subr.bf16.mxu0 0
    %350 = vmatpush1.bf16.msra.mxu0 %v335
    %351 = vmatprep.subr.bf16.mxu0 0
    %352 = vmatpush1.bf16.msra.mxu0 0
    %353 = vmatprep.subr.bf16.mxu0 0
    %354 = vmatpush1.bf16.msra.mxu0 0
    %355 = vmatprep.subr.bf16.mxu0 0
    %356 = vmatpush1.bf16.msra.mxu0 0
    %357 = vmatprep.subr.bf16.mxu0 0
    %358 = vmatpush1.bf16.msra.mxu0 0
    %359 = vmatprep.subr.bf16.mxu0 0
    %360 = vmatpush1.bf16.msra.mxu0 0
    %361 = vmatprep.subr.bf16.mxu0 0
    %362 = vmatpush1.bf16.msra.mxu0 0
    %363 = vmatprep.subr.bf16.mxu0 0
    %364 = vmatpush1.bf16.msra.mxu0 0
    %365 = vmatprep.subr.bf16.mxu0 0
    %366 = vmatpush1.bf16.msra.mxu0 0
    %367 = vmatprep.subr.bf16.mxu0 0
    %368 = vmatpush1.bf16.msra.mxu0 0
    %369 = vmatprep.subr.bf16.mxu0 0
    %370 = vmatpush1.bf16.msra.mxu0 0
    %371 = vmatprep.subr.bf16.mxu0 0
    %372 = vmatpush1.bf16.msra.mxu0 0
    %373 = vmatprep.subr.bf16.mxu0 0
    %374 = vmatpush1.bf16.msra.mxu0 0
    %375 = vmatprep.subr.bf16.mxu0 0
    %376 = vmatpush1.bf16.msra.mxu0 0
    %377 = vmatprep.subr.bf16.mxu0 0
    %378 = vmatpush1.bf16.msra.mxu0 0
    %379 = vmatprep.subr.bf16.mxu0 0
    %380 = vmatpush1.bf16.msra.mxu0 0
    %381 = vmatprep.mubr.bf16.mxu0 0
    %382 = vmatmul.mubr.bf16.gmra.mrb[0].mxu0 %v338
    %v383 = vpop.f32.mrb[0].mxu0
    %v384 = vadd.f32 0.0, %v383
    %v385 = vpop.f32.mrb[0].mxu0
    %v386 = vpop.f32.mrb[0].mxu0
    %v387 = vadd.f32 0.0, %v386
    %v388 = vpop.f32.mrb[0].mxu0
    %389 = vmatprep.mubr.bf16.mxu0 0
    %390 = vmatmul.mubr.bf16.gmra.mrb[0].mxu0 %v341
    %v391 = vpop.f32.mrb[0].mxu0
    %v392 = vadd.f32 0.0, %v391
    %v393 = vpop.f32.mrb[0].mxu0
    %v394 = vpop.f32.mrb[0].mxu0
    %v395 = vadd.f32 0.0, %v394
    %v396 = vpop.f32.mrb[0].mxu0
    %397 = vmatprep.mubr.bf16.mxu0 0
    %398 = vmatmul.mubr.bf16.gmra.mrb[0].mxu0 %v344
    %v399 = vpop.f32.mrb[0].mxu0
    %v400 = vadd.f32 0.0, %v399
    %v401 = vpop.f32.mrb[0].mxu0
    %v402 = vpop.f32.mrb[0].mxu0
    %v403 = vadd.f32 0.0, %v402
    %v404 = vpop.f32.mrb[0].mxu0
    %405 = vmatprep.mubr.bf16.mxu0 0
    %406 = vmatmul.mubr.bf16.gmra.mrb[0].mxu0 %v347
    %v407 = vpop.f32.mrb[0].mxu0
    %v408 = vadd.f32 0.0, %v407
    %v409 = vpop.f32.mrb[0].mxu0
    %v410 = vpop.f32.mrb[0].mxu0
    %v411 = vadd.f32 0.0, %v410
    %v412 = vpop.f32.mrb[0].mxu0
    %413 = vdwg.mxu0
    %v414 = vsel %vm34, %v384, 0.0
    %v415 = vsel %vm34, %v387, 0.0
    %v416 = vsel %vm37, %v392, 0.0
    %v417 = vsel %vm37, %v395, 0.0
    %v418 = vsel %vm40, %v400, 0.0
    %v419 = vsel %vm40, %v403, 0.0
    %v420 = vsel %vm43, %v408, 0.0
    %v421 = vsel %vm43, %v411, 0.0
    %v422 = vpack.c.bf16 %v415, %v414
    %v423 = vpack.c.bf16 %v417, %v416
    %v424 = vpack.c.bf16 %v419, %v418
    %v425 = vpack.c.bf16 %v421, %v420
    %v426 = vld [vmem:[%s2] sm:$0xf]
    %v427 = vld [vmem:[%s2 + $0x4] sm:$0xf]
    %v428 = vld [vmem:[%s2 + $0x8] sm:$0xf]
    %v429 = vld [vmem:[%s2 + $0xc] sm:$0xf]
    %v434 = vunpack.c.l.b16 %v426
    %v435 = vunpack.c.l.b16 %v427
    %v436 = vunpack.c.l.b16 %v428
    %v437 = vunpack.c.l.b16 %v429
    %v438 = vpack.c.b16 %v435, %v434
    %v439 = vpack.c.b16 %v437, %v436
    %v443 = vsel %vm100, %v422, 0
    %v446 = vsel %vm100, %v423, 0
    %v449 = vsel %vm100, %v424, 0
    %v452 = vsel %vm100, %v425, 0
    %454 = vmatprep.subr.bf16.mxu0 0
    %455 = vmatpush1.bf16.msra.mxu0 %v438
    %456 = vmatprep.subr.bf16.mxu0 0
    %457 = vmatpush1.bf16.msra.mxu0 %v439
    %458 = vmatprep.subr.bf16.mxu0 0
    %459 = vmatpush1.bf16.msra.mxu0 0
    %460 = vmatprep.subr.bf16.mxu0 0
    %461 = vmatpush1.bf16.msra.mxu0 0
    %462 = vmatprep.subr.bf16.mxu0 0
    %463 = vmatpush1.bf16.msra.mxu0 0
    %464 = vmatprep.subr.bf16.mxu0 0
    %465 = vmatpush1.bf16.msra.mxu0 0
    %466 = vmatprep.subr.bf16.mxu0 0
    %467 = vmatpush1.bf16.msra.mxu0 0
    %468 = vmatprep.subr.bf16.mxu0 0
    %469 = vmatpush1.bf16.msra.mxu0 0
    %470 = vmatprep.subr.bf16.mxu0 0
    %471 = vmatpush1.bf16.msra.mxu0 0
    %472 = vmatprep.subr.bf16.mxu0 0
    %473 = vmatpush1.bf16.msra.mxu0 0
    %474 = vmatprep.subr.bf16.mxu0 0
    %475 = vmatpush1.bf16.msra.mxu0 0
    %476 = vmatprep.subr.bf16.mxu0 0
    %477 = vmatpush1.bf16.msra.mxu0 0
    %478 = vmatprep.subr.bf16.mxu0 0
    %479 = vmatpush1.bf16.msra.mxu0 0
    %480 = vmatprep.subr.bf16.mxu0 0
    %481 = vmatpush1.bf16.msra.mxu0 0
    %482 = vmatprep.subr.bf16.mxu0 0
    %483 = vmatpush1.bf16.msra.mxu0 0
    %484 = vmatprep.subr.bf16.mxu0 0
    %485 = vmatpush1.bf16.msra.mxu0 0
    %486 = vmatprep.mubr.bf16.mxu0 0
    %487 = vmatmul.mubr.bf16.gmra.mrb[0].mxu0 %v443
    %v488 = vpop.f32.mrb[0].mxu0
    %v489 = vadd.f32 0.0, %v488
    %v490 = vpop.f32.mrb[0].mxu0
    %v491 = vpop.f32.mrb[0].mxu0
    %v492 = vadd.f32 0.0, %v491
    %v493 = vpop.f32.mrb[0].mxu0
    %494 = vmatprep.mubr.bf16.mxu0 0
    %495 = vmatmul.mubr.bf16.gmra.mrb[0].mxu0 %v446
    %v496 = vpop.f32.mrb[0].mxu0
    %v497 = vadd.f32 0.0, %v496
    %v498 = vpop.f32.mrb[0].mxu0
    %v499 = vpop.f32.mrb[0].mxu0
    %v500 = vadd.f32 0.0, %v499
    %v501 = vpop.f32.mrb[0].mxu0
    %502 = vmatprep.mubr.bf16.mxu0 0
    %503 = vmatmul.mubr.bf16.gmra.mrb[0].mxu0 %v449
    %v504 = vpop.f32.mrb[0].mxu0
    %v505 = vadd.f32 0.0, %v504
    %v506 = vpop.f32.mrb[0].mxu0
    %v507 = vpop.f32.mrb[0].mxu0
    %v508 = vadd.f32 0.0, %v507
    %v509 = vpop.f32.mrb[0].mxu0
    %510 = vmatprep.mubr.bf16.mxu0 0
    %511 = vmatmul.mubr.bf16.gmra.mrb[0].mxu0 %v452
    %v512 = vpop.f32.mrb[0].mxu0
    %v513 = vadd.f32 0.0, %v512
    %v514 = vpop.f32.mrb[0].mxu0
    %v515 = vpop.f32.mrb[0].mxu0
    %v516 = vadd.f32 0.0, %v515
    %v517 = vpop.f32.mrb[0].mxu0
    %518 = vdwg.mxu0
    %v519 = vadd.f32 %v489, %v497
    %v520 = vadd.f32 %v492, %v500
    %v521 = vadd.f32 %v519, %v505
    %v522 = vadd.f32 %v520, %v508
    %v523 = vadd.f32 %v521, %v513
    %v524 = vadd.f32 %v522, %v516
    %v525 = vlaneseq
    %v526 = vshrl.u32 %v525, 7
    %v527 = vsub.s32 0, %v526
    %v528 = vrot.slane %v72, %v527
    %v529 = vadd.f32 %v523, %v528
    %v530 = vadd.f32 %v524, %v528
    %v531 = vadd.f32 %v28, %v529
    %v532 = vadd.f32 %v29, %v530
    %v533 = vsel %vm100, %v531, 0.0
    %534 = vadd.xlane.f32.xlu0 %v533
    %v535 = vpop.xlane.xlu0 %534
    %v536 = vsel %vm100, %v532, 0.0
    %537 = vadd.xlane.f32.xlu0 %v536
    %v538 = vpop.xlane.xlu0 %537
    %v539 = vrcp.pop 32.0
    %v540 = vmul.f32 %v535, %v539
    %v541 = vmul.f32 %v538, %v539
    %v542 = vsub.f32 %v531, %v540
    %v543 = vsub.f32 %v532, %v541
    %v544 = vmul.f32 %v542, %v542
    %v545 = vmul.f32 %v543, %v543
    %v546 = vsel %vm100, %v544, 0.0
    %547 = vadd.xlane.f32.xlu0 %v546
    %v548 = vpop.xlane.xlu0 %547
    %v549 = vsel %vm100, %v545, 0.0
    %550 = vadd.xlane.f32.xlu0 %v549
    %v551 = vpop.xlane.xlu0 %550
    %v552 = vmul.f32 %v548, %v539
    %v553 = vmul.f32 %v551, %v539
    %v554 = vadd.f32 %v552, 1e-05
    %v555 = vadd.f32 %v553, 1e-05
    %v556 = vrsqrt.pop %v554
    %v557 = vrsqrt.pop %v555
    %v558 = vmul.f32 %v542, %v556
    %v559 = vmul.f32 %v543, %v557
    %v560 = vlaneseq
    %v561 = vshrl.u32 %v560, 7
    %v562 = vsub.s32 0, %v561
    %v563 = vrot.slane %v73, %v562
    %v564 = vmul.f32 %v558, %v563
    %v565 = vmul.f32 %v559, %v563
    %v566 = vlaneseq
    %v567 = vshrl.u32 %v566, 7
    %v568 = vsub.s32 0, %v567
    %v569 = vrot.slane %v74, %v568
    %v570 = vadd.f32 %v564, %v569
    %v571 = vadd.f32 %v565, %v569
    %v572 = vpack.c.bf16 %v571, %v570
    %v573 = vld [vmem:[%s3] sm:$0xf]
    %v574 = vld [vmem:[%s3 + $0x4] sm:$0xf]
    %v575 = vld [vmem:[%s3 + $0x8] sm:$0xf]
    %v576 = vld [vmem:[%s3 + $0xc] sm:$0xf]
    %v577 = vlaneseq
    %v578 = vshrl.u32 %v577, 7
    %v579 = vsub.s32 0, %v578
    %v580 = vrot.slane %v75, %v579
    %v585 = vunpack.c.l.b16 %v573
    %v586 = vunpack.c.l.b16 %v574
    %v587 = vunpack.c.l.b16 %v575
    %v588 = vunpack.c.l.b16 %v576
    %v589 = vpack.c.b16 %v586, %v585
    %v590 = vpack.c.b16 %v588, %v587
    %v594 = vsel %vm100, %v572, 0
    %596 = vmatprep.subr.bf16.mxu0 0
    %597 = vmatpush1.bf16.msra.mxu0 %v589
    %598 = vmatprep.subr.bf16.mxu0 0
    %599 = vmatpush1.bf16.msra.mxu0 %v590
    %600 = vmatprep.subr.bf16.mxu0 0
    %601 = vmatpush1.bf16.msra.mxu0 0
    %602 = vmatprep.subr.bf16.mxu0 0
    %603 = vmatpush1.bf16.msra.mxu0 0
    %604 = vmatprep.subr.bf16.mxu0 0
    %605 = vmatpush1.bf16.msra.mxu0 0
    %606 = vmatprep.subr.bf16.mxu0 0
    %607 = vmatpush1.bf16.msra.mxu0 0
    %608 = vmatprep.subr.bf16.mxu0 0
    %609 = vmatpush1.bf16.msra.mxu0 0
    %610 = vmatprep.subr.bf16.mxu0 0
    %611 = vmatpush1.bf16.msra.mxu0 0
    %612 = vmatprep.subr.bf16.mxu0 0
    %613 = vmatpush1.bf16.msra.mxu0 0
    %614 = vmatprep.subr.bf16.mxu0 0
    %615 = vmatpush1.bf16.msra.mxu0 0
    %616 = vmatprep.subr.bf16.mxu0 0
    %617 = vmatpush1.bf16.msra.mxu0 0
    %618 = vmatprep.subr.bf16.mxu0 0
    %619 = vmatpush1.bf16.msra.mxu0 0
    %620 = vmatprep.subr.bf16.mxu0 0
    %621 = vmatpush1.bf16.msra.mxu0 0
    %622 = vmatprep.subr.bf16.mxu0 0
    %623 = vmatpush1.bf16.msra.mxu0 0
    %624 = vmatprep.subr.bf16.mxu0 0
    %625 = vmatpush1.bf16.msra.mxu0 0
    %626 = vmatprep.subr.bf16.mxu0 0
    %627 = vmatpush1.bf16.msra.mxu0 0
    %628 = vmatprep.mubr.bf16.mxu0 0
    %629 = vmatmul.mubr.bf16.gmra.mrb[0].mxu0 %v594
    %v630 = vpop.f32.mrb[0].mxu0
    %v631 = vadd.f32 %v580, %v630
    %v632 = vpop.f32.mrb[0].mxu0
    %v633 = vpop.f32.mrb[0].mxu0
    %v634 = vadd.f32 %v580, %v633
    %v635 = vpop.f32.mrb[0].mxu0
    %636 = vdwg.mxu0
    %v637 = vmax.f32 %v631, 0.0
    %v638 = vmax.f32 %v634, 0.0
    %v639 = vpack.c.bf16 %v638, %v637
    %v640 = vld [vmem:[%s4] sm:$0xf]
    %v641 = vld [vmem:[%s4 + $0x4] sm:$0xf]
    %v642 = vld [vmem:[%s4 + $0x8] sm:$0xf]
    %v643 = vld [vmem:[%s4 + $0xc] sm:$0xf]
    %v644 = vld [vmem:[%s4 + $0x10] sm:$0xf]
    %v645 = vld [vmem:[%s4 + $0x14] sm:$0xf]
    %v646 = vld [vmem:[%s4 + $0x18] sm:$0xf]
    %v647 = vld [vmem:[%s4 + $0x1c] sm:$0xf]
    %v648 = vlaneseq
    %v649 = vshrl.u32 %v648, 7
    %v650 = vsub.s32 0, %v649
    %v651 = vrot.slane %v76, %v650
    %v660 = vunpack.c.l.b16 %v640
    %v661 = vunpack.c.l.b16 %v641
    %v662 = vunpack.c.l.b16 %v642
    %v663 = vunpack.c.l.b16 %v643
    %v664 = vunpack.c.l.b16 %v644
    %v665 = vunpack.c.l.b16 %v645
    %v666 = vunpack.c.l.b16 %v646
    %v667 = vunpack.c.l.b16 %v647
    %v668 = vpack.c.b16 %v661, %v660
    %v669 = vpack.c.b16 %v663, %v662
    %v670 = vpack.c.b16 %v665, %v664
    %v671 = vpack.c.b16 %v667, %v666
    %vm676 = vcmask 523264
    %v678 = vsel %vm676, %v639, 0
    %680 = vmatprep.subr.bf16.mxu0 0
    %681 = vmatpush1.bf16.msra.mxu0 %v668
    %682 = vmatprep.subr.bf16.mxu0 0
    %683 = vmatpush1.bf16.msra.mxu0 %v669
    %684 = vmatprep.subr.bf16.mxu0 0
    %685 = vmatpush1.bf16.msra.mxu0 %v670
    %686 = vmatprep.subr.bf16.mxu0 0
    %687 = vmatpush1.bf16.msra.mxu0 %v671
    %688 = vmatprep.subr.bf16.mxu0 0
    %689 = vmatpush1.bf16.msra.mxu0 0
    %690 = vmatprep.subr.bf16.mxu0 0
    %691 = vmatpush1.bf16.msra.mxu0 0
    %692 = vmatprep.subr.bf16.mxu0 0
    %693 = vmatpush1.bf16.msra.mxu0 0
    %694 = vmatprep.subr.bf16.mxu0 0
    %695 = vmatpush1.bf16.msra.mxu0 0
    %696 = vmatprep.subr.bf16.mxu0 0
    %697 = vmatpush1.bf16.msra.mxu0 0
    %698 = vmatprep.subr.bf16.mxu0 0
    %699 = vmatpush1.bf16.msra.mxu0 0
    %700 = vmatprep.subr.bf16.mxu0 0
    %701 = vmatpush1.bf16.msra.mxu0 0
    %702 = vmatprep.subr.bf16.mxu0 0
    %703 = vmatpush1.bf16.msra.mxu0 0
    %704 = vmatprep.subr.bf16.mxu0 0
    %705 = vmatpush1.bf16.msra.mxu0 0
    %706 = vmatprep.subr.bf16.mxu0 0
    %707 = vmatpush1.bf16.msra.mxu0 0
    %708 = vmatprep.subr.bf16.mxu0 0
    %709 = vmatpush1.bf16.msra.mxu0 0
    %710 = vmatprep.subr.bf16.mxu0 0
    %711 = vmatpush1.bf16.msra.mxu0 0
    %712 = vmatprep.mubr.bf16.mxu0 0
    %713 = vmatmul.mubr.bf16.gmra.mrb[0].mxu0 %v678
    %v714 = vpop.f32.mrb[0].mxu0
    %v715 = vadd.f32 %v651, %v714
    %v716 = vpop.f32.mrb[0].mxu0
    %v717 = vpop.f32.mrb[0].mxu0
    %v718 = vadd.f32 %v651, %v717
    %v719 = vpop.f32.mrb[0].mxu0
    %720 = vdwg.mxu0
    %v721 = vadd.f32 %v570, %v715
    %v722 = vadd.f32 %v571, %v718
    %v723 = vsel %vm100, %v721, 0.0
    %724 = vadd.xlane.f32.xlu0 %v723
    %v725 = vpop.xlane.xlu0 %724
    %v726 = vsel %vm100, %v722, 0.0
    %727 = vadd.xlane.f32.xlu0 %v726
    %v728 = vpop.xlane.xlu0 %727
    %v729 = vmul.f32 %v725, %v539
    %v730 = vmul.f32 %v728, %v539
    %v731 = vsub.f32 %v721, %v729
    %v732 = vsub.f32 %v722, %v730
    %v733 = vmul.f32 %v731, %v731
    %v734 = vmul.f32 %v732, %v732
    %v735 = vsel %vm100, %v733, 0.0
    %736 = vadd.xlane.f32.xlu0 %v735
    %v737 = vpop.xlane.xlu0 %736
    %v738 = vsel %vm100, %v734, 0.0
    %739 = vadd.xlane.f32.xlu0 %v738
    %v740 = vpop.xlane.xlu0 %739
    %v741 = vmul.f32 %v737, %v539
    %v742 = vmul.f32 %v740, %v539
    %v743 = vadd.f32 %v741, 1e-05
    %v744 = vadd.f32 %v742, 1e-05
    %v745 = vrsqrt.pop %v743
    %v746 = vrsqrt.pop %v744
    %v747 = vmul.f32 %v731, %v745
    %v748 = vmul.f32 %v732, %v746
    %v749 = vlaneseq
    %v750 = vshrl.u32 %v749, 7
    %v751 = vsub.s32 0, %v750
    %v752 = vrot.slane %v77, %v751
    %v753 = vmul.f32 %v747, %v752
    %v754 = vmul.f32 %v748, %v752
    %v755 = vlaneseq
    %v756 = vshrl.u32 %v755, 7
    %v757 = vsub.s32 0, %v756
    %v758 = vrot.slane %v78, %v757
    %v759 = vadd.f32 %v753, %v758
    %v760 = vadd.f32 %v754, %v758
    %v761 = vld [vmem:[%s6 + $0x8] sm:$0x1]
    %v762 = vld [vmem:[%s6 + $0x9] sm:$0x1]
    %v763 = vld [vmem:[%s6 + $0xa] sm:$0x1]
    %v764 = vld [vmem:[%s6 + $0xb] sm:$0x1]
    %v765 = vld [vmem:[%s6 + $0xc] sm:$0x1]
    %v766 = vld [vmem:[%s6 + $0xd] sm:$0x1]
    %v767 = vld [vmem:[%s6 + $0xe] sm:$0x1]
    %v768 = vld [vmem:[%s6 + $0xf] sm:$0x1]
    %v769 = vpack.c.bf16 %v760, %v759
    %s770 = scalar_lea.vmem %s1, 16
    %v771 = vld [vmem:[%s770] sm:$0xf]
    %v772 = vld [vmem:[%s770 + $0x4] sm:$0xf]
    %v773 = vld [vmem:[%s770 + $0x8] sm:$0xf]
    %v774 = vld [vmem:[%s770 + $0xc] sm:$0xf]
    %v775 = vlaneseq
    %v776 = vshrl.u32 %v775, 7
    %v777 = vsub.s32 0, %v776
    %v778 = vrot.slane %v761, %v777
    %v783 = vunpack.c.l.b16 %v771
    %v784 = vunpack.c.l.b16 %v772
    %v785 = vunpack.c.l.b16 %v773
    %v786 = vunpack.c.l.b16 %v774
    %v787 = vpack.c.b16 %v784, %v783
    %v788 = vpack.c.b16 %v786, %v785
    %v792 = vsel %vm100, %v769, 0
    %794 = vmatprep.subr.bf16.mxu0 0
    %795 = vmatpush1.bf16.msra.mxu0 %v787
    %796 = vmatprep.subr.bf16.mxu0 0
    %797 = vmatpush1.bf16.msra.mxu0 %v788
    %798 = vmatprep.subr.bf16.mxu0 0
    %799 = vmatpush1.bf16.msra.mxu0 0
    %800 = vmatprep.subr.bf16.mxu0 0
    %801 = vmatpush1.bf16.msra.mxu0 0
    %802 = vmatprep.subr.bf16.mxu0 0
    %803 = vmatpush1.bf16.msra.mxu0 0
    %804 = vmatprep.subr.bf16.mxu0 0
    %805 = vmatpush1.bf16.msra.mxu0 0
    %806 = vmatprep.subr.bf16.mxu0 0
    %807 = vmatpush1.bf16.msra.mxu0 0
    %808 = vmatprep.subr.bf16.mxu0 0
    %809 = vmatpush1.bf16.msra.mxu0 0
    %810 = vmatprep.subr.bf16.mxu0 0
    %811 = vmatpush1.bf16.msra.mxu0 0
    %812 = vmatprep.subr.bf16.mxu0 0
    %813 = vmatpush1.bf16.msra.mxu0 0
    %814 = vmatprep.subr.bf16.mxu0 0
    %815 = vmatpush1.bf16.msra.mxu0 0
    %816 = vmatprep.subr.bf16.mxu0 0
    %817 = vmatpush1.bf16.msra.mxu0 0
    %818 = vmatprep.subr.bf16.mxu0 0
    %819 = vmatpush1.bf16.msra.mxu0 0
    %820 = vmatprep.subr.bf16.mxu0 0
    %821 = vmatpush1.bf16.msra.mxu0 0
    %822 = vmatprep.subr.bf16.mxu0 0
    %823 = vmatpush1.bf16.msra.mxu0 0
    %824 = vmatprep.subr.bf16.mxu0 0
    %825 = vmatpush1.bf16.msra.mxu0 0
    %826 = vmatprep.mubr.bf16.mxu0 0
    %827 = vmatmul.mubr.bf16.gmra.mrb[0].mxu0 %v792
    %v828 = vpop.f32.mrb[0].mxu0
    %v829 = vadd.f32 %v778, %v828
    %v830 = vpop.f32.mrb[0].mxu0
    %v831 = vpop.f32.mrb[0].mxu0
    %v832 = vadd.f32 %v778, %v831
    %v833 = vpop.f32.mrb[0].mxu0
    %834 = vdwg.mxu0
    %v835 = vpack.c.bf16 %v832, %v829
    %v836 = vsel %vm34, %v829, 0.0
    %v837 = vsel %vm34, %v832, 0.0
    %v838 = vsel %vm37, %v829, 0.0
    %v839 = vsel %vm37, %v832, 0.0
    %v840 = vsel %vm40, %v829, 0.0
    %v841 = vsel %vm40, %v832, 0.0
    %v842 = vsel %vm43, %v829, 0.0
    %v843 = vsel %vm43, %v832, 0.0
    %v844 = vpack.c.bf16 %v837, %v836
    %v845 = vpack.c.bf16 %v839, %v838
    %v846 = vpack.c.bf16 %v841, %v840
    %v847 = vpack.c.bf16 %v843, %v842
    %849 = vrot.lane.b32.xlu0 %v835, 96
    %v850 = vpop.permute.xlu0 %849
    %v852 = vsel %vm100, %v844, 0
    %v855 = vsel %vm100, %v845, 0
    %v858 = vsel %vm100, %v846, 0
    %v861 = vsel %vm100, %v847, 0
    %v864 = vsel %vm100, %v850, 0
    %866 = vmatprep.subr.bf16.mxu0 0
    %867 = vmatpush1.bf16.xpose.msra.mxu0 %v864
    %868 = vmatprep.subr.bf16.mxu0 0
    %869 = vmatpush1.bf16.xpose.msra.mxu0 0
    %870 = vmatprep.subr.bf16.mxu0 0
    %871 = vmatpush1.bf16.xpose.msra.mxu0 0
    %872 = vmatprep.subr.bf16.mxu0 0
    %873 = vmatpush1.bf16.xpose.msra.mxu0 0
    %874 = vmatprep.subr.bf16.mxu0 0
    %875 = vmatpush1.bf16.xpose.msra.mxu0 0
    %876 = vmatprep.subr.bf16.mxu0 0
    %877 = vmatpush1.bf16.xpose.msra.mxu0 0
    %878 = vmatprep.subr.bf16.mxu0 0
    %879 = vmatpush1.bf16.xpose.msra.mxu0 0
    %880 = vmatprep.subr.bf16.mxu0 0
    %881 = vmatpush1.bf16.xpose.msra.mxu0 0
    %882 = vmatprep.subr.bf16.mxu0 0
    %883 = vmatpush1.bf16.xpose.msra.mxu0 0
    %884 = vmatprep.subr.bf16.mxu0 0
    %885 = vmatpush1.bf16.xpose.msra.mxu0 0
    %886 = vmatprep.subr.bf16.mxu0 0
    %887 = vmatpush1.bf16.xpose.msra.mxu0 0
    %888 = vmatprep.subr.bf16.mxu0 0
    %889 = vmatpush1.bf16.xpose.msra.mxu0 0
    %890 = vmatprep.subr.bf16.mxu0 0
    %891 = vmatpush1.bf16.xpose.msra.mxu0 0
    %892 = vmatprep.subr.bf16.mxu0 0
    %893 = vmatpush1.bf16.xpose.msra.mxu0 0
    %894 = vmatprep.subr.bf16.mxu0 0
    %895 = vmatpush1.bf16.xpose.msra.mxu0 0
    %896 = vmatprep.subr.bf16.mxu0 0
    %897 = vmatpush1.bf16.xpose.msra.mxu0 0
    %898 = vmatprep.mubr.bf16.mxu0 0
    %899 = vmatmul.mubr.bf16.gmra.mrb[0].mxu0 %v852
    %v900 = vpop.f32.mrb[0].mxu0
    %v901 = vadd.f32 %v69, %v900
    %v902 = vpop.f32.mrb[0].mxu0
    %v903 = vpop.f32.mrb[0].mxu0
    %v904 = vadd.f32 %v70, %v903
    %v905 = vpop.f32.mrb[0].mxu0
    %906 = vmatprep.mubr.bf16.mxu0 0
    %907 = vmatmul.mubr.bf16.gmra.mrb[0].mxu0 %v855
    %v908 = vpop.f32.mrb[0].mxu0
    %v909 = vadd.f32 %v69, %v908
    %v910 = vpop.f32.mrb[0].mxu0
    %v911 = vpop.f32.mrb[0].mxu0
    %v912 = vadd.f32 %v70, %v911
    %v913 = vpop.f32.mrb[0].mxu0
    %914 = vmatprep.mubr.bf16.mxu0 0
    %915 = vmatmul.mubr.bf16.gmra.mrb[0].mxu0 %v858
    %v916 = vpop.f32.mrb[0].mxu0
    %v917 = vadd.f32 %v69, %v916
    %v918 = vpop.f32.mrb[0].mxu0
    %v919 = vpop.f32.mrb[0].mxu0
    %v920 = vadd.f32 %v70, %v919
    %v921 = vpop.f32.mrb[0].mxu0
    %922 = vmatprep.mubr.bf16.mxu0 0
    %923 = vmatmul.mubr.bf16.gmra.mrb[0].mxu0 %v861
    %v924 = vpop.f32.mrb[0].mxu0
    %v925 = vadd.f32 %v69, %v924
    %v926 = vpop.f32.mrb[0].mxu0
    %v927 = vpop.f32.mrb[0].mxu0
    %v928 = vadd.f32 %v70, %v927
    %v929 = vpop.f32.mrb[0].mxu0
    %930 = vdwg.mxu0
    %v931 = vsel %vm241, %v901, -inf
    %932 = vmax.xlane.f32.xlu0 %v931
    %v933 = vpop.xlane.xlu0 %932
    %v934 = vsel %vm241, %v904, -inf
    %935 = vmax.xlane.f32.xlu0 %v934
    %v936 = vpop.xlane.xlu0 %935
    %v937 = vsel %vm241, %v909, -inf
    %938 = vmax.xlane.f32.xlu0 %v937
    %v939 = vpop.xlane.xlu0 %938
    %v940 = vsel %vm241, %v912, -inf
    %941 = vmax.xlane.f32.xlu0 %v940
    %v942 = vpop.xlane.xlu0 %941
    %v943 = vsel %vm241, %v917, -inf
    %944 = vmax.xlane.f32.xlu0 %v943
    %v945 = vpop.xlane.xlu0 %944
    %v946 = vsel %vm241, %v920, -inf
    %947 = vmax.xlane.f32.xlu0 %v946
    %v948 = vpop.xlane.xlu0 %947
    %v949 = vsel %vm241, %v925, -inf
    %950 = vmax.xlane.f32.xlu0 %v949
    %v951 = vpop.xlane.xlu0 %950
    %v952 = vsel %vm241, %v928, -inf
    %953 = vmax.xlane.f32.xlu0 %v952
    %v954 = vpop.xlane.xlu0 %953
    %v955 = vsub.f32 %v901, %v933
    %v956 = vsub.f32 %v904, %v936
    %v957 = vsub.f32 %v909, %v939
    %v958 = vsub.f32 %v912, %v942
    %v959 = vsub.f32 %v917, %v945
    %v960 = vsub.f32 %v920, %v948
    %v961 = vsub.f32 %v925, %v951
    %v962 = vsub.f32 %v928, %v954
    %v963 = vmul.f32 %v955, 1.442695
    %v964 = vpow.pop %v963
    %v965 = vmul.f32 %v956, 1.442695
    %v966 = vpow.pop %v965
    %v967 = vmul.f32 %v957, 1.442695
    %v968 = vpow.pop %v967
    %v969 = vmul.f32 %v958, 1.442695
    %v970 = vpow.pop %v969
    %v971 = vmul.f32 %v959, 1.442695
    %v972 = vpow.pop %v971
    %v973 = vmul.f32 %v960, 1.442695
    %v974 = vpow.pop %v973
    %v975 = vmul.f32 %v961, 1.442695
    %v976 = vpow.pop %v975
    %v977 = vmul.f32 %v962, 1.442695
    %v978 = vpow.pop %v977
    %v979 = vsel %vm241, %v964, 0.0
    %980 = vadd.xlane.f32.xlu0 %v979
    %v981 = vpop.xlane.xlu0 %980
    %v982 = vsel %vm241, %v966, 0.0
    %983 = vadd.xlane.f32.xlu0 %v982
    %v984 = vpop.xlane.xlu0 %983
    %v985 = vsel %vm241, %v968, 0.0
    %986 = vadd.xlane.f32.xlu0 %v985
    %v987 = vpop.xlane.xlu0 %986
    %v988 = vsel %vm241, %v970, 0.0
    %989 = vadd.xlane.f32.xlu0 %v988
    %v990 = vpop.xlane.xlu0 %989
    %v991 = vsel %vm241, %v972, 0.0
    %992 = vadd.xlane.f32.xlu0 %v991
    %v993 = vpop.xlane.xlu0 %992
    %v994 = vsel %vm241, %v974, 0.0
    %995 = vadd.xlane.f32.xlu0 %v994
    %v996 = vpop.xlane.xlu0 %995
    %v997 = vsel %vm241, %v976, 0.0
    %998 = vadd.xlane.f32.xlu0 %v997
    %v999 = vpop.xlane.xlu0 %998
    %v1000 = vsel %vm241, %v978, 0.0
    %1001 = vadd.xlane.f32.xlu0 %v1000
    %v1002 = vpop.xlane.xlu0 %1001
    %v1003 = vrcp.pop %v981
    %v1004 = vrcp.pop %v984
    %v1005 = vrcp.pop %v987
    %v1006 = vrcp.pop %v990
    %v1007 = vrcp.pop %v993
    %v1008 = vrcp.pop %v996
    %v1009 = vrcp.pop %v999
    %v1010 = vrcp.pop %v1002
    %v1011 = vmul.f32 %v964, %v1003
    %v1012 = vmul.f32 %v966, %v1004
    %v1013 = vmul.f32 %v968, %v1005
    %v1014 = vmul.f32 %v970, %v1006
    %v1015 = vmul.f32 %v972, %v1007
    %v1016 = vmul.f32 %v974, %v1008
    %v1017 = vmul.f32 %v976, %v1009
    %v1018 = vmul.f32 %v978, %v1010
    %v1019 = vpack.c.bf16 %v1012, %v1011
    %v1020 = vpack.c.bf16 %v1014, %v1013
    %v1021 = vpack.c.bf16 %v1016, %v1015
    %v1022 = vpack.c.bf16 %v1018, %v1017
    %1023 = vrot.lane.b32.xlu0 %v835, 64
    %v1024 = vpop.permute.xlu0 %1023
    %v1027 = vsel %vm241, %v1019, 0
    %v1030 = vsel %vm241, %v1020, 0
    %v1033 = vsel %vm241, %v1021, 0
    %v1036 = vsel %vm241, %v1022, 0
    %1038 = vmatprep.subr.bf16.mxu0 0
    %1039 = vmatpush1.bf16.msra.mxu0 %v1024
    %1040 = vmatprep.subr.bf16.mxu0 0
    %1041 = vmatpush1.bf16.msra.mxu0 0
    %1042 = vmatprep.subr.bf16.mxu0 0
    %1043 = vmatpush1.bf16.msra.mxu0 0
    %1044 = vmatprep.subr.bf16.mxu0 0
    %1045 = vmatpush1.bf16.msra.mxu0 0
    %1046 = vmatprep.subr.bf16.mxu0 0
    %1047 = vmatpush1.bf16.msra.mxu0 0
    %1048 = vmatprep.subr.bf16.mxu0 0
    %1049 = vmatpush1.bf16.msra.mxu0 0
    %1050 = vmatprep.subr.bf16.mxu0 0
    %1051 = vmatpush1.bf16.msra.mxu0 0
    %1052 = vmatprep.subr.bf16.mxu0 0
    %1053 = vmatpush1.bf16.msra.mxu0 0
    %1054 = vmatprep.subr.bf16.mxu0 0
    %1055 = vmatpush1.bf16.msra.mxu0 0
    %1056 = vmatprep.subr.bf16.mxu0 0
    %1057 = vmatpush1.bf16.msra.mxu0 0
    %1058 = vmatprep.subr.bf16.mxu0 0
    %1059 = vmatpush1.bf16.msra.mxu0 0
    %1060 = vmatprep.subr.bf16.mxu0 0
    %1061 = vmatpush1.bf16.msra.mxu0 0
    %1062 = vmatprep.subr.bf16.mxu0 0
    %1063 = vmatpush1.bf16.msra.mxu0 0
    %1064 = vmatprep.subr.bf16.mxu0 0
    %1065 = vmatpush1.bf16.msra.mxu0 0
    %1066 = vmatprep.subr.bf16.mxu0 0
    %1067 = vmatpush1.bf16.msra.mxu0 0
    %1068 = vmatprep.subr.bf16.mxu0 0
    %1069 = vmatpush1.bf16.msra.mxu0 0
    %1070 = vmatprep.mubr.bf16.mxu0 0
    %1071 = vmatmul.mubr.bf16.gmra.mrb[0].mxu0 %v1027
    %v1072 = vpop.f32.mrb[0].mxu0
    %v1073 = vadd.f32 0.0, %v1072
    %v1074 = vpop.f32.mrb[0].mxu0
    %v1075 = vpop.f32.mrb[0].mxu0
    %v1076 = vadd.f32 0.0, %v1075
    %v1077 = vpop.f32.mrb[0].mxu0
    %1078 = vmatprep.mubr.bf16.mxu0 0
    %1079 = vmatmul.mubr.bf16.gmra.mrb[0].mxu0 %v1030
    %v1080 = vpop.f32.mrb[0].mxu0
    %v1081 = vadd.f32 0.0, %v1080
    %v1082 = vpop.f32.mrb[0].mxu0
    %v1083 = vpop.f32.mrb[0].mxu0
    %v1084 = vadd.f32 0.0, %v1083
    %v1085 = vpop.f32.mrb[0].mxu0
    %1086 = vmatprep.mubr.bf16.mxu0 0
    %1087 = vmatmul.mubr.bf16.gmra.mrb[0].mxu0 %v1033
    %v1088 = vpop.f32.mrb[0].mxu0
    %v1089 = vadd.f32 0.0, %v1088
    %v1090 = vpop.f32.mrb[0].mxu0
    %v1091 = vpop.f32.mrb[0].mxu0
    %v1092 = vadd.f32 0.0, %v1091
    %v1093 = vpop.f32.mrb[0].mxu0
    %1094 = vmatprep.mubr.bf16.mxu0 0
    %1095 = vmatmul.mubr.bf16.gmra.mrb[0].mxu0 %v1036
    %v1096 = vpop.f32.mrb[0].mxu0
    %v1097 = vadd.f32 0.0, %v1096
    %v1098 = vpop.f32.mrb[0].mxu0
    %v1099 = vpop.f32.mrb[0].mxu0
    %v1100 = vadd.f32 0.0, %v1099
    %v1101 = vpop.f32.mrb[0].mxu0
    %1102 = vdwg.mxu0
    %v1103 = vsel %vm34, %v1073, 0.0
    %v1104 = vsel %vm34, %v1076, 0.0
    %v1105 = vsel %vm37, %v1081, 0.0
    %v1106 = vsel %vm37, %v1084, 0.0
    %v1107 = vsel %vm40, %v1089, 0.0
    %v1108 = vsel %vm40, %v1092, 0.0
    %v1109 = vsel %vm43, %v1097, 0.0
    %v1110 = vsel %vm43, %v1100, 0.0
    %v1111 = vpack.c.bf16 %v1104, %v1103
    %v1112 = vpack.c.bf16 %v1106, %v1105
    %v1113 = vpack.c.bf16 %v1108, %v1107
    %v1114 = vpack.c.bf16 %v1110, %v1109
    %s1115 = scalar_lea.vmem %s2, 16
    %v1116 = vld [vmem:[%s1115] sm:$0xf]
    %v1117 = vld [vmem:[%s1115 + $0x4] sm:$0xf]
    %v1118 = vld [vmem:[%s1115 + $0x8] sm:$0xf]
    %v1119 = vld [vmem:[%s1115 + $0xc] sm:$0xf]
    %v1124 = vunpack.c.l.b16 %v1116
    %v1125 = vunpack.c.l.b16 %v1117
    %v1126 = vunpack.c.l.b16 %v1118
    %v1127 = vunpack.c.l.b16 %v1119
    %v1128 = vpack.c.b16 %v1125, %v1124
    %v1129 = vpack.c.b16 %v1127, %v1126
    %v1133 = vsel %vm100, %v1111, 0
    %v1136 = vsel %vm100, %v1112, 0
    %v1139 = vsel %vm100, %v1113, 0
    %v1142 = vsel %vm100, %v1114, 0
    %1144 = vmatprep.subr.bf16.mxu0 0
    %1145 = vmatpush1.bf16.msra.mxu0 %v1128
    %1146 = vmatprep.subr.bf16.mxu0 0
    %1147 = vmatpush1.bf16.msra.mxu0 %v1129
    %1148 = vmatprep.subr.bf16.mxu0 0
    %1149 = vmatpush1.bf16.msra.mxu0 0
    %1150 = vmatprep.subr.bf16.mxu0 0
    %1151 = vmatpush1.bf16.msra.mxu0 0
    %1152 = vmatprep.subr.bf16.mxu0 0
    %1153 = vmatpush1.bf16.msra.mxu0 0
    %1154 = vmatprep.subr.bf16.mxu0 0
    %1155 = vmatpush1.bf16.msra.mxu0 0
    %1156 = vmatprep.subr.bf16.mxu0 0
    %1157 = vmatpush1.bf16.msra.mxu0 0
    %1158 = vmatprep.subr.bf16.mxu0 0
    %1159 = vmatpush1.bf16.msra.mxu0 0
    %1160 = vmatprep.subr.bf16.mxu0 0
    %1161 = vmatpush1.bf16.msra.mxu0 0
    %1162 = vmatprep.subr.bf16.mxu0 0
    %1163 = vmatpush1.bf16.msra.mxu0 0
    %1164 = vmatprep.subr.bf16.mxu0 0
    %1165 = vmatpush1.bf16.msra.mxu0 0
    %1166 = vmatprep.subr.bf16.mxu0 0
    %1167 = vmatpush1.bf16.msra.mxu0 0
    %1168 = vmatprep.subr.bf16.mxu0 0
    %1169 = vmatpush1.bf16.msra.mxu0 0
    %1170 = vmatprep.subr.bf16.mxu0 0
    %1171 = vmatpush1.bf16.msra.mxu0 0
    %1172 = vmatprep.subr.bf16.mxu0 0
    %1173 = vmatpush1.bf16.msra.mxu0 0
    %1174 = vmatprep.subr.bf16.mxu0 0
    %1175 = vmatpush1.bf16.msra.mxu0 0
    %1176 = vmatprep.mubr.bf16.mxu0 0
    %1177 = vmatmul.mubr.bf16.gmra.mrb[0].mxu0 %v1133
    %v1178 = vpop.f32.mrb[0].mxu0
    %v1179 = vadd.f32 0.0, %v1178
    %v1180 = vpop.f32.mrb[0].mxu0
    %v1181 = vpop.f32.mrb[0].mxu0
    %v1182 = vadd.f32 0.0, %v1181
    %v1183 = vpop.f32.mrb[0].mxu0
    %1184 = vmatprep.mubr.bf16.mxu0 0
    %1185 = vmatmul.mubr.bf16.gmra.mrb[0].mxu0 %v1136
    %v1186 = vpop.f32.mrb[0].mxu0
    %v1187 = vadd.f32 0.0, %v1186
    %v1188 = vpop.f32.mrb[0].mxu0
    %v1189 = vpop.f32.mrb[0].mxu0
    %v1190 = vadd.f32 0.0, %v1189
    %v1191 = vpop.f32.mrb[0].mxu0
    %1192 = vmatprep.mubr.bf16.mxu0 0
    %1193 = vmatmul.mubr.bf16.gmra.mrb[0].mxu0 %v1139
    %v1194 = vpop.f32.mrb[0].mxu0
    %v1195 = vadd.f32 0.0, %v1194
    %v1196 = vpop.f32.mrb[0].mxu0
    %v1197 = vpop.f32.mrb[0].mxu0
    %v1198 = vadd.f32 0.0, %v1197
    %v1199 = vpop.f32.mrb[0].mxu0
    %1200 = vmatprep.mubr.bf16.mxu0 0
    %1201 = vmatmul.mubr.bf16.gmra.mrb[0].mxu0 %v1142
    %v1202 = vpop.f32.mrb[0].mxu0
    %v1203 = vadd.f32 0.0, %v1202
    %v1204 = vpop.f32.mrb[0].mxu0
    %v1205 = vpop.f32.mrb[0].mxu0
    %v1206 = vadd.f32 0.0, %v1205
    %v1207 = vpop.f32.mrb[0].mxu0
    %1208 = vdwg.mxu0
    %v1209 = vadd.f32 %v1179, %v1187
    %v1210 = vadd.f32 %v1182, %v1190
    %v1211 = vadd.f32 %v1209, %v1195
    %v1212 = vadd.f32 %v1210, %v1198
    %v1213 = vadd.f32 %v1211, %v1203
    %v1214 = vadd.f32 %v1212, %v1206
    %v1215 = vlaneseq
    %v1216 = vshrl.u32 %v1215, 7
    %v1217 = vsub.s32 0, %v1216
    %v1218 = vrot.slane %v762, %v1217
    %v1219 = vadd.f32 %v1213, %v1218
    %v1220 = vadd.f32 %v1214, %v1218
    %v1221 = vadd.f32 %v759, %v1219
    %v1222 = vadd.f32 %v760, %v1220
    %v1223 = vsel %vm100, %v1221, 0.0
    %1224 = vadd.xlane.f32.xlu0 %v1223
    %v1225 = vpop.xlane.xlu0 %1224
    %v1226 = vsel %vm100, %v1222, 0.0
    %1227 = vadd.xlane.f32.xlu0 %v1226
    %v1228 = vpop.xlane.xlu0 %1227
    %v1229 = vmul.f32 %v1225, %v539
    %v1230 = vmul.f32 %v1228, %v539
    %v1231 = vsub.f32 %v1221, %v1229
    %v1232 = vsub.f32 %v1222, %v1230
    %v1233 = vmul.f32 %v1231, %v1231
    %v1234 = vmul.f32 %v1232, %v1232
    %v1235 = vsel %vm100, %v1233, 0.0
    %1236 = vadd.xlane.f32.xlu0 %v1235
    %v1237 = vpop.xlane.xlu0 %1236
    %v1238 = vsel %vm100, %v1234, 0.0
    %1239 = vadd.xlane.f32.xlu0 %v1238
    %v1240 = vpop.xlane.xlu0 %1239
    %v1241 = vmul.f32 %v1237, %v539
    %v1242 = vmul.f32 %v1240, %v539
    %v1243 = vadd.f32 %v1241, 1e-05
    %v1244 = vadd.f32 %v1242, 1e-05
    %v1245 = vrsqrt.pop %v1243
    %v1246 = vrsqrt.pop %v1244
    %v1247 = vmul.f32 %v1231, %v1245
    %v1248 = vmul.f32 %v1232, %v1246
    %v1249 = vlaneseq
    %v1250 = vshrl.u32 %v1249, 7
    %v1251 = vsub.s32 0, %v1250
    %v1252 = vrot.slane %v763, %v1251
    %v1253 = vmul.f32 %v1247, %v1252
    %v1254 = vmul.f32 %v1248, %v1252
    %v1255 = vlaneseq
    %v1256 = vshrl.u32 %v1255, 7
    %v1257 = vsub.s32 0, %v1256
    %v1258 = vrot.slane %v764, %v1257
    %v1259 = vadd.f32 %v1253, %v1258
    %v1260 = vadd.f32 %v1254, %v1258
    %v1261 = vpack.c.bf16 %v1260, %v1259
    %s1262 = scalar_lea.vmem %s3, 16
    %v1263 = vld [vmem:[%s1262] sm:$0xf]
    %v1264 = vld [vmem:[%s1262 + $0x4] sm:$0xf]
    %v1265 = vld [vmem:[%s1262 + $0x8] sm:$0xf]
    %v1266 = vld [vmem:[%s1262 + $0xc] sm:$0xf]
    %v1267 = vlaneseq
    %v1268 = vshrl.u32 %v1267, 7
    %v1269 = vsub.s32 0, %v1268
    %v1270 = vrot.slane %v765, %v1269
    %v1275 = vunpack.c.l.b16 %v1263
    %v1276 = vunpack.c.l.b16 %v1264
    %v1277 = vunpack.c.l.b16 %v1265
    %v1278 = vunpack.c.l.b16 %v1266
    %v1279 = vpack.c.b16 %v1276, %v1275
    %v1280 = vpack.c.b16 %v1278, %v1277
    %v1284 = vsel %vm100, %v1261, 0
    %1286 = vmatprep.subr.bf16.mxu0 0
    %1287 = vmatpush1.bf16.msra.mxu0 %v1279
    %1288 = vmatprep.subr.bf16.mxu0 0
    %1289 = vmatpush1.bf16.msra.mxu0 %v1280
    %1290 = vmatprep.subr.bf16.mxu0 0
    %1291 = vmatpush1.bf16.msra.mxu0 0
    %1292 = vmatprep.subr.bf16.mxu0 0
    %1293 = vmatpush1.bf16.msra.mxu0 0
    %1294 = vmatprep.subr.bf16.mxu0 0
    %1295 = vmatpush1.bf16.msra.mxu0 0
    %1296 = vmatprep.subr.bf16.mxu0 0
    %1297 = vmatpush1.bf16.msra.mxu0 0
    %1298 = vmatprep.subr.bf16.mxu0 0
    %1299 = vmatpush1.bf16.msra.mxu0 0
    %1300 = vmatprep.subr.bf16.mxu0 0
    %1301 = vmatpush1.bf16.msra.mxu0 0
    %1302 = vmatprep.subr.bf16.mxu0 0
    %1303 = vmatpush1.bf16.msra.mxu0 0
    %1304 = vmatprep.subr.bf16.mxu0 0
    %1305 = vmatpush1.bf16.msra.mxu0 0
    %1306 = vmatprep.subr.bf16.mxu0 0
    %1307 = vmatpush1.bf16.msra.mxu0 0
    %1308 = vmatprep.subr.bf16.mxu0 0
    %1309 = vmatpush1.bf16.msra.mxu0 0
    %1310 = vmatprep.subr.bf16.mxu0 0
    %1311 = vmatpush1.bf16.msra.mxu0 0
    %1312 = vmatprep.subr.bf16.mxu0 0
    %1313 = vmatpush1.bf16.msra.mxu0 0
    %1314 = vmatprep.subr.bf16.mxu0 0
    %1315 = vmatpush1.bf16.msra.mxu0 0
    %1316 = vmatprep.subr.bf16.mxu0 0
    %1317 = vmatpush1.bf16.msra.mxu0 0
    %1318 = vmatprep.mubr.bf16.mxu0 0
    %1319 = vmatmul.mubr.bf16.gmra.mrb[0].mxu0 %v1284
    %v1320 = vpop.f32.mrb[0].mxu0
    %v1321 = vadd.f32 %v1270, %v1320
    %v1322 = vpop.f32.mrb[0].mxu0
    %v1323 = vpop.f32.mrb[0].mxu0
    %v1324 = vadd.f32 %v1270, %v1323
    %v1325 = vpop.f32.mrb[0].mxu0
    %1326 = vdwg.mxu0
    %v1327 = vmax.f32 %v1321, 0.0
    %v1328 = vmax.f32 %v1324, 0.0
    %v1329 = vpack.c.bf16 %v1328, %v1327
    %s1330 = scalar_lea.vmem %s4, 32
    %v1331 = vld [vmem:[%s1330] sm:$0xf]
    %v1332 = vld [vmem:[%s1330 + $0x4] sm:$0xf]
    %v1333 = vld [vmem:[%s1330 + $0x8] sm:$0xf]
    %v1334 = vld [vmem:[%s1330 + $0xc] sm:$0xf]
    %v1335 = vld [vmem:[%s1330 + $0x10] sm:$0xf]
    %v1336 = vld [vmem:[%s1330 + $0x14] sm:$0xf]
    %v1337 = vld [vmem:[%s1330 + $0x18] sm:$0xf]
    %v1338 = vld [vmem:[%s1330 + $0x1c] sm:$0xf]
    %v1339 = vlaneseq
    %v1340 = vshrl.u32 %v1339, 7
    %v1341 = vsub.s32 0, %v1340
    %v1342 = vrot.slane %v766, %v1341
    %v1351 = vunpack.c.l.b16 %v1331
    %v1352 = vunpack.c.l.b16 %v1332
    %v1353 = vunpack.c.l.b16 %v1333
    %v1354 = vunpack.c.l.b16 %v1334
    %v1355 = vunpack.c.l.b16 %v1335
    %v1356 = vunpack.c.l.b16 %v1336
    %v1357 = vunpack.c.l.b16 %v1337
    %v1358 = vunpack.c.l.b16 %v1338
    %v1359 = vpack.c.b16 %v1352, %v1351
    %v1360 = vpack.c.b16 %v1354, %v1353
    %v1361 = vpack.c.b16 %v1356, %v1355
    %v1362 = vpack.c.b16 %v1358, %v1357
    %v1368 = vsel %vm676, %v1329, 0
    %1370 = vmatprep.subr.bf16.mxu0 0
    %1371 = vmatpush1.bf16.msra.mxu0 %v1359
    %1372 = vmatprep.subr.bf16.mxu0 0
    %1373 = vmatpush1.bf16.msra.mxu0 %v1360
    %1374 = vmatprep.subr.bf16.mxu0 0
    %1375 = vmatpush1.bf16.msra.mxu0 %v1361
    %1376 = vmatprep.subr.bf16.mxu0 0
    %1377 = vmatpush1.bf16.msra.mxu0 %v1362
    %1378 = vmatprep.subr.bf16.mxu0 0
    %1379 = vmatpush1.bf16.msra.mxu0 0
    %1380 = vmatprep.subr.bf16.mxu0 0
    %1381 = vmatpush1.bf16.msra.mxu0 0
    %1382 = vmatprep.subr.bf16.mxu0 0
    %1383 = vmatpush1.bf16.msra.mxu0 0
    %1384 = vmatprep.subr.bf16.mxu0 0
    %1385 = vmatpush1.bf16.msra.mxu0 0
    %1386 = vmatprep.subr.bf16.mxu0 0
    %1387 = vmatpush1.bf16.msra.mxu0 0
    %1388 = vmatprep.subr.bf16.mxu0 0
    %1389 = vmatpush1.bf16.msra.mxu0 0
    %1390 = vmatprep.subr.bf16.mxu0 0
    %1391 = vmatpush1.bf16.msra.mxu0 0
    %1392 = vmatprep.subr.bf16.mxu0 0
    %1393 = vmatpush1.bf16.msra.mxu0 0
    %1394 = vmatprep.subr.bf16.mxu0 0
    %1395 = vmatpush1.bf16.msra.mxu0 0
    %1396 = vmatprep.subr.bf16.mxu0 0
    %1397 = vmatpush1.bf16.msra.mxu0 0
    %1398 = vmatprep.subr.bf16.mxu0 0
    %1399 = vmatpush1.bf16.msra.mxu0 0
    %1400 = vmatprep.subr.bf16.mxu0 0
    %1401 = vmatpush1.bf16.msra.mxu0 0
    %1402 = vmatprep.mubr.bf16.mxu0 0
    %1403 = vmatmul.mubr.bf16.gmra.mrb[0].mxu0 %v1368
    %v1404 = vpop.f32.mrb[0].mxu0
    %v1405 = vadd.f32 %v1342, %v1404
    %v1406 = vpop.f32.mrb[0].mxu0
    %v1407 = vpop.f32.mrb[0].mxu0
    %v1408 = vadd.f32 %v1342, %v1407
    %v1409 = vpop.f32.mrb[0].mxu0
    %1410 = vdwg.mxu0
    %v1411 = vadd.f32 %v1259, %v1405
    %v1412 = vadd.f32 %v1260, %v1408
    %v1413 = vsel %vm100, %v1411, 0.0
    %1414 = vadd.xlane.f32.xlu0 %v1413
    %v1415 = vpop.xlane.xlu0 %1414
    %v1416 = vsel %vm100, %v1412, 0.0
    %1417 = vadd.xlane.f32.xlu0 %v1416
    %v1418 = vpop.xlane.xlu0 %1417
    %v1419 = vmul.f32 %v1415, %v539
    %v1420 = vmul.f32 %v1418, %v539
    %v1421 = vsub.f32 %v1411, %v1419
    %v1422 = vsub.f32 %v1412, %v1420
    %v1423 = vmul.f32 %v1421, %v1421
    %v1424 = vmul.f32 %v1422, %v1422
    %v1425 = vsel %vm100, %v1423, 0.0
    %1426 = vadd.xlane.f32.xlu0 %v1425
    %v1427 = vpop.xlane.xlu0 %1426
    %v1428 = vsel %vm100, %v1424, 0.0
    %1429 = vadd.xlane.f32.xlu0 %v1428
    %v1430 = vpop.xlane.xlu0 %1429
    %v1431 = vmul.f32 %v1427, %v539
    %v1432 = vmul.f32 %v1430, %v539
    %v1433 = vadd.f32 %v1431, 1e-05
    %v1434 = vadd.f32 %v1432, 1e-05
    %v1435 = vrsqrt.pop %v1433
    %v1436 = vrsqrt.pop %v1434
    %v1437 = vmul.f32 %v1421, %v1435
    %v1438 = vmul.f32 %v1422, %v1436
    %v1439 = vlaneseq
    %v1440 = vshrl.u32 %v1439, 7
    %v1441 = vsub.s32 0, %v1440
    %v1442 = vrot.slane %v767, %v1441
    %v1443 = vmul.f32 %v1437, %v1442
    %v1444 = vmul.f32 %v1438, %v1442
    %v1445 = vlaneseq
    %v1446 = vshrl.u32 %v1445, 7
    %v1447 = vsub.s32 0, %v1446
    %v1448 = vrot.slane %v768, %v1447
    %v1449 = vadd.f32 %v1443, %v1448
    %v1450 = vadd.f32 %v1444, %v1448
    %v1451 = vmul.u32 %v45, 2
    %vm1452 = vcmp.ge.s32.totalorder %v31, %v1451
    %v1453 = vadd.s32 %v1451, 2
    %vm1454 = vcmp.lt.s32.totalorder %v31, %v1453
    %vm1455 = vmand %vm1452, %vm1454
    %v1456 = vsel %vm1455, 0.5, 0.0
    %v1457 = vpack.c.bf16 %v1456, %v1456
    %v1458 = vpack.c.bf16 %v1450, %v1449
    %v1460 = vsel %vm241, %v1457, 0
    %1462 = vmatprep.subr.bf16.mxu0 0
    %1463 = vmatpush1.bf16.msra.mxu0 %v1458
    %1464 = vmatprep.subr.bf16.mxu0 0
    %1465 = vmatpush1.bf16.msra.mxu0 0
    %1466 = vmatprep.subr.bf16.mxu0 0
    %1467 = vmatpush1.bf16.msra.mxu0 0
    %1468 = vmatprep.subr.bf16.mxu0 0
    %1469 = vmatpush1.bf16.msra.mxu0 0
    %1470 = vmatprep.subr.bf16.mxu0 0
    %1471 = vmatpush1.bf16.msra.mxu0 0
    %1472 = vmatprep.subr.bf16.mxu0 0
    %1473 = vmatpush1.bf16.msra.mxu0 0
    %1474 = vmatprep.subr.bf16.mxu0 0
    %1475 = vmatpush1.bf16.msra.mxu0 0
    %1476 = vmatprep.subr.bf16.mxu0 0
    %1477 = vmatpush1.bf16.msra.mxu0 0
    %1478 = vmatprep.subr.bf16.mxu0 0
    %1479 = vmatpush1.bf16.msra.mxu0 0
    %1480 = vmatprep.subr.bf16.mxu0 0
    %1481 = vmatpush1.bf16.msra.mxu0 0
    %1482 = vmatprep.subr.bf16.mxu0 0
    %1483 = vmatpush1.bf16.msra.mxu0 0
    %1484 = vmatprep.subr.bf16.mxu0 0
    %1485 = vmatpush1.bf16.msra.mxu0 0
    %1486 = vmatprep.subr.bf16.mxu0 0
    %1487 = vmatpush1.bf16.msra.mxu0 0
    %1488 = vmatprep.subr.bf16.mxu0 0
    %1489 = vmatpush1.bf16.msra.mxu0 0
    %1490 = vmatprep.subr.bf16.mxu0 0
    %1491 = vmatpush1.bf16.msra.mxu0 0
    %1492 = vmatprep.subr.bf16.mxu0 0
    %1493 = vmatpush1.bf16.msra.mxu0 0
    %1494 = vmatprep.mubr.bf16.mxu0 0
    %1495 = vmatmul.mubr.bf16.gmra.mrb[0].mxu0 %v1460
    %v1496 = vpop.f32.mrb[0].mxu0
    %v1497 = vadd.f32 0.0, %v1496
    %v1498 = vpop.f32.mrb[0].mxu0
    %v1499 = vpop.f32.mrb[0].mxu0
    %v1500 = vpop.f32.mrb[0].mxu0
    %1501 = vdwg.mxu0
    %vm1502 = vcmp.lt.s32.totalorder %v45, 4
    %vm1503 = vmand %vm47, %vm1502
    %vm1504 = vmand %vm1503, %vm32
    %vm1505 = vcmp.lt.s32.totalorder %v31, 4
    %vm1506 = vmand %vm1504, %vm1505
    %vm1507 = vcmp.ge.s32.totalorder %v45, 4
    %vm1508 = vmand %vm1507, %vm49
    %vm1509 = vcmp.ge.s32.totalorder %v31, 4
    %vm1510 = vmand %vm1508, %vm1509
    %vm1511 = vmand %vm1510, %vm33
    %vm1512 = vmor %vm1506, %vm1511
    %v1513 = vsel %vm1512, 0.0, -1e+09
    %v1514 = vld [vmem:[%s6 + $0x10] sm:$0x1]
    %v1515 = vld [vmem:[%s6 + $0x11] sm:$0x1]
    %v1516 = vld [vmem:[%s6 + $0x12] sm:$0x1]
    %v1517 = vld [vmem:[%s6 + $0x13] sm:$0x1]
    %v1518 = vld [vmem:[%s6 + $0x14] sm:$0x1]
    %v1519 = vld [vmem:[%s6 + $0x15] sm:$0x1]
    %v1520 = vld [vmem:[%s6 + $0x16] sm:$0x1]
    %v1521 = vld [vmem:[%s6 + $0x17] sm:$0x1]
    %v1522 = vpack.c.bf16 %v1497, %v1497
    %s1523 = scalar_lea.vmem %s1, 32
    %v1524 = vld [vmem:[%s1523] sm:$0xf]
    %v1525 = vld [vmem:[%s1523 + $0x4] sm:$0xf]
    %v1526 = vld [vmem:[%s1523 + $0x8] sm:$0xf]
    %v1527 = vld [vmem:[%s1523 + $0xc] sm:$0xf]
    %v1528 = vlaneseq
    %v1529 = vshrl.u32 %v1528, 7
    %v1530 = vsub.s32 0, %v1529
    %v1531 = vrot.slane %v1514, %v1530
    %v1536 = vunpack.c.l.b16 %v1524
    %v1537 = vunpack.c.l.b16 %v1525
    %v1538 = vunpack.c.l.b16 %v1526
    %v1539 = vunpack.c.l.b16 %v1527
    %v1540 = vpack.c.b16 %v1537, %v1536
    %v1541 = vpack.c.b16 %v1539, %v1538
    %v1545 = vsel %vm100, %v1522, 0
    %1547 = vmatprep.subr.bf16.mxu0 0
    %1548 = vmatpush1.bf16.msra.mxu0 %v1540
    %1549 = vmatprep.subr.bf16.mxu0 0
    %1550 = vmatpush1.bf16.msra.mxu0 %v1541
    %1551 = vmatprep.subr.bf16.mxu0 0
    %1552 = vmatpush1.bf16.msra.mxu0 0
    %1553 = vmatprep.subr.bf16.mxu0 0
    %1554 = vmatpush1.bf16.msra.mxu0 0
    %1555 = vmatprep.subr.bf16.mxu0 0
    %1556 = vmatpush1.bf16.msra.mxu0 0
    %1557 = vmatprep.subr.bf16.mxu0 0
    %1558 = vmatpush1.bf16.msra.mxu0 0
    %1559 = vmatprep.subr.bf16.mxu0 0
    %1560 = vmatpush1.bf16.msra.mxu0 0
    %1561 = vmatprep.subr.bf16.mxu0 0
    %1562 = vmatpush1.bf16.msra.mxu0 0
    %1563 = vmatprep.subr.bf16.mxu0 0
    %1564 = vmatpush1.bf16.msra.mxu0 0
    %1565 = vmatprep.subr.bf16.mxu0 0
    %1566 = vmatpush1.bf16.msra.mxu0 0
    %1567 = vmatprep.subr.bf16.mxu0 0
    %1568 = vmatpush1.bf16.msra.mxu0 0
    %1569 = vmatprep.subr.bf16.mxu0 0
    %1570 = vmatpush1.bf16.msra.mxu0 0
    %1571 = vmatprep.subr.bf16.mxu0 0
    %1572 = vmatpush1.bf16.msra.mxu0 0
    %1573 = vmatprep.subr.bf16.mxu0 0
    %1574 = vmatpush1.bf16.msra.mxu0 0
    %1575 = vmatprep.subr.bf16.mxu0 0
    %1576 = vmatpush1.bf16.msra.mxu0 0
    %1577 = vmatprep.subr.bf16.mxu0 0
    %1578 = vmatpush1.bf16.msra.mxu0 0
    %1579 = vmatprep.mubr.bf16.mxu0 0
    %1580 = vmatmul.mubr.bf16.gmra.mrb[0].mxu0 %v1545
    %v1581 = vpop.f32.mrb[0].mxu0
    %v1582 = vadd.f32 %v1531, %v1581
    %v1583 = vpop.f32.mrb[0].mxu0
    %v1584 = vpop.f32.mrb[0].mxu0
    %v1585 = vpop.f32.mrb[0].mxu0
    %1586 = vdwg.mxu0
    %v1587 = vpack.c.bf16 %v1582, %v1582
    %v1588 = vsel %vm34, %v1582, 0.0
    %v1589 = vsel %vm37, %v1582, 0.0
    %v1590 = vsel %vm40, %v1582, 0.0
    %v1591 = vsel %vm43, %v1582, 0.0
    %v1592 = vpack.c.bf16 %v1589, %v1588
    %v1593 = vpack.c.bf16 %v1591, %v1590
    %1595 = vrot.lane.b32.xlu0 %v1587, 96
    %v1596 = vpop.permute.xlu0 %1595
    %v1598 = vsel %vm100, %v1592, 0
    %v1601 = vsel %vm100, %v1593, 0
    %v1604 = vsel %vm100, %v1596, 0
    %1606 = vmatprep.subr.bf16.mxu0 0
    %1607 = vmatpush1.bf16.xpose.msra.mxu0 %v1604
    %1608 = vmatprep.subr.bf16.mxu0 0
    %1609 = vmatpush1.bf16.xpose.msra.mxu0 0
    %1610 = vmatprep.subr.bf16.mxu0 0
    %1611 = vmatpush1.bf16.xpose.msra.mxu0 0
    %1612 = vmatprep.subr.bf16.mxu0 0
    %1613 = vmatpush1.bf16.xpose.msra.mxu0 0
    %1614 = vmatprep.subr.bf16.mxu0 0
    %1615 = vmatpush1.bf16.xpose.msra.mxu0 0
    %1616 = vmatprep.subr.bf16.mxu0 0
    %1617 = vmatpush1.bf16.xpose.msra.mxu0 0
    %1618 = vmatprep.subr.bf16.mxu0 0
    %1619 = vmatpush1.bf16.xpose.msra.mxu0 0
    %1620 = vmatprep.subr.bf16.mxu0 0
    %1621 = vmatpush1.bf16.xpose.msra.mxu0 0
    %1622 = vmatprep.subr.bf16.mxu0 0
    %1623 = vmatpush1.bf16.xpose.msra.mxu0 0
    %1624 = vmatprep.subr.bf16.mxu0 0
    %1625 = vmatpush1.bf16.xpose.msra.mxu0 0
    %1626 = vmatprep.subr.bf16.mxu0 0
    %1627 = vmatpush1.bf16.xpose.msra.mxu0 0
    %1628 = vmatprep.subr.bf16.mxu0 0
    %1629 = vmatpush1.bf16.xpose.msra.mxu0 0
    %1630 = vmatprep.subr.bf16.mxu0 0
    %1631 = vmatpush1.bf16.xpose.msra.mxu0 0
    %1632 = vmatprep.subr.bf16.mxu0 0
    %1633 = vmatpush1.bf16.xpose.msra.mxu0 0
    %1634 = vmatprep.subr.bf16.mxu0 0
    %1635 = vmatpush1.bf16.xpose.msra.mxu0 0
    %1636 = vmatprep.subr.bf16.mxu0 0
    %1637 = vmatpush1.bf16.xpose.msra.mxu0 0
    %1638 = vmatprep.mubr.bf16.mxu0 0
    %1639 = vmatmul.mubr.bf16.gmra.mrb[0].mxu0 %v1598
    %v1640 = vpop.f32.mrb[0].mxu0
    %v1641 = vadd.f32 %v1513, %v1640
    %v1642 = vpop.f32.mrb[0].mxu0
    %v1643 = vpop.f32.mrb[0].mxu0
    %v1644 = vadd.f32 %v1513, %v1643
    %v1645 = vpop.f32.mrb[0].mxu0
    %1646 = vmatprep.mubr.bf16.mxu0 0
    %1647 = vmatmul.mubr.bf16.gmra.mrb[0].mxu0 %v1601
    %v1648 = vpop.f32.mrb[0].mxu0
    %v1649 = vadd.f32 %v1513, %v1648
    %v1650 = vpop.f32.mrb[0].mxu0
    %v1651 = vpop.f32.mrb[0].mxu0
    %v1652 = vadd.f32 %v1513, %v1651
    %v1653 = vpop.f32.mrb[0].mxu0
    %1654 = vdwg.mxu0
    %vm1655 = vcmask 64512
    %v1656 = vsel %vm1655, %v1641, -inf
    %1657 = vmax.xlane.f32.xlu0 %v1656
    %v1658 = vpop.xlane.xlu0 %1657
    %v1659 = vsel %vm1655, %v1644, -inf
    %1660 = vmax.xlane.f32.xlu0 %v1659
    %v1661 = vpop.xlane.xlu0 %1660
    %v1662 = vsel %vm1655, %v1649, -inf
    %1663 = vmax.xlane.f32.xlu0 %v1662
    %v1664 = vpop.xlane.xlu0 %1663
    %v1665 = vsel %vm1655, %v1652, -inf
    %1666 = vmax.xlane.f32.xlu0 %v1665
    %v1667 = vpop.xlane.xlu0 %1666
    %v1668 = vsub.f32 %v1641, %v1658
    %v1669 = vsub.f32 %v1644, %v1661
    %v1670 = vsub.f32 %v1649, %v1664
    %v1671 = vsub.f32 %v1652, %v1667
    %v1672 = vmul.f32 %v1668, 1.442695
    %v1673 = vpow.pop %v1672
    %v1674 = vmul.f32 %v1669, 1.442695
    %v1675 = vpow.pop %v1674
    %v1676 = vmul.f32 %v1670, 1.442695
    %v1677 = vpow.pop %v1676
    %v1678 = vmul.f32 %v1671, 1.442695
    %v1679 = vpow.pop %v1678
    %v1680 = vsel %vm1655, %v1673, 0.0
    %1681 = vadd.xlane.f32.xlu0 %v1680
    %v1682 = vpop.xlane.xlu0 %1681
    %v1683 = vsel %vm1655, %v1675, 0.0
    %1684 = vadd.xlane.f32.xlu0 %v1683
    %v1685 = vpop.xlane.xlu0 %1684
    %v1686 = vsel %vm1655, %v1677, 0.0
    %1687 = vadd.xlane.f32.xlu0 %v1686
    %v1688 = vpop.xlane.xlu0 %1687
    %v1689 = vsel %vm1655, %v1679, 0.0
    %1690 = vadd.xlane.f32.xlu0 %v1689
    %v1691 = vpop.xlane.xlu0 %1690
    %v1692 = vrcp.pop %v1682
    %v1693 = vrcp.pop %v1685
    %v1694 = vrcp.pop %v1688
    %v1695 = vrcp.pop %v1691
    %v1696 = vmul.f32 %v1673, %v1692
    %v1697 = vmul.f32 %v1675, %v1693
    %v1698 = vmul.f32 %v1677, %v1694
    %v1699 = vmul.f32 %v1679, %v1695
    %v1700 = vpack.c.bf16 %v1697, %v1696
    %v1701 = vpack.c.bf16 %v1699, %v1698
    %1702 = vrot.lane.b32.xlu0 %v1587, 64
    %v1703 = vpop.permute.xlu0 %1702
    %v1705 = vsel %vm1655, %v1700, 0
    %v1708 = vsel %vm1655, %v1701, 0
    %vm1710 = vcmask 1043456
    %v1712 = vsel %vm1710, %v1703, 0
    %1714 = vmatprep.subr.bf16.mxu0 0
    %1715 = vmatpush1.bf16.msra.mxu0 %v1712
    %1716 = vmatprep.subr.bf16.mxu0 0
    %1717 = vmatpush1.bf16.msra.mxu0 0
    %1718 = vmatprep.subr.bf16.mxu0 0
    %1719 = vmatpush1.bf16.msra.mxu0 0
    %1720 = vmatprep.subr.bf16.mxu0 0
    %1721 = vmatpush1.bf16.msra.mxu0 0
    %1722 = vmatprep.subr.bf16.mxu0 0
    %1723 = vmatpush1.bf16.msra.mxu0 0
    %1724 = vmatprep.subr.bf16.mxu0 0
    %1725 = vmatpush1.bf16.msra.mxu0 0
    %1726 = vmatprep.subr.bf16.mxu0 0
    %1727 = vmatpush1.bf16.msra.mxu0 0
    %1728 = vmatprep.subr.bf16.mxu0 0
    %1729 = vmatpush1.bf16.msra.mxu0 0
    %1730 = vmatprep.subr.bf16.mxu0 0
    %1731 = vmatpush1.bf16.msra.mxu0 0
    %1732 = vmatprep.subr.bf16.mxu0 0
    %1733 = vmatpush1.bf16.msra.mxu0 0
    %1734 = vmatprep.subr.bf16.mxu0 0
    %1735 = vmatpush1.bf16.msra.mxu0 0
    %1736 = vmatprep.subr.bf16.mxu0 0
    %1737 = vmatpush1.bf16.msra.mxu0 0
    %1738 = vmatprep.subr.bf16.mxu0 0
    %1739 = vmatpush1.bf16.msra.mxu0 0
    %1740 = vmatprep.subr.bf16.mxu0 0
    %1741 = vmatpush1.bf16.msra.mxu0 0
    %1742 = vmatprep.subr.bf16.mxu0 0
    %1743 = vmatpush1.bf16.msra.mxu0 0
    %1744 = vmatprep.subr.bf16.mxu0 0
    %1745 = vmatpush1.bf16.msra.mxu0 0
    %1746 = vmatprep.mubr.bf16.mxu0 0
    %1747 = vmatmul.mubr.bf16.gmra.mrb[0].mxu0 %v1705
    %v1748 = vpop.f32.mrb[0].mxu0
    %v1749 = vadd.f32 0.0, %v1748
    %v1750 = vpop.f32.mrb[0].mxu0
    %v1751 = vpop.f32.mrb[0].mxu0
    %v1752 = vadd.f32 0.0, %v1751
    %v1753 = vpop.f32.mrb[0].mxu0
    %1754 = vmatprep.mubr.bf16.mxu0 0
    %1755 = vmatmul.mubr.bf16.gmra.mrb[0].mxu0 %v1708
    %v1756 = vpop.f32.mrb[0].mxu0
    %v1757 = vadd.f32 0.0, %v1756
    %v1758 = vpop.f32.mrb[0].mxu0
    %v1759 = vpop.f32.mrb[0].mxu0
    %v1760 = vadd.f32 0.0, %v1759
    %v1761 = vpop.f32.mrb[0].mxu0
    %1762 = vdwg.mxu0
    %v1763 = vsel %vm34, %v1749, 0.0
    %v1764 = vsel %vm37, %v1752, 0.0
    %v1765 = vsel %vm40, %v1757, 0.0
    %v1766 = vsel %vm43, %v1760, 0.0
    %v1767 = vpack.c.bf16 %v1764, %v1763
    %v1768 = vpack.c.bf16 %v1766, %v1765
    %s1769 = scalar_lea.vmem %s2, 32
    %v1770 = vld [vmem:[%s1769] sm:$0xf]
    %v1771 = vld [vmem:[%s1769 + $0x4] sm:$0xf]
    %v1772 = vld [vmem:[%s1769 + $0x8] sm:$0xf]
    %v1773 = vld [vmem:[%s1769 + $0xc] sm:$0xf]
    %v1778 = vunpack.c.l.b16 %v1770
    %v1779 = vunpack.c.l.b16 %v1771
    %v1780 = vunpack.c.l.b16 %v1772
    %v1781 = vunpack.c.l.b16 %v1773
    %v1782 = vpack.c.b16 %v1779, %v1778
    %v1783 = vpack.c.b16 %v1781, %v1780
    %v1787 = vsel %vm100, %v1767, 0
    %v1790 = vsel %vm100, %v1768, 0
    %1792 = vmatprep.subr.bf16.mxu0 0
    %1793 = vmatpush1.bf16.msra.mxu0 %v1782
    %1794 = vmatprep.subr.bf16.mxu0 0
    %1795 = vmatpush1.bf16.msra.mxu0 %v1783
    %1796 = vmatprep.subr.bf16.mxu0 0
    %1797 = vmatpush1.bf16.msra.mxu0 0
    %1798 = vmatprep.subr.bf16.mxu0 0
    %1799 = vmatpush1.bf16.msra.mxu0 0
    %1800 = vmatprep.subr.bf16.mxu0 0
    %1801 = vmatpush1.bf16.msra.mxu0 0
    %1802 = vmatprep.subr.bf16.mxu0 0
    %1803 = vmatpush1.bf16.msra.mxu0 0
    %1804 = vmatprep.subr.bf16.mxu0 0
    %1805 = vmatpush1.bf16.msra.mxu0 0
    %1806 = vmatprep.subr.bf16.mxu0 0
    %1807 = vmatpush1.bf16.msra.mxu0 0
    %1808 = vmatprep.subr.bf16.mxu0 0
    %1809 = vmatpush1.bf16.msra.mxu0 0
    %1810 = vmatprep.subr.bf16.mxu0 0
    %1811 = vmatpush1.bf16.msra.mxu0 0
    %1812 = vmatprep.subr.bf16.mxu0 0
    %1813 = vmatpush1.bf16.msra.mxu0 0
    %1814 = vmatprep.subr.bf16.mxu0 0
    %1815 = vmatpush1.bf16.msra.mxu0 0
    %1816 = vmatprep.subr.bf16.mxu0 0
    %1817 = vmatpush1.bf16.msra.mxu0 0
    %1818 = vmatprep.subr.bf16.mxu0 0
    %1819 = vmatpush1.bf16.msra.mxu0 0
    %1820 = vmatprep.subr.bf16.mxu0 0
    %1821 = vmatpush1.bf16.msra.mxu0 0
    %1822 = vmatprep.subr.bf16.mxu0 0
    %1823 = vmatpush1.bf16.msra.mxu0 0
    %1824 = vmatprep.mubr.bf16.mxu0 0
    %1825 = vmatmul.mubr.bf16.gmra.mrb[0].mxu0 %v1787
    %v1826 = vpop.f32.mrb[0].mxu0
    %v1827 = vadd.f32 0.0, %v1826
    %v1828 = vpop.f32.mrb[0].mxu0
    %v1829 = vpop.f32.mrb[0].mxu0
    %v1830 = vadd.f32 0.0, %v1829
    %v1831 = vpop.f32.mrb[0].mxu0
    %1832 = vmatprep.mubr.bf16.mxu0 0
    %1833 = vmatmul.mubr.bf16.gmra.mrb[0].mxu0 %v1790
    %v1834 = vpop.f32.mrb[0].mxu0
    %v1835 = vadd.f32 0.0, %v1834
    %v1836 = vpop.f32.mrb[0].mxu0
    %v1837 = vpop.f32.mrb[0].mxu0
    %v1838 = vadd.f32 0.0, %v1837
    %v1839 = vpop.f32.mrb[0].mxu0
    %1840 = vdwg.mxu0
    %v1841 = vadd.f32 %v1827, %v1830
    %v1842 = vadd.f32 %v1841, %v1835
    %v1843 = vadd.f32 %v1842, %v1838
    %v1844 = vlaneseq
    %v1845 = vshrl.u32 %v1844, 7
    %v1846 = vsub.s32 0, %v1845
    %v1847 = vrot.slane %v1515, %v1846
    %v1848 = vadd.f32 %v1843, %v1847
    %v1849 = vadd.f32 %v1497, %v1848
    %v1850 = vsel %vm100, %v1849, 0.0
    %1851 = vadd.xlane.f32.xlu0 %v1850
    %v1852 = vpop.xlane.xlu0 %1851
    %v1853 = vmul.f32 %v1852, %v539
    %v1854 = vsub.f32 %v1849, %v1853
    %v1855 = vmul.f32 %v1854, %v1854
    %v1856 = vsel %vm100, %v1855, 0.0
    %1857 = vadd.xlane.f32.xlu0 %v1856
    %v1858 = vpop.xlane.xlu0 %1857
    %v1859 = vmul.f32 %v1858, %v539
    %v1860 = vadd.f32 %v1859, 1e-05
    %v1861 = vrsqrt.pop %v1860
    %v1862 = vmul.f32 %v1854, %v1861
    %v1863 = vlaneseq
    %v1864 = vshrl.u32 %v1863, 7
    %v1865 = vsub.s32 0, %v1864
    %v1866 = vrot.slane %v1516, %v1865
    %v1867 = vmul.f32 %v1862, %v1866
    %v1868 = vlaneseq
    %v1869 = vshrl.u32 %v1868, 7
    %v1870 = vsub.s32 0, %v1869
    %v1871 = vrot.slane %v1517, %v1870
    %v1872 = vadd.f32 %v1867, %v1871
    %v1873 = vpack.c.bf16 %v1872, %v1872
    %s1874 = scalar_lea.vmem %s3, 32
    %v1875 = vld [vmem:[%s1874] sm:$0xf]
    %v1876 = vld [vmem:[%s1874 + $0x4] sm:$0xf]
    %v1877 = vld [vmem:[%s1874 + $0x8] sm:$0xf]
    %v1878 = vld [vmem:[%s1874 + $0xc] sm:$0xf]
    %v1879 = vlaneseq
    %v1880 = vshrl.u32 %v1879, 7
    %v1881 = vsub.s32 0, %v1880
    %v1882 = vrot.slane %v1518, %v1881
    %v1887 = vunpack.c.l.b16 %v1875
    %v1888 = vunpack.c.l.b16 %v1876
    %v1889 = vunpack.c.l.b16 %v1877
    %v1890 = vunpack.c.l.b16 %v1878
    %v1891 = vpack.c.b16 %v1888, %v1887
    %v1892 = vpack.c.b16 %v1890, %v1889
    %v1896 = vsel %vm100, %v1873, 0
    %1898 = vmatprep.subr.bf16.mxu0 0
    %1899 = vmatpush1.bf16.msra.mxu0 %v1891
    %1900 = vmatprep.subr.bf16.mxu0 0
    %1901 = vmatpush1.bf16.msra.mxu0 %v1892
    %1902 = vmatprep.subr.bf16.mxu0 0
    %1903 = vmatpush1.bf16.msra.mxu0 0
    %1904 = vmatprep.subr.bf16.mxu0 0
    %1905 = vmatpush1.bf16.msra.mxu0 0
    %1906 = vmatprep.subr.bf16.mxu0 0
    %1907 = vmatpush1.bf16.msra.mxu0 0
    %1908 = vmatprep.subr.bf16.mxu0 0
    %1909 = vmatpush1.bf16.msra.mxu0 0
    %1910 = vmatprep.subr.bf16.mxu0 0
    %1911 = vmatpush1.bf16.msra.mxu0 0
    %1912 = vmatprep.subr.bf16.mxu0 0
    %1913 = vmatpush1.bf16.msra.mxu0 0
    %1914 = vmatprep.subr.bf16.mxu0 0
    %1915 = vmatpush1.bf16.msra.mxu0 0
    %1916 = vmatprep.subr.bf16.mxu0 0
    %1917 = vmatpush1.bf16.msra.mxu0 0
    %1918 = vmatprep.subr.bf16.mxu0 0
    %1919 = vmatpush1.bf16.msra.mxu0 0
    %1920 = vmatprep.subr.bf16.mxu0 0
    %1921 = vmatpush1.bf16.msra.mxu0 0
    %1922 = vmatprep.subr.bf16.mxu0 0
    %1923 = vmatpush1.bf16.msra.mxu0 0
    %1924 = vmatprep.subr.bf16.mxu0 0
    %1925 = vmatpush1.bf16.msra.mxu0 0
    %1926 = vmatprep.subr.bf16.mxu0 0
    %1927 = vmatpush1.bf16.msra.mxu0 0
    %1928 = vmatprep.subr.bf16.mxu0 0
    %1929 = vmatpush1.bf16.msra.mxu0 0
    %1930 = vmatprep.mubr.bf16.mxu0 0
    %1931 = vmatmul.mubr.bf16.gmra.mrb[0].mxu0 %v1896
    %v1932 = vpop.f32.mrb[0].mxu0
    %v1933 = vadd.f32 %v1882, %v1932
    %v1934 = vpop.f32.mrb[0].mxu0
    %v1935 = vpop.f32.mrb[0].mxu0
    %v1936 = vpop.f32.mrb[0].mxu0
    %1937 = vdwg.mxu0
    %v1938 = vmax.f32 %v1933, 0.0
    %v1939 = vpack.c.bf16 %v1938, %v1938
    %s1940 = scalar_lea.vmem %s4, 64
    %v1941 = vld [vmem:[%s1940] sm:$0xf]
    %v1942 = vld [vmem:[%s1940 + $0x4] sm:$0xf]
    %v1943 = vld [vmem:[%s1940 + $0x8] sm:$0xf]
    %v1944 = vld [vmem:[%s1940 + $0xc] sm:$0xf]
    %v1945 = vld [vmem:[%s1940 + $0x10] sm:$0xf]
    %v1946 = vld [vmem:[%s1940 + $0x14] sm:$0xf]
    %v1947 = vld [vmem:[%s1940 + $0x18] sm:$0xf]
    %v1948 = vld [vmem:[%s1940 + $0x1c] sm:$0xf]
    %v1949 = vlaneseq
    %v1950 = vshrl.u32 %v1949, 7
    %v1951 = vsub.s32 0, %v1950
    %v1952 = vrot.slane %v1519, %v1951
    %v1961 = vunpack.c.l.b16 %v1941
    %v1962 = vunpack.c.l.b16 %v1942
    %v1963 = vunpack.c.l.b16 %v1943
    %v1964 = vunpack.c.l.b16 %v1944
    %v1965 = vunpack.c.l.b16 %v1945
    %v1966 = vunpack.c.l.b16 %v1946
    %v1967 = vunpack.c.l.b16 %v1947
    %v1968 = vunpack.c.l.b16 %v1948
    %v1969 = vpack.c.b16 %v1962, %v1961
    %v1970 = vpack.c.b16 %v1964, %v1963
    %v1971 = vpack.c.b16 %v1966, %v1965
    %v1972 = vpack.c.b16 %v1968, %v1967
    %v1978 = vsel %vm676, %v1939, 0
    %1980 = vmatprep.subr.bf16.mxu0 0
    %1981 = vmatpush1.bf16.msra.mxu0 %v1969
    %1982 = vmatprep.subr.bf16.mxu0 0
    %1983 = vmatpush1.bf16.msra.mxu0 %v1970
    %1984 = vmatprep.subr.bf16.mxu0 0
    %1985 = vmatpush1.bf16.msra.mxu0 %v1971
    %1986 = vmatprep.subr.bf16.mxu0 0
    %1987 = vmatpush1.bf16.msra.mxu0 %v1972
    %1988 = vmatprep.subr.bf16.mxu0 0
    %1989 = vmatpush1.bf16.msra.mxu0 0
    %1990 = vmatprep.subr.bf16.mxu0 0
    %1991 = vmatpush1.bf16.msra.mxu0 0
    %1992 = vmatprep.subr.bf16.mxu0 0
    %1993 = vmatpush1.bf16.msra.mxu0 0
    %1994 = vmatprep.subr.bf16.mxu0 0
    %1995 = vmatpush1.bf16.msra.mxu0 0
    %1996 = vmatprep.subr.bf16.mxu0 0
    %1997 = vmatpush1.bf16.msra.mxu0 0
    %1998 = vmatprep.subr.bf16.mxu0 0
    %1999 = vmatpush1.bf16.msra.mxu0 0
    %2000 = vmatprep.subr.bf16.mxu0 0
    %2001 = vmatpush1.bf16.msra.mxu0 0
    %2002 = vmatprep.subr.bf16.mxu0 0
    %2003 = vmatpush1.bf16.msra.mxu0 0
    %2004 = vmatprep.subr.bf16.mxu0 0
    %2005 = vmatpush1.bf16.msra.mxu0 0
    %2006 = vmatprep.subr.bf16.mxu0 0
    %2007 = vmatpush1.bf16.msra.mxu0 0
    %2008 = vmatprep.subr.bf16.mxu0 0
    %2009 = vmatpush1.bf16.msra.mxu0 0
    %2010 = vmatprep.subr.bf16.mxu0 0
    %2011 = vmatpush1.bf16.msra.mxu0 0
    %2012 = vmatprep.mubr.bf16.mxu0 0
    %2013 = vmatmul.mubr.bf16.gmra.mrb[0].mxu0 %v1978
    %v2014 = vpop.f32.mrb[0].mxu0
    %v2015 = vadd.f32 %v1952, %v2014
    %v2016 = vpop.f32.mrb[0].mxu0
    %v2017 = vpop.f32.mrb[0].mxu0
    %v2018 = vpop.f32.mrb[0].mxu0
    %2019 = vdwg.mxu0
    %v2020 = vadd.f32 %v1872, %v2015
    %v2021 = vsel %vm100, %v2020, 0.0
    %2022 = vadd.xlane.f32.xlu0 %v2021
    %v2023 = vpop.xlane.xlu0 %2022
    %v2024 = vmul.f32 %v2023, %v539
    %v2025 = vsub.f32 %v2020, %v2024
    %v2026 = vmul.f32 %v2025, %v2025
    %v2027 = vsel %vm100, %v2026, 0.0
    %2028 = vadd.xlane.f32.xlu0 %v2027
    %v2029 = vpop.xlane.xlu0 %2028
    %v2030 = vmul.f32 %v2029, %v539
    %v2031 = vadd.f32 %v2030, 1e-05
    %v2032 = vrsqrt.pop %v2031
    %v2033 = vmul.f32 %v2025, %v2032
    %v2034 = vlaneseq
    %v2035 = vshrl.u32 %v2034, 7
    %v2036 = vsub.s32 0, %v2035
    %v2037 = vrot.slane %v1520, %v2036
    %v2038 = vmul.f32 %v2033, %v2037
    %v2039 = vlaneseq
    %v2040 = vshrl.u32 %v2039, 7
    %v2041 = vsub.s32 0, %v2040
    %v2042 = vrot.slane %v1521, %v2041
    %v2043 = vadd.f32 %v2038, %v2042
    %v2044 = vld [vmem:[%s6 + $0x18] sm:$0x1]
    %v2045 = vld [vmem:[%s6 + $0x19] sm:$0x1]
    %v2046 = vld [vmem:[%s6 + $0x1a] sm:$0x1]
    %v2047 = vld [vmem:[%s6 + $0x1b] sm:$0x1]
    %v2048 = vld [vmem:[%s6 + $0x1c] sm:$0x1]
    %v2049 = vld [vmem:[%s6 + $0x1d] sm:$0x1]
    %v2050 = vld [vmem:[%s6 + $0x1e] sm:$0x1]
    %v2051 = vld [vmem:[%s6 + $0x1f] sm:$0x1]
    %v2052 = vpack.c.bf16 %v2043, %v2043
    %s2053 = scalar_lea.vmem %s1, 48
    %v2054 = vld [vmem:[%s2053] sm:$0xf]
    %v2055 = vld [vmem:[%s2053 + $0x4] sm:$0xf]
    %v2056 = vld [vmem:[%s2053 + $0x8] sm:$0xf]
    %v2057 = vld [vmem:[%s2053 + $0xc] sm:$0xf]
    %v2058 = vlaneseq
    %v2059 = vshrl.u32 %v2058, 7
    %v2060 = vsub.s32 0, %v2059
    %v2061 = vrot.slane %v2044, %v2060
    %v2066 = vunpack.c.l.b16 %v2054
    %v2067 = vunpack.c.l.b16 %v2055
    %v2068 = vunpack.c.l.b16 %v2056
    %v2069 = vunpack.c.l.b16 %v2057
    %v2070 = vpack.c.b16 %v2067, %v2066
    %v2071 = vpack.c.b16 %v2069, %v2068
    %v2075 = vsel %vm100, %v2052, 0
    %2077 = vmatprep.subr.bf16.mxu0 0
    %2078 = vmatpush1.bf16.msra.mxu0 %v2070
    %2079 = vmatprep.subr.bf16.mxu0 0
    %2080 = vmatpush1.bf16.msra.mxu0 %v2071
    %2081 = vmatprep.subr.bf16.mxu0 0
    %2082 = vmatpush1.bf16.msra.mxu0 0
    %2083 = vmatprep.subr.bf16.mxu0 0
    %2084 = vmatpush1.bf16.msra.mxu0 0
    %2085 = vmatprep.subr.bf16.mxu0 0
    %2086 = vmatpush1.bf16.msra.mxu0 0
    %2087 = vmatprep.subr.bf16.mxu0 0
    %2088 = vmatpush1.bf16.msra.mxu0 0
    %2089 = vmatprep.subr.bf16.mxu0 0
    %2090 = vmatpush1.bf16.msra.mxu0 0
    %2091 = vmatprep.subr.bf16.mxu0 0
    %2092 = vmatpush1.bf16.msra.mxu0 0
    %2093 = vmatprep.subr.bf16.mxu0 0
    %2094 = vmatpush1.bf16.msra.mxu0 0
    %2095 = vmatprep.subr.bf16.mxu0 0
    %2096 = vmatpush1.bf16.msra.mxu0 0
    %2097 = vmatprep.subr.bf16.mxu0 0
    %2098 = vmatpush1.bf16.msra.mxu0 0
    %2099 = vmatprep.subr.bf16.mxu0 0
    %2100 = vmatpush1.bf16.msra.mxu0 0
    %2101 = vmatprep.subr.bf16.mxu0 0
    %2102 = vmatpush1.bf16.msra.mxu0 0
    %2103 = vmatprep.subr.bf16.mxu0 0
    %2104 = vmatpush1.bf16.msra.mxu0 0
    %2105 = vmatprep.subr.bf16.mxu0 0
    %2106 = vmatpush1.bf16.msra.mxu0 0
    %2107 = vmatprep.subr.bf16.mxu0 0
    %2108 = vmatpush1.bf16.msra.mxu0 0
    %2109 = vmatprep.mubr.bf16.mxu0 0
    %2110 = vmatmul.mubr.bf16.gmra.mrb[0].mxu0 %v2075
    %v2111 = vpop.f32.mrb[0].mxu0
    %v2112 = vadd.f32 %v2061, %v2111
    %v2113 = vpop.f32.mrb[0].mxu0
    %v2114 = vpop.f32.mrb[0].mxu0
    %v2115 = vpop.f32.mrb[0].mxu0
    %2116 = vdwg.mxu0
    %v2117 = vpack.c.bf16 %v2112, %v2112
    %v2118 = vsel %vm34, %v2112, 0.0
    %v2119 = vsel %vm37, %v2112, 0.0
    %v2120 = vsel %vm40, %v2112, 0.0
    %v2121 = vsel %vm43, %v2112, 0.0
    %v2122 = vpack.c.bf16 %v2119, %v2118
    %v2123 = vpack.c.bf16 %v2121, %v2120
    %2125 = vrot.lane.b32.xlu0 %v2117, 96
    %v2126 = vpop.permute.xlu0 %2125
    %v2128 = vsel %vm100, %v2122, 0
    %v2131 = vsel %vm100, %v2123, 0
    %v2134 = vsel %vm100, %v2126, 0
    %2136 = vmatprep.subr.bf16.mxu0 0
    %2137 = vmatpush1.bf16.xpose.msra.mxu0 %v2134
    %2138 = vmatprep.subr.bf16.mxu0 0
    %2139 = vmatpush1.bf16.xpose.msra.mxu0 0
    %2140 = vmatprep.subr.bf16.mxu0 0
    %2141 = vmatpush1.bf16.xpose.msra.mxu0 0
    %2142 = vmatprep.subr.bf16.mxu0 0
    %2143 = vmatpush1.bf16.xpose.msra.mxu0 0
    %2144 = vmatprep.subr.bf16.mxu0 0
    %2145 = vmatpush1.bf16.xpose.msra.mxu0 0
    %2146 = vmatprep.subr.bf16.mxu0 0
    %2147 = vmatpush1.bf16.xpose.msra.mxu0 0
    %2148 = vmatprep.subr.bf16.mxu0 0
    %2149 = vmatpush1.bf16.xpose.msra.mxu0 0
    %2150 = vmatprep.subr.bf16.mxu0 0
    %2151 = vmatpush1.bf16.xpose.msra.mxu0 0
    %2152 = vmatprep.subr.bf16.mxu0 0
    %2153 = vmatpush1.bf16.xpose.msra.mxu0 0
    %2154 = vmatprep.subr.bf16.mxu0 0
    %2155 = vmatpush1.bf16.xpose.msra.mxu0 0
    %2156 = vmatprep.subr.bf16.mxu0 0
    %2157 = vmatpush1.bf16.xpose.msra.mxu0 0
    %2158 = vmatprep.subr.bf16.mxu0 0
    %2159 = vmatpush1.bf16.xpose.msra.mxu0 0
    %2160 = vmatprep.subr.bf16.mxu0 0
    %2161 = vmatpush1.bf16.xpose.msra.mxu0 0
    %2162 = vmatprep.subr.bf16.mxu0 0
    %2163 = vmatpush1.bf16.xpose.msra.mxu0 0
    %2164 = vmatprep.subr.bf16.mxu0 0
    %2165 = vmatpush1.bf16.xpose.msra.mxu0 0
    %2166 = vmatprep.subr.bf16.mxu0 0
    %2167 = vmatpush1.bf16.xpose.msra.mxu0 0
    %2168 = vmatprep.mubr.bf16.mxu0 0
    %2169 = vmatmul.mubr.bf16.gmra.mrb[0].mxu0 %v2128
    %v2170 = vpop.f32.mrb[0].mxu0
    %v2171 = vadd.f32 %v1513, %v2170
    %v2172 = vpop.f32.mrb[0].mxu0
    %v2173 = vpop.f32.mrb[0].mxu0
    %v2174 = vadd.f32 %v1513, %v2173
    %v2175 = vpop.f32.mrb[0].mxu0
    %2176 = vmatprep.mubr.bf16.mxu0 0
    %2177 = vmatmul.mubr.bf16.gmra.mrb[0].mxu0 %v2131
    %v2178 = vpop.f32.mrb[0].mxu0
    %v2179 = vadd.f32 %v1513, %v2178
    %v2180 = vpop.f32.mrb[0].mxu0
    %v2181 = vpop.f32.mrb[0].mxu0
    %v2182 = vadd.f32 %v1513, %v2181
    %v2183 = vpop.f32.mrb[0].mxu0
    %2184 = vdwg.mxu0
    %v2185 = vsel %vm1655, %v2171, -inf
    %2186 = vmax.xlane.f32.xlu0 %v2185
    %v2187 = vpop.xlane.xlu0 %2186
    %v2188 = vsel %vm1655, %v2174, -inf
    %2189 = vmax.xlane.f32.xlu0 %v2188
    %v2190 = vpop.xlane.xlu0 %2189
    %v2191 = vsel %vm1655, %v2179, -inf
    %2192 = vmax.xlane.f32.xlu0 %v2191
    %v2193 = vpop.xlane.xlu0 %2192
    %v2194 = vsel %vm1655, %v2182, -inf
    %2195 = vmax.xlane.f32.xlu0 %v2194
    %v2196 = vpop.xlane.xlu0 %2195
    %v2197 = vsub.f32 %v2171, %v2187
    %v2198 = vsub.f32 %v2174, %v2190
    %v2199 = vsub.f32 %v2179, %v2193
    %v2200 = vsub.f32 %v2182, %v2196
    %v2201 = vmul.f32 %v2197, 1.442695
    %v2202 = vpow.pop %v2201
    %v2203 = vmul.f32 %v2198, 1.442695
    %v2204 = vpow.pop %v2203
    %v2205 = vmul.f32 %v2199, 1.442695
    %v2206 = vpow.pop %v2205
    %v2207 = vmul.f32 %v2200, 1.442695
    %v2208 = vpow.pop %v2207
    %v2209 = vsel %vm1655, %v2202, 0.0
    %2210 = vadd.xlane.f32.xlu0 %v2209
    %v2211 = vpop.xlane.xlu0 %2210
    %v2212 = vsel %vm1655, %v2204, 0.0
    %2213 = vadd.xlane.f32.xlu0 %v2212
    %v2214 = vpop.xlane.xlu0 %2213
    %v2215 = vsel %vm1655, %v2206, 0.0
    %2216 = vadd.xlane.f32.xlu0 %v2215
    %v2217 = vpop.xlane.xlu0 %2216
    %v2218 = vsel %vm1655, %v2208, 0.0
    %2219 = vadd.xlane.f32.xlu0 %v2218
    %v2220 = vpop.xlane.xlu0 %2219
    %v2221 = vrcp.pop %v2211
    %v2222 = vrcp.pop %v2214
    %v2223 = vrcp.pop %v2217
    %v2224 = vrcp.pop %v2220
    %v2225 = vmul.f32 %v2202, %v2221
    %v2226 = vmul.f32 %v2204, %v2222
    %v2227 = vmul.f32 %v2206, %v2223
    %v2228 = vmul.f32 %v2208, %v2224
    %v2229 = vpack.c.bf16 %v2226, %v2225
    %v2230 = vpack.c.bf16 %v2228, %v2227
    %2231 = vrot.lane.b32.xlu0 %v2117, 64
    %v2232 = vpop.permute.xlu0 %2231
    %v2234 = vsel %vm1655, %v2229, 0
    %v2237 = vsel %vm1655, %v2230, 0
    %v2240 = vsel %vm1710, %v2232, 0
    %2242 = vmatprep.subr.bf16.mxu0 0
    %2243 = vmatpush1.bf16.msra.mxu0 %v2240
    %2244 = vmatprep.subr.bf16.mxu0 0
    %2245 = vmatpush1.bf16.msra.mxu0 0
    %2246 = vmatprep.subr.bf16.mxu0 0
    %2247 = vmatpush1.bf16.msra.mxu0 0
    %2248 = vmatprep.subr.bf16.mxu0 0
    %2249 = vmatpush1.bf16.msra.mxu0 0
    %2250 = vmatprep.subr.bf16.mxu0 0
    %2251 = vmatpush1.bf16.msra.mxu0 0
    %2252 = vmatprep.subr.bf16.mxu0 0
    %2253 = vmatpush1.bf16.msra.mxu0 0
    %2254 = vmatprep.subr.bf16.mxu0 0
    %2255 = vmatpush1.bf16.msra.mxu0 0
    %2256 = vmatprep.subr.bf16.mxu0 0
    %2257 = vmatpush1.bf16.msra.mxu0 0
    %2258 = vmatprep.subr.bf16.mxu0 0
    %2259 = vmatpush1.bf16.msra.mxu0 0
    %2260 = vmatprep.subr.bf16.mxu0 0
    %2261 = vmatpush1.bf16.msra.mxu0 0
    %2262 = vmatprep.subr.bf16.mxu0 0
    %2263 = vmatpush1.bf16.msra.mxu0 0
    %2264 = vmatprep.subr.bf16.mxu0 0
    %2265 = vmatpush1.bf16.msra.mxu0 0
    %2266 = vmatprep.subr.bf16.mxu0 0
    %2267 = vmatpush1.bf16.msra.mxu0 0
    %2268 = vmatprep.subr.bf16.mxu0 0
    %2269 = vmatpush1.bf16.msra.mxu0 0
    %2270 = vmatprep.subr.bf16.mxu0 0
    %2271 = vmatpush1.bf16.msra.mxu0 0
    %2272 = vmatprep.subr.bf16.mxu0 0
    %2273 = vmatpush1.bf16.msra.mxu0 0
    %2274 = vmatprep.mubr.bf16.mxu0 0
    %2275 = vmatmul.mubr.bf16.gmra.mrb[0].mxu0 %v2234
    %v2276 = vpop.f32.mrb[0].mxu0
    %v2277 = vadd.f32 0.0, %v2276
    %v2278 = vpop.f32.mrb[0].mxu0
    %v2279 = vpop.f32.mrb[0].mxu0
    %v2280 = vadd.f32 0.0, %v2279
    %v2281 = vpop.f32.mrb[0].mxu0
    %2282 = vmatprep.mubr.bf16.mxu0 0
    %2283 = vmatmul.mubr.bf16.gmra.mrb[0].mxu0 %v2237
    %v2284 = vpop.f32.mrb[0].mxu0
    %v2285 = vadd.f32 0.0, %v2284
    %v2286 = vpop.f32.mrb[0].mxu0
    %v2287 = vpop.f32.mrb[0].mxu0
    %v2288 = vadd.f32 0.0, %v2287
    %v2289 = vpop.f32.mrb[0].mxu0
    %2290 = vdwg.mxu0
    %v2291 = vsel %vm34, %v2277, 0.0
    %v2292 = vsel %vm37, %v2280, 0.0
    %v2293 = vsel %vm40, %v2285, 0.0
    %v2294 = vsel %vm43, %v2288, 0.0
    %v2295 = vpack.c.bf16 %v2292, %v2291
    %v2296 = vpack.c.bf16 %v2294, %v2293
    %s2297 = scalar_lea.vmem %s2, 48
    %v2298 = vld [vmem:[%s2297] sm:$0xf]
    %v2299 = vld [vmem:[%s2297 + $0x4] sm:$0xf]
    %v2300 = vld [vmem:[%s2297 + $0x8] sm:$0xf]
    %v2301 = vld [vmem:[%s2297 + $0xc] sm:$0xf]
    %v2306 = vunpack.c.l.b16 %v2298
    %v2307 = vunpack.c.l.b16 %v2299
    %v2308 = vunpack.c.l.b16 %v2300
    %v2309 = vunpack.c.l.b16 %v2301
    %v2310 = vpack.c.b16 %v2307, %v2306
    %v2311 = vpack.c.b16 %v2309, %v2308
    %v2315 = vsel %vm100, %v2295, 0
    %v2318 = vsel %vm100, %v2296, 0
    %2320 = vmatprep.subr.bf16.mxu0 0
    %2321 = vmatpush1.bf16.msra.mxu0 %v2310
    %2322 = vmatprep.subr.bf16.mxu0 0
    %2323 = vmatpush1.bf16.msra.mxu0 %v2311
    %2324 = vmatprep.subr.bf16.mxu0 0
    %2325 = vmatpush1.bf16.msra.mxu0 0
    %2326 = vmatprep.subr.bf16.mxu0 0
    %2327 = vmatpush1.bf16.msra.mxu0 0
    %2328 = vmatprep.subr.bf16.mxu0 0
    %2329 = vmatpush1.bf16.msra.mxu0 0
    %2330 = vmatprep.subr.bf16.mxu0 0
    %2331 = vmatpush1.bf16.msra.mxu0 0
    %2332 = vmatprep.subr.bf16.mxu0 0
    %2333 = vmatpush1.bf16.msra.mxu0 0
    %2334 = vmatprep.subr.bf16.mxu0 0
    %2335 = vmatpush1.bf16.msra.mxu0 0
    %2336 = vmatprep.subr.bf16.mxu0 0
    %2337 = vmatpush1.bf16.msra.mxu0 0
    %2338 = vmatprep.subr.bf16.mxu0 0
    %2339 = vmatpush1.bf16.msra.mxu0 0
    %2340 = vmatprep.subr.bf16.mxu0 0
    %2341 = vmatpush1.bf16.msra.mxu0 0
    %2342 = vmatprep.subr.bf16.mxu0 0
    %2343 = vmatpush1.bf16.msra.mxu0 0
    %2344 = vmatprep.subr.bf16.mxu0 0
    %2345 = vmatpush1.bf16.msra.mxu0 0
    %2346 = vmatprep.subr.bf16.mxu0 0
    %2347 = vmatpush1.bf16.msra.mxu0 0
    %2348 = vmatprep.subr.bf16.mxu0 0
    %2349 = vmatpush1.bf16.msra.mxu0 0
    %2350 = vmatprep.subr.bf16.mxu0 0
    %2351 = vmatpush1.bf16.msra.mxu0 0
    %2352 = vmatprep.mubr.bf16.mxu0 0
    %2353 = vmatmul.mubr.bf16.gmra.mrb[0].mxu0 %v2315
    %v2354 = vpop.f32.mrb[0].mxu0
    %v2355 = vadd.f32 0.0, %v2354
    %v2356 = vpop.f32.mrb[0].mxu0
    %v2357 = vpop.f32.mrb[0].mxu0
    %v2358 = vadd.f32 0.0, %v2357
    %v2359 = vpop.f32.mrb[0].mxu0
    %2360 = vmatprep.mubr.bf16.mxu0 0
    %2361 = vmatmul.mubr.bf16.gmra.mrb[0].mxu0 %v2318
    %v2362 = vpop.f32.mrb[0].mxu0
    %v2363 = vadd.f32 0.0, %v2362
    %v2364 = vpop.f32.mrb[0].mxu0
    %v2365 = vpop.f32.mrb[0].mxu0
    %v2366 = vadd.f32 0.0, %v2365
    %v2367 = vpop.f32.mrb[0].mxu0
    %2368 = vdwg.mxu0
    %v2369 = vadd.f32 %v2355, %v2358
    %v2370 = vadd.f32 %v2369, %v2363
    %v2371 = vadd.f32 %v2370, %v2366
    %v2372 = vlaneseq
    %v2373 = vshrl.u32 %v2372, 7
    %v2374 = vsub.s32 0, %v2373
    %v2375 = vrot.slane %v2045, %v2374
    %v2376 = vadd.f32 %v2371, %v2375
    %v2377 = vadd.f32 %v2043, %v2376
    %v2378 = vsel %vm100, %v2377, 0.0
    %2379 = vadd.xlane.f32.xlu0 %v2378
    %v2380 = vpop.xlane.xlu0 %2379
    %v2381 = vmul.f32 %v2380, %v539
    %v2382 = vsub.f32 %v2377, %v2381
    %v2383 = vmul.f32 %v2382, %v2382
    %v2384 = vsel %vm100, %v2383, 0.0
    %2385 = vadd.xlane.f32.xlu0 %v2384
    %v2386 = vpop.xlane.xlu0 %2385
    %v2387 = vmul.f32 %v2386, %v539
    %v2388 = vadd.f32 %v2387, 1e-05
    %v2389 = vrsqrt.pop %v2388
    %v2390 = vmul.f32 %v2382, %v2389
    %v2391 = vlaneseq
    %v2392 = vshrl.u32 %v2391, 7
    %v2393 = vsub.s32 0, %v2392
    %v2394 = vrot.slane %v2046, %v2393
    %v2395 = vmul.f32 %v2390, %v2394
    %v2396 = vlaneseq
    %v2397 = vshrl.u32 %v2396, 7
    %v2398 = vsub.s32 0, %v2397
    %v2399 = vrot.slane %v2047, %v2398
    %v2400 = vadd.f32 %v2395, %v2399
    %v2401 = vpack.c.bf16 %v2400, %v2400
    %s2402 = scalar_lea.vmem %s3, 48
    %v2403 = vld [vmem:[%s2402] sm:$0xf]
    %v2404 = vld [vmem:[%s2402 + $0x4] sm:$0xf]
    %v2405 = vld [vmem:[%s2402 + $0x8] sm:$0xf]
    %v2406 = vld [vmem:[%s2402 + $0xc] sm:$0xf]
    %v2407 = vlaneseq
    %v2408 = vshrl.u32 %v2407, 7
    %v2409 = vsub.s32 0, %v2408
    %v2410 = vrot.slane %v2048, %v2409
    %v2415 = vunpack.c.l.b16 %v2403
    %v2416 = vunpack.c.l.b16 %v2404
    %v2417 = vunpack.c.l.b16 %v2405
    %v2418 = vunpack.c.l.b16 %v2406
    %v2419 = vpack.c.b16 %v2416, %v2415
    %v2420 = vpack.c.b16 %v2418, %v2417
    %v2424 = vsel %vm100, %v2401, 0
    %2426 = vmatprep.subr.bf16.mxu0 0
    %2427 = vmatpush1.bf16.msra.mxu0 %v2419
    %2428 = vmatprep.subr.bf16.mxu0 0
    %2429 = vmatpush1.bf16.msra.mxu0 %v2420
    %2430 = vmatprep.subr.bf16.mxu0 0
    %2431 = vmatpush1.bf16.msra.mxu0 0
    %2432 = vmatprep.subr.bf16.mxu0 0
    %2433 = vmatpush1.bf16.msra.mxu0 0
    %2434 = vmatprep.subr.bf16.mxu0 0
    %2435 = vmatpush1.bf16.msra.mxu0 0
    %2436 = vmatprep.subr.bf16.mxu0 0
    %2437 = vmatpush1.bf16.msra.mxu0 0
    %2438 = vmatprep.subr.bf16.mxu0 0
    %2439 = vmatpush1.bf16.msra.mxu0 0
    %2440 = vmatprep.subr.bf16.mxu0 0
    %2441 = vmatpush1.bf16.msra.mxu0 0
    %2442 = vmatprep.subr.bf16.mxu0 0
    %2443 = vmatpush1.bf16.msra.mxu0 0
    %2444 = vmatprep.subr.bf16.mxu0 0
    %2445 = vmatpush1.bf16.msra.mxu0 0
    %2446 = vmatprep.subr.bf16.mxu0 0
    %2447 = vmatpush1.bf16.msra.mxu0 0
    %2448 = vmatprep.subr.bf16.mxu0 0
    %2449 = vmatpush1.bf16.msra.mxu0 0
    %2450 = vmatprep.subr.bf16.mxu0 0
    %2451 = vmatpush1.bf16.msra.mxu0 0
    %2452 = vmatprep.subr.bf16.mxu0 0
    %2453 = vmatpush1.bf16.msra.mxu0 0
    %2454 = vmatprep.subr.bf16.mxu0 0
    %2455 = vmatpush1.bf16.msra.mxu0 0
    %2456 = vmatprep.subr.bf16.mxu0 0
    %2457 = vmatpush1.bf16.msra.mxu0 0
    %2458 = vmatprep.mubr.bf16.mxu0 0
    %2459 = vmatmul.mubr.bf16.gmra.mrb[0].mxu0 %v2424
    %v2460 = vpop.f32.mrb[0].mxu0
    %v2461 = vadd.f32 %v2410, %v2460
    %v2462 = vpop.f32.mrb[0].mxu0
    %v2463 = vpop.f32.mrb[0].mxu0
    %v2464 = vpop.f32.mrb[0].mxu0
    %2465 = vdwg.mxu0
    %v2466 = vmax.f32 %v2461, 0.0
    %v2467 = vpack.c.bf16 %v2466, %v2466
    %s2468 = scalar_lea.vmem %s4, 96
    %v2469 = vld [vmem:[%s2468] sm:$0xf]
    %v2470 = vld [vmem:[%s2468 + $0x4] sm:$0xf]
    %v2471 = vld [vmem:[%s2468 + $0x8] sm:$0xf]
    %v2472 = vld [vmem:[%s2468 + $0xc] sm:$0xf]
    %v2473 = vld [vmem:[%s2468 + $0x10] sm:$0xf]
    %v2474 = vld [vmem:[%s2468 + $0x14] sm:$0xf]
    %v2475 = vld [vmem:[%s2468 + $0x18] sm:$0xf]
    %v2476 = vld [vmem:[%s2468 + $0x1c] sm:$0xf]
    %v2477 = vlaneseq
    %v2478 = vshrl.u32 %v2477, 7
    %v2479 = vsub.s32 0, %v2478
    %v2480 = vrot.slane %v2049, %v2479
    %v2489 = vunpack.c.l.b16 %v2469
    %v2490 = vunpack.c.l.b16 %v2470
    %v2491 = vunpack.c.l.b16 %v2471
    %v2492 = vunpack.c.l.b16 %v2472
    %v2493 = vunpack.c.l.b16 %v2473
    %v2494 = vunpack.c.l.b16 %v2474
    %v2495 = vunpack.c.l.b16 %v2475
    %v2496 = vunpack.c.l.b16 %v2476
    %v2497 = vpack.c.b16 %v2490, %v2489
    %v2498 = vpack.c.b16 %v2492, %v2491
    %v2499 = vpack.c.b16 %v2494, %v2493
    %v2500 = vpack.c.b16 %v2496, %v2495
    %v2506 = vsel %vm676, %v2467, 0
    %2508 = vmatprep.subr.bf16.mxu0 0
    %2509 = vmatpush1.bf16.msra.mxu0 %v2497
    %2510 = vmatprep.subr.bf16.mxu0 0
    %2511 = vmatpush1.bf16.msra.mxu0 %v2498
    %2512 = vmatprep.subr.bf16.mxu0 0
    %2513 = vmatpush1.bf16.msra.mxu0 %v2499
    %2514 = vmatprep.subr.bf16.mxu0 0
    %2515 = vmatpush1.bf16.msra.mxu0 %v2500
    %2516 = vmatprep.subr.bf16.mxu0 0
    %2517 = vmatpush1.bf16.msra.mxu0 0
    %2518 = vmatprep.subr.bf16.mxu0 0
    %2519 = vmatpush1.bf16.msra.mxu0 0
    %2520 = vmatprep.subr.bf16.mxu0 0
    %2521 = vmatpush1.bf16.msra.mxu0 0
    %2522 = vmatprep.subr.bf16.mxu0 0
    %2523 = vmatpush1.bf16.msra.mxu0 0
    %2524 = vmatprep.subr.bf16.mxu0 0
    %2525 = vmatpush1.bf16.msra.mxu0 0
    %2526 = vmatprep.subr.bf16.mxu0 0
    %2527 = vmatpush1.bf16.msra.mxu0 0
    %2528 = vmatprep.subr.bf16.mxu0 0
    %2529 = vmatpush1.bf16.msra.mxu0 0
    %2530 = vmatprep.subr.bf16.mxu0 0
    %2531 = vmatpush1.bf16.msra.mxu0 0
    %2532 = vmatprep.subr.bf16.mxu0 0
    %2533 = vmatpush1.bf16.msra.mxu0 0
    %2534 = vmatprep.subr.bf16.mxu0 0
    %2535 = vmatpush1.bf16.msra.mxu0 0
    %2536 = vmatprep.subr.bf16.mxu0 0
    %2537 = vmatpush1.bf16.msra.mxu0 0
    %2538 = vmatprep.subr.bf16.mxu0 0
    %2539 = vmatpush1.bf16.msra.mxu0 0
    %2540 = vmatprep.mubr.bf16.mxu0 0
    %2541 = vmatmul.mubr.bf16.gmra.mrb[0].mxu0 %v2506
    %v2542 = vpop.f32.mrb[0].mxu0
    %v2543 = vadd.f32 %v2480, %v2542
    %v2544 = vpop.f32.mrb[0].mxu0
    %v2545 = vpop.f32.mrb[0].mxu0
    %v2546 = vpop.f32.mrb[0].mxu0
    %2547 = vdwg.mxu0
    %v2548 = vadd.f32 %v2400, %v2543
    %v2549 = vsel %vm100, %v2548, 0.0
    %2550 = vadd.xlane.f32.xlu0 %v2549
    %v2551 = vpop.xlane.xlu0 %2550
    %v2552 = vmul.f32 %v2551, %v539
    %v2553 = vsub.f32 %v2548, %v2552
    %v2554 = vmul.f32 %v2553, %v2553
    %v2555 = vsel %vm100, %v2554, 0.0
    %2556 = vadd.xlane.f32.xlu0 %v2555
    %v2557 = vpop.xlane.xlu0 %2556
    %v2558 = vmul.f32 %v2557, %v539
    %v2559 = vadd.f32 %v2558, 1e-05
    %v2560 = vrsqrt.pop %v2559
    %v2561 = vmul.f32 %v2553, %v2560
    %v2562 = vlaneseq
    %v2563 = vshrl.u32 %v2562, 7
    %v2564 = vsub.s32 0, %v2563
    %v2565 = vrot.slane %v2050, %v2564
    %v2566 = vmul.f32 %v2561, %v2565
    %v2567 = vlaneseq
    %v2568 = vshrl.u32 %v2567, 7
    %v2569 = vsub.s32 0, %v2568
    %v2570 = vrot.slane %v2051, %v2569
    %v2571 = vadd.f32 %v2566, %v2570
    %v2572 = vld [vmem:[%s6 + $0x20] sm:$0x1]
    %v2573 = vpack.c.bf16 %v2571, %v2571
    %v2574 = vld [vmem:[%s5] sm:$0xf]
    %v2575 = vld [vmem:[%s5 + $0x4] sm:$0xf]
    %v2576 = vld [vmem:[%s5 + $0x8] sm:$0xf]
    %v2577 = vld [vmem:[%s5 + $0xc] sm:$0xf]
    %v2578 = vlaneseq
    %v2579 = vshrl.u32 %v2578, 7
    %v2580 = vsub.s32 0, %v2579
    %v2581 = vrot.slane %v2572, %v2580
    %v2586 = vunpack.c.l.b16 %v2574
    %v2587 = vunpack.c.l.b16 %v2575
    %v2588 = vunpack.c.l.b16 %v2576
    %v2589 = vunpack.c.l.b16 %v2577
    %v2590 = vpack.c.b16 %v2587, %v2586
    %v2591 = vpack.c.b16 %v2589, %v2588
    %v2595 = vsel %vm100, %v2573, 0
    %2597 = vmatprep.subr.bf16.mxu0 0
    %2598 = vmatpush1.bf16.msra.mxu0 %v2590
    %2599 = vmatprep.subr.bf16.mxu0 0
    %2600 = vmatpush1.bf16.msra.mxu0 %v2591
    %2601 = vmatprep.subr.bf16.mxu0 0
    %2602 = vmatpush1.bf16.msra.mxu0 0
    %2603 = vmatprep.subr.bf16.mxu0 0
    %2604 = vmatpush1.bf16.msra.mxu0 0
    %2605 = vmatprep.subr.bf16.mxu0 0
    %2606 = vmatpush1.bf16.msra.mxu0 0
    %2607 = vmatprep.subr.bf16.mxu0 0
    %2608 = vmatpush1.bf16.msra.mxu0 0
    %2609 = vmatprep.subr.bf16.mxu0 0
    %2610 = vmatpush1.bf16.msra.mxu0 0
    %2611 = vmatprep.subr.bf16.mxu0 0
    %2612 = vmatpush1.bf16.msra.mxu0 0
    %2613 = vmatprep.subr.bf16.mxu0 0
    %2614 = vmatpush1.bf16.msra.mxu0 0
    %2615 = vmatprep.subr.bf16.mxu0 0
    %2616 = vmatpush1.bf16.msra.mxu0 0
    %2617 = vmatprep.subr.bf16.mxu0 0
    %2618 = vmatpush1.bf16.msra.mxu0 0
    %2619 = vmatprep.subr.bf16.mxu0 0
    %2620 = vmatpush1.bf16.msra.mxu0 0
    %2621 = vmatprep.subr.bf16.mxu0 0
    %2622 = vmatpush1.bf16.msra.mxu0 0
    %2623 = vmatprep.subr.bf16.mxu0 0
    %2624 = vmatpush1.bf16.msra.mxu0 0
    %2625 = vmatprep.subr.bf16.mxu0 0
    %2626 = vmatpush1.bf16.msra.mxu0 0
    %2627 = vmatprep.subr.bf16.mxu0 0
    %2628 = vmatpush1.bf16.msra.mxu0 0
    %2629 = vmatprep.mubr.bf16.mxu0 0
    %2630 = vmatmul.mubr.bf16.gmra.mrb[0].mxu0 %v2595
    %v2631 = vpop.f32.mrb[0].mxu0
    %v2632 = vadd.f32 %v2581, %v2631
    %v2633 = vpop.f32.mrb[0].mxu0
    %v2634 = vpop.f32.mrb[0].mxu0
    %v2635 = vpop.f32.mrb[0].mxu0
    %2636 = vdwg.mxu0
    %2637 = vst [vmem:[#allocation2] sm:$0xff] %v2632
    // Predicated region
    $region30: #{pool_expand_transformer_forward.1} parent=1 // pred_check
      _
    $region31: #{pool_expand_transformer_forward.1} parent=1 // pred_check_branch
      %2639 = sbr.rel (0) target = $region33
    $region32: #{pool_expand_transformer_forward.1} parent=1 // pred_region
      %s2641 = ssub.s32 128, 128
      %2642 = vsyncadd [#allocation3], %s2641
      %s2644 = sshll.u32 [#allocation2], 4
      %s2645 = int_to_ptr.vmem [resolvable:$true] %s2644
      %2647 = dma.vmem_to_hbm [thread:$0]  %s2645, 128, %s7, [#allocation3]
    $region33: #{pool_expand_transformer_forward.1} parent=1 // pred_fallthru
      _
    // Predicated region
    $region34: #{pool_expand_transformer_forward.1} parent=1 // pred_check
      _
    $region35: #{pool_expand_transformer_forward.1} parent=1 // pred_check_branch
      %2649 = sbr.rel (0) target = $region37
    $region36: #{pool_expand_transformer_forward.1} parent=1 // pred_region
      %2650 = dma.done [#allocation3], 128
    $region37: #{pool_expand_transformer_forward.1} parent=1 // pred_fallthru
      _
    %2651 = vsyncpa [#allocation3], 1

</llo_original>
